<compile_context>
chip_gen: v7x
topology: tpu7x:2x2x1
jax: 0.10.0
libtpu: 0.0.40
codegen_flags: <defaults>
</compile_context>

<pallas_src>
import jax
import jax.numpy as jnp
from jax import lax
from jax.experimental import pallas as pl
from jax.experimental.pallas import tpu as pltpu

LN_EPS = 1e-5  # PyTorch nn.LayerNorm default


def _layer_norm(h, gamma, beta):
    mu = jnp.mean(h, axis=-1, keepdims=True)
    var = jnp.mean((h - mu) ** 2, axis=-1, keepdims=True)
    return (h - mu) * lax.rsqrt(var + LN_EPS) * gamma + beta


def _mlp_tail(pre0, w1, b1, w2, b2, gamma, beta):
    """Spec MLP after its first pre-activation: ReLU -> Linear -> ReLU -> Linear -> LayerNorm."""
    h = jnp.maximum(pre0, 0.0)
    h = jnp.maximum(jnp.dot(h, w1, preferred_element_type=jnp.float32) + b1, 0.0)
    h = jnp.dot(h, w2, preferred_element_type=jnp.float32) + b2
    return _layer_norm(h, gamma, beta)


def gnb_kernel(snd_ref, rcv_ref, nf_ref, ef_ref,
               we0_s, we0_r, we0_e, be0, we1, be1, we2, be2, g_e, b_e,
               wn0_n, wn0_a, bn0, wn1, bn1, wn2, bn2, g_n, b_n,
               out_nf, out_ef,
               accum, proj_s, proj_r):
    e_idx = pl.program_id(1)
    last_e = pl.num_programs(1) - 1

    nf = nf_ref[0].astype(jnp.float32)               # (N, H)
    n_nodes = nf.shape[0]
    edge_tile = ef_ref.shape[1]

    # ---- per-batch init: zero scatter accumulator, hoist edge-MLP layer 0 to node space ----
    @pl.when(e_idx == 0)
    def _init():
        accum[...] = jnp.zeros_like(accum)
        proj_s[...] = jnp.dot(nf, we0_s[...], preferred_element_type=jnp.float32)
        proj_r[...] = jnp.dot(nf, we0_r[...], preferred_element_type=jnp.float32)

    # ---- this edge tile ----
    snd = snd_ref[0]                                  # (1, Et) int32
    rcv = rcv_ref[0]                                  # (1, Et) int32
    ef = ef_ref[0].astype(jnp.float32)                # (Et, H)

    node_iota = lax.broadcasted_iota(jnp.int32, (n_nodes, edge_tile), 0)
    snd_oh_t = (node_iota == snd).astype(jnp.float32)      # (N, Et)
    rcv_oh_t = (node_iota == rcv).astype(jnp.float32)      # (N, Et)

    contract = (((0,), (0,)), ((), ()))               # contract over node axis of both operands
    gath_s = lax.dot_general(snd_oh_t, proj_s[...], contract,
                             preferred_element_type=jnp.float32)   # (Et, H)
    gath_r = lax.dot_general(rcv_oh_t, proj_r[...], contract,
                             preferred_element_type=jnp.float32)   # (Et, H)

    # First-layer pre-activation of the edge MLP (no (E, 3H) concat).
    pre0_e = (gath_s + gath_r
              + jnp.dot(ef, we0_e[...], preferred_element_type=jnp.float32)
              + be0[...])
    new_ef = _mlp_tail(pre0_e, we1[...], be1[...], we2[...], be2[...],
                       g_e[...], b_e[...])            # (Et, H)

    out_ef[0] = (new_ef + ef).astype(out_ef.dtype)    # edge residual, written per tile

    # scatter_add over receivers == one-hot matmul, accumulated across edge tiles.
    accum[...] += jnp.dot(rcv_oh_t, new_ef, preferred_element_type=jnp.float32)

    # ---- per-batch finalize: node MLP with split first-layer dots (no concat) ----
    @pl.when(e_idx == last_e)
    def _finalize():
        pre0_n = (jnp.dot(nf, wn0_n[...], preferred_element_type=jnp.float32)
                  + jnp.dot(accum[...], wn0_a[...], preferred_element_type=jnp.float32)
                  + bn0[...])
        new_nf = _mlp_tail(pre0_n, wn1[...], bn1[...], wn2[...], bn2[...],
                           g_n[...], b_n[...])        # (N, H)
        out_nf[0] = (new_nf + nf).astype(out_nf.dtype)  # node residual


def _vmem_capacity_bytes():
    try:
        return int(pltpu.get_tpu_info().vmem_capacity_bytes)
    except Exception:
        return 64 * 1024 * 1024  # conservative (v7x per-TC) fallback


def _pick_edge_tile(n_edges, n_nodes, hidden, budget_bytes):
    """Largest multiple-of-128 edge tile whose working set fits the VMEM budget."""
    # Fixed residency (f32 bytes): 3 scratch (N,H) + nf / out_nf double-buffered.
    fixed = 4 * (3 * n_nodes * hidden + 4 * n_nodes * hidden)
    # Per edge row: ef in/out double-buffered (~4H) + one-hot slabs & temps (~2N + ~8H).
    per_edge = 4 * (2 * n_nodes + 12 * hidden)
    avail = budget_bytes - fixed
    t = avail // per_edge if avail > 0 else 0
    t = (int(t) // 128) * 128
    t = max(128, min(t, 1024))
    if n_edges <= t:
        return n_edges            # single tile; block == full edge extent (always legal)
    return t


def graph_net_block(senders, receivers, node_features, edge_features, params,
                    *, edge_tile=None):
    B, N, H = node_features.shape
    E = edge_features.shape[1]

    (we0, be0, we1, be1, we2, be2, g_e, b_e,
     wn0, bn0, wn1, bn1, wn2, bn2, g_n, b_n) = params

    # Pre-split the concat-input weights in the wrapper (no in-kernel slicing).
    we0_s, we0_r, we0_e = we0[:H], we0[H:2 * H], we0[2 * H:]
    wn0_n, wn0_a = wn0[:H], wn0[H:]

    # Pad N to a multiple of 8 (sublane). Padded node rows are zero and never referenced.
    N_pad = ((N + 7) // 8) * 8
    if N_pad != N:
        node_features = jnp.pad(node_features, ((0, 0), (0, N_pad - N), (0, 0)))

    # Generation-aware VMEM budget and edge tile.
    vmem_cap = _vmem_capacity_bytes()
    vmem_limit = int(min(vmem_cap * 0.75, 100 * 1024 * 1024))
    if edge_tile is None:
        edge_tile = _pick_edge_tile(E, N_pad, H, int(vmem_limit * 0.6))

    # Pad E to a multiple of edge_tile: sentinel index N_pad gathers zeros and scatters nothing.
    E_pad = ((E + edge_tile - 1) // edge_tile) * edge_tile
    if E_pad != E:
        pad = E_pad - E
        senders = jnp.pad(senders, ((0, 0), (0, pad)), constant_values=N_pad)
        receivers = jnp.pad(receivers, ((0, 0), (0, pad)), constant_values=N_pad)
        edge_features = jnp.pad(edge_features, ((0, 0), (0, pad), (0, 0)))

    senders = senders.reshape(B, 1, E_pad).astype(jnp.int32)
    receivers = receivers.reshape(B, 1, E_pad).astype(jnp.int32)
    n_et = E_pad // edge_tile

    idx_spec = pl.BlockSpec((1, 1, edge_tile), lambda b, e: (b, 0, e))
    nf_spec = pl.BlockSpec((1, N_pad, H), lambda b, e: (b, 0, 0))
    ef_spec = pl.BlockSpec((1, edge_tile, H), lambda b, e: (b, e, 0))

    def w_spec(p):
        nd = p.ndim
        return pl.BlockSpec(p.shape, lambda b, e, nd=nd: (0,) * nd)

    weights = (we0_s, we0_r, we0_e, be0, we1, be1, we2, be2, g_e, b_e,
               wn0_n, wn0_a, bn0, wn1, bn1, wn2, bn2, g_n, b_n)

    in_specs = [idx_spec, idx_spec, nf_spec, ef_spec] + [w_spec(p) for p in weights]
    out_specs = (pl.BlockSpec((1, N_pad, H), lambda b, e: (b, 0, 0)),   # revisited over e
                 pl.BlockSpec((1, edge_tile, H), lambda b, e: (b, e, 0)))
    out_shape = (jax.ShapeDtypeStruct((B, N_pad, H), node_features.dtype),
                 jax.ShapeDtypeStruct((B, E_pad, H), edge_features.dtype))

    scratch_shapes = [pltpu.VMEM((N_pad, H), jnp.float32),   # accum
                      pltpu.VMEM((N_pad, H), jnp.float32),   # proj_s
                      pltpu.VMEM((N_pad, H), jnp.float32)]   # proj_r

    # Advisory cost estimate for XLA scheduling.
    flops = B * (12 * N_pad * H * H        # proj_s/proj_r + node MLP (3 layers, split layer 0)
                 + 6 * E_pad * H * H       # edge MLP (edge term of layer 0 + layers 1,2)
                 + 6 * E_pad * N_pad * H)  # 2 one-hot gathers + 1 one-hot scatter
    bytes_accessed = 4 * (B * (2 * N_pad * H + 2 * E_pad * H + 2 * E_pad)
                          + sum(int(p.size) for p in weights))
    cost = pl.CostEstimate(flops=int(flops), transcendentals=0,
                           bytes_accessed=int(bytes_accessed))

    new_nf, new_ef = pl.pallas_call(
        gnb_kernel,
        grid=(B, n_et),
        in_specs=in_specs,
        out_specs=out_specs,
        out_shape=out_shape,
        scratch_shapes=scratch_shapes,
        compiler_params=pltpu.CompilerParams(
            dimension_semantics=("parallel", "arbitrary"),
            vmem_limit_bytes=vmem_limit),
        cost_estimate=cost,
    )(senders, receivers, node_features, edge_features, *weights)

    return new_nf[:, :N], new_ef[:, :E]


def init_params(key, hidden_dim):
    """Deterministic PyTorch-Linear-style init (uniform +-1/sqrt(fan_in))."""
    def lin(k, fin, fout):
        k1, k2 = jax.random.split(k)
        bound = 1.0 / float(fin) ** 0.5
        w = jax.random.uniform(k1, (fin, fout), jnp.float32, -bound, bound)
        b = jax.random.uniform(k2, (1, fout), jnp.float32, -bound, bound)
        return w, b

    ks = jax.random.split(key, 6)
    H = hidden_dim
    we0, be0 = lin(ks[0], 3 * H, H)
    we1, be1 = lin(ks[1], H, H)
    we2, be2 = lin(ks[2], H, H)
    g_e = jnp.ones((1, H), jnp.float32)
    b_e = jnp.zeros((1, H), jnp.float32)
    wn0, bn0 = lin(ks[3], 2 * H, H)
    wn1, bn1 = lin(ks[4], H, H)
    wn2, bn2 = lin(ks[5], H, H)
    g_n = jnp.ones((1, H), jnp.float32)
    b_n = jnp.zeros((1, H), jnp.float32)
    return (we0, be0, we1, be1, we2, be2, g_e, b_e,
            wn0, bn0, wn1, bn1, wn2, bn2, g_n, b_n)


def ref_forward(senders, receivers, nf, ef, params):
    """Pure-JAX reference of the PyTorch forward (agg_fun='mlp')."""
    (we0, be0, we1, be1, we2, be2, g_e, b_e,
     wn0, bn0, wn1, bn1, wn2, bn2, g_n, b_n) = params

    def mlp(x, w0, b0, w1, b1, w2, b2, g, b):
        h = jnp.maximum(x @ w0 + b0, 0.0)
        h = jnp.maximum(h @ w1 + b1, 0.0)
        h = h @ w2 + b2
        mu = h.mean(-1, keepdims=True)
        var = ((h - mu) ** 2).mean(-1, keepdims=True)
        return (h - mu) / jnp.sqrt(var + LN_EPS) * g + b

    sender_feat = jnp.take_along_axis(nf, senders[:, :, None], axis=1)
    recv_feat = jnp.take_along_axis(nf, receivers[:, :, None], axis=1)
    edge_in = jnp.concatenate([sender_feat, recv_feat, ef], axis=-1)
    new_ef = mlp(edge_in, we0, be0, we1, be1, we2, be2, g_e, b_e)

    N = nf.shape[1]

    def scatter_one(e, r):
        return jnp.zeros((N, e.shape[-1]), e.dtype).at[r].add(e)

    accum = jax.vmap(scatter_one)(new_ef, receivers)
    node_in = jnp.concatenate([nf, accum], axis=-1)
    new_nf = mlp(node_in, wn0, bn0, wn1, bn1, wn2, bn2, g_n, b_n)
    return new_nf + nf, new_ef + ef


if __name__ == "__main__":
    B, N, E, H = 2, 16, 32, 32
    key = jax.random.PRNGKey(0)
    k_snd, k_rcv, k_nf, k_ef, k_par = jax.random.split(key, 5)

    senders = jax.random.randint(k_snd, (B, E), 0, N, dtype=jnp.int32)
    receivers = jax.random.randint(k_rcv, (B, E), 0, N, dtype=jnp.int32)
    node_features = jax.random.normal(k_nf, (B, N, H), jnp.float32)
    edge_features = jax.random.normal(k_ef, (B, E, H), jnp.float32)
    params = init_params(k_par, H)

    new_nf, new_ef = graph_net_block(senders, receivers, node_features,
                                     edge_features, params)
    jax.block_until_ready((new_nf, new_ef))

    ref_nf, ref_ef = ref_forward(senders, receivers, node_features,
                                 edge_features, params)
    assert jnp.allclose(new_nf, ref_nf, rtol=1e-3, atol=1e-3)
    assert jnp.allclose(new_ef, ref_ef, rtol=1e-3, atol=1e-3)

    print("KERNEL_OK")
</pallas_src>

<mosaic_0001>
module attributes {stable_mosaic.version = 11 : i64} {
  func.func @gnb_kernel(%arg0: i32, %arg1: i32, %arg2: memref<1x1x32xi32, #tpu.memory_space<vmem>>, %arg3: memref<1x1x32xi32, #tpu.memory_space<vmem>>, %arg4: memref<1x16x32xf32, #tpu.memory_space<vmem>>, %arg5: memref<1x32x32xf32, #tpu.memory_space<vmem>>, %arg6: memref<32x32xf32, #tpu.memory_space<vmem>>, %arg7: memref<32x32xf32, #tpu.memory_space<vmem>>, %arg8: memref<32x32xf32, #tpu.memory_space<vmem>>, %arg9: memref<1x32xf32, #tpu.memory_space<vmem>>, %arg10: memref<32x32xf32, #tpu.memory_space<vmem>>, %arg11: memref<1x32xf32, #tpu.memory_space<vmem>>, %arg12: memref<32x32xf32, #tpu.memory_space<vmem>>, %arg13: memref<1x32xf32, #tpu.memory_space<vmem>>, %arg14: memref<1x32xf32, #tpu.memory_space<vmem>>, %arg15: memref<1x32xf32, #tpu.memory_space<vmem>>, %arg16: memref<32x32xf32, #tpu.memory_space<vmem>>, %arg17: memref<32x32xf32, #tpu.memory_space<vmem>>, %arg18: memref<1x32xf32, #tpu.memory_space<vmem>>, %arg19: memref<32x32xf32, #tpu.memory_space<vmem>>, %arg20: memref<1x32xf32, #tpu.memory_space<vmem>>, %arg21: memref<32x32xf32, #tpu.memory_space<vmem>>, %arg22: memref<1x32xf32, #tpu.memory_space<vmem>>, %arg23: memref<1x32xf32, #tpu.memory_space<vmem>>, %arg24: memref<1x32xf32, #tpu.memory_space<vmem>>, %arg25: memref<1x16x32xf32, #tpu.memory_space<vmem>>, %arg26: memref<1x32x32xf32, #tpu.memory_space<vmem>>, %arg27: memref<16x32xf32, #tpu.memory_space<vmem>>, %arg28: memref<16x32xf32, #tpu.memory_space<vmem>>, %arg29: memref<16x32xf32, #tpu.memory_space<vmem>>) attributes {dimension_semantics = [#tpu.dimension_semantics<parallel>, #tpu.dimension_semantics<arbitrary>], iteration_bounds = array<i64: 2, 1>, scalar_prefetch = 0 : i64, scratch_operands = 3 : i64, tpu.core_type = #tpu.core_type<tc>, window_params = [{transform_indices = @transform_0, window_bounds = array<i64: 1, 1, 32>}, {transform_indices = @transform_1, window_bounds = array<i64: 1, 1, 32>}, {transform_indices = @transform_2, window_bounds = array<i64: 1, 16, 32>}, {transform_indices = @transform_3, window_bounds = array<i64: 1, 32, 32>}, {pipeline_mode = #tpu.pipeline_mode<synchronous>, transform_indices = @transform_4, window_bounds = array<i64: 32, 32>}, {pipeline_mode = #tpu.pipeline_mode<synchronous>, transform_indices = @transform_5, window_bounds = array<i64: 32, 32>}, {pipeline_mode = #tpu.pipeline_mode<synchronous>, transform_indices = @transform_6, window_bounds = array<i64: 32, 32>}, {pipeline_mode = #tpu.pipeline_mode<synchronous>, transform_indices = @transform_7, window_bounds = array<i64: 1, 32>}, {pipeline_mode = #tpu.pipeline_mode<synchronous>, transform_indices = @transform_8, window_bounds = array<i64: 32, 32>}, {pipeline_mode = #tpu.pipeline_mode<synchronous>, transform_indices = @transform_9, window_bounds = array<i64: 1, 32>}, {pipeline_mode = #tpu.pipeline_mode<synchronous>, transform_indices = @transform_10, window_bounds = array<i64: 32, 32>}, {pipeline_mode = #tpu.pipeline_mode<synchronous>, transform_indices = @transform_11, window_bounds = array<i64: 1, 32>}, {pipeline_mode = #tpu.pipeline_mode<synchronous>, transform_indices = @transform_12, window_bounds = array<i64: 1, 32>}, {pipeline_mode = #tpu.pipeline_mode<synchronous>, transform_indices = @transform_13, window_bounds = array<i64: 1, 32>}, {pipeline_mode = #tpu.pipeline_mode<synchronous>, transform_indices = @transform_14, window_bounds = array<i64: 32, 32>}, {pipeline_mode = #tpu.pipeline_mode<synchronous>, transform_indices = @transform_15, window_bounds = array<i64: 32, 32>}, {pipeline_mode = #tpu.pipeline_mode<synchronous>, transform_indices = @transform_16, window_bounds = array<i64: 1, 32>}, {pipeline_mode = #tpu.pipeline_mode<synchronous>, transform_indices = @transform_17, window_bounds = array<i64: 32, 32>}, {pipeline_mode = #tpu.pipeline_mode<synchronous>, transform_indices = @transform_18, window_bounds = array<i64: 1, 32>}, {pipeline_mode = #tpu.pipeline_mode<synchronous>, transform_indices = @transform_19, window_bounds = array<i64: 32, 32>}, {pipeline_mode = #tpu.pipeline_mode<synchronous>, transform_indices = @transform_20, window_bounds = array<i64: 1, 32>}, {pipeline_mode = #tpu.pipeline_mode<synchronous>, transform_indices = @transform_21, window_bounds = array<i64: 1, 32>}, {pipeline_mode = #tpu.pipeline_mode<synchronous>, transform_indices = @transform_22, window_bounds = array<i64: 1, 32>}, {transform_indices = @transform_23, window_bounds = array<i64: 1, 16, 32>}, {transform_indices = @transform_24, window_bounds = array<i64: 1, 32, 32>}]} {
    %c0 = arith.constant 0 : index
    %c0_0 = arith.constant 0 : index
    %c0_1 = arith.constant 0 : index
    %0 = vector.load %arg4[%c0, %c0_0, %c0_1] : memref<1x16x32xf32, #tpu.memory_space<vmem>>, vector<1x16x32xf32>
    %1 = vector.shape_cast %0 : vector<1x16x32xf32> to vector<16x32xf32>
    %c0_i32 = arith.constant 0 : i32
    %2 = arith.cmpi eq, %arg1, %c0_i32 : i32
    %3 = arith.extui %2 : i1 to i32
    %c0_i32_2 = arith.constant 0 : i32
    %4 = arith.cmpi ne, %3, %c0_i32_2 : i32
    scf.if %4 {
      %cst_53 = arith.constant 0.000000e+00 : f32
      %80 = vector.broadcast %cst_53 : f32 to vector<16x32xf32>
      %c0_54 = arith.constant 0 : index
      %c0_55 = arith.constant 0 : index
      %81 = vector.load %arg27[%c0_54, %c0_55] : memref<16x32xf32, #tpu.memory_space<vmem>>, vector<16x32xf32>
      tpu.vector_store %arg27[%c0_54, %c0_55], %80 {strides = array<i32>} : memref<16x32xf32, #tpu.memory_space<vmem>>, vector<16x32xf32>,
      %c0_56 = arith.constant 0 : index
      %c0_57 = arith.constant 0 : index
      %82 = vector.load %arg6[%c0_56, %c0_57] : memref<32x32xf32, #tpu.memory_space<vmem>>, vector<32x32xf32>
      %cst_58 = arith.constant dense<0.000000e+00> : vector<16x32xf32>
      %83 = tpu.matmul %1, %82, %cst_58 {dimension_numbers = #tpu.dot_dimension_numbers<[1], [0], [0], [1], [0, 0, 1, 1], [], []>} : vector<16x32xf32>, vector<32x32xf32>, vector<16x32xf32> -> vector<16x32xf32>
      %c0_59 = arith.constant 0 : index
      %c0_60 = arith.constant 0 : index
      %84 = vector.load %arg28[%c0_59, %c0_60] : memref<16x32xf32, #tpu.memory_space<vmem>>, vector<16x32xf32>
      tpu.vector_store %arg28[%c0_59, %c0_60], %83 {strides = array<i32>} : memref<16x32xf32, #tpu.memory_space<vmem>>, vector<16x32xf32>,
      %c0_61 = arith.constant 0 : index
      %c0_62 = arith.constant 0 : index
      %85 = vector.load %arg7[%c0_61, %c0_62] : memref<32x32xf32, #tpu.memory_space<vmem>>, vector<32x32xf32>
      %cst_63 = arith.constant dense<0.000000e+00> : vector<16x32xf32>
      %86 = tpu.matmul %1, %85, %cst_63 {dimension_numbers = #tpu.dot_dimension_numbers<[1], [0], [0], [1], [0, 0, 1, 1], [], []>} : vector<16x32xf32>, vector<32x32xf32>, vector<16x32xf32> -> vector<16x32xf32>
      %c0_64 = arith.constant 0 : index
      %c0_65 = arith.constant 0 : index
      %87 = vector.load %arg29[%c0_64, %c0_65] : memref<16x32xf32, #tpu.memory_space<vmem>>, vector<16x32xf32>
      tpu.vector_store %arg29[%c0_64, %c0_65], %86 {strides = array<i32>} : memref<16x32xf32, #tpu.memory_space<vmem>>, vector<16x32xf32>,
    } else {
    }
    %c0_3 = arith.constant 0 : index
    %c0_4 = arith.constant 0 : index
    %c0_5 = arith.constant 0 : index
    %5 = vector.load %arg2[%c0_3, %c0_4, %c0_5] : memref<1x1x32xi32, #tpu.memory_space<vmem>>, vector<1x1x32xi32>
    %6 = vector.shape_cast %5 : vector<1x1x32xi32> to vector<1x32xi32>
    %c0_6 = arith.constant 0 : index
    %c0_7 = arith.constant 0 : index
    %c0_8 = arith.constant 0 : index
    %7 = vector.load %arg3[%c0_6, %c0_7, %c0_8] : memref<1x1x32xi32, #tpu.memory_space<vmem>>, vector<1x1x32xi32>
    %8 = vector.shape_cast %7 : vector<1x1x32xi32> to vector<1x32xi32>
    %c0_9 = arith.constant 0 : index
    %c0_10 = arith.constant 0 : index
    %c0_11 = arith.constant 0 : index
    %9 = vector.load %arg5[%c0_9, %c0_10, %c0_11] : memref<1x32x32xf32, #tpu.memory_space<vmem>>, vector<1x32x32xf32>
    %10 = vector.shape_cast %9 : vector<1x32x32xf32> to vector<32x32xf32>
    %11 = tpu.iota {dimensions = array<i32: 0>} : vector<16x32xi32>
    %12 = vector.broadcast %6 : vector<1x32xi32> to vector<16x32xi32>
    %13 = arith.cmpi eq, %11, %12 : vector<16x32xi32>
    %14 = arith.extui %13 : vector<16x32xi1> to vector<16x32xi32>
    %15 = arith.sitofp %14 : vector<16x32xi32> to vector<16x32xf32>
    %16 = vector.broadcast %8 : vector<1x32xi32> to vector<16x32xi32>
    %17 = arith.cmpi eq, %11, %16 : vector<16x32xi32>
    %18 = arith.extui %17 : vector<16x32xi1> to vector<16x32xi32>
    %19 = arith.sitofp %18 : vector<16x32xi32> to vector<16x32xf32>
    %c0_12 = arith.constant 0 : index
    %c0_13 = arith.constant 0 : index
    %20 = vector.load %arg28[%c0_12, %c0_13] : memref<16x32xf32, #tpu.memory_space<vmem>>, vector<16x32xf32>
    %cst = arith.constant dense<0.000000e+00> : vector<32x32xf32>
    %21 = tpu.matmul %15, %20, %cst {dimension_numbers = #tpu.dot_dimension_numbers<[0], [0], [1], [1], [0, 1, 1, 1], [], []>} : vector<16x32xf32>, vector<16x32xf32>, vector<32x32xf32> -> vector<32x32xf32>
    %c0_14 = arith.constant 0 : index
    %c0_15 = arith.constant 0 : index
    %22 = vector.load %arg29[%c0_14, %c0_15] : memref<16x32xf32, #tpu.memory_space<vmem>>, vector<16x32xf32>
    %cst_16 = arith.constant dense<0.000000e+00> : vector<32x32xf32>
    %23 = tpu.matmul %19, %22, %cst_16 {dimension_numbers = #tpu.dot_dimension_numbers<[0], [0], [1], [1], [0, 1, 1, 1], [], []>} : vector<16x32xf32>, vector<16x32xf32>, vector<32x32xf32> -> vector<32x32xf32>
    %24 = arith.addf %21, %23 : vector<32x32xf32>
    %c0_17 = arith.constant 0 : index
    %c0_18 = arith.constant 0 : index
    %25 = vector.load %arg8[%c0_17, %c0_18] : memref<32x32xf32, #tpu.memory_space<vmem>>, vector<32x32xf32>
    %cst_19 = arith.constant dense<0.000000e+00> : vector<32x32xf32>
    %26 = tpu.matmul %10, %25, %cst_19 {dimension_numbers = #tpu.dot_dimension_numbers<[1], [0], [0], [1], [0, 0, 1, 1], [], []>} : vector<32x32xf32>, vector<32x32xf32>, vector<32x32xf32> -> vector<32x32xf32>
    %27 = arith.addf %24, %26 : vector<32x32xf32>
    %c0_20 = arith.constant 0 : index
    %c0_21 = arith.constant 0 : index
    %28 = vector.load %arg9[%c0_20, %c0_21] : memref<1x32xf32, #tpu.memory_space<vmem>>, vector<1x32xf32>
    %29 = vector.broadcast %28 : vector<1x32xf32> to vector<32x32xf32>
    %30 = arith.addf %27, %29 : vector<32x32xf32>
    %c0_22 = arith.constant 0 : index
    %c0_23 = arith.constant 0 : index
    %31 = vector.load %arg10[%c0_22, %c0_23] : memref<32x32xf32, #tpu.memory_space<vmem>>, vector<32x32xf32>
    %c0_24 = arith.constant 0 : index
    %c0_25 = arith.constant 0 : index
    %32 = vector.load %arg11[%c0_24, %c0_25] : memref<1x32xf32, #tpu.memory_space<vmem>>, vector<1x32xf32>
    %c0_26 = arith.constant 0 : index
    %c0_27 = arith.constant 0 : index
    %33 = vector.load %arg12[%c0_26, %c0_27] : memref<32x32xf32, #tpu.memory_space<vmem>>, vector<32x32xf32>
    %c0_28 = arith.constant 0 : index
    %c0_29 = arith.constant 0 : index
    %34 = vector.load %arg13[%c0_28, %c0_29] : memref<1x32xf32, #tpu.memory_space<vmem>>, vector<1x32xf32>
    %c0_30 = arith.constant 0 : index
    %c0_31 = arith.constant 0 : index
    %35 = vector.load %arg14[%c0_30, %c0_31] : memref<1x32xf32, #tpu.memory_space<vmem>>, vector<1x32xf32>
    %c0_32 = arith.constant 0 : index
    %c0_33 = arith.constant 0 : index
    %36 = vector.load %arg15[%c0_32, %c0_33] : memref<1x32xf32, #tpu.memory_space<vmem>>, vector<1x32xf32>
    %cst_34 = arith.constant 0.000000e+00 : f32
    %37 = vector.broadcast %cst_34 : f32 to vector<32x32xf32>
    %38 = arith.maximumf %30, %37 : vector<32x32xf32>
    %cst_35 = arith.constant dense<0.000000e+00> : vector<32x32xf32>
    %39 = tpu.matmul %38, %31, %cst_35 {dimension_numbers = #tpu.dot_dimension_numbers<[1], [0], [0], [1], [0, 0, 1, 1], [], []>} : vector<32x32xf32>, vector<32x32xf32>, vector<32x32xf32> -> vector<32x32xf32>
    %40 = vector.broadcast %32 : vector<1x32xf32> to vector<32x32xf32>
    %41 = arith.addf %39, %40 : vector<32x32xf32>
    %cst_36 = arith.constant 0.000000e+00 : f32
    %42 = vector.broadcast %cst_36 : f32 to vector<32x32xf32>
    %43 = arith.maximumf %41, %42 : vector<32x32xf32>
    %cst_37 = arith.constant dense<0.000000e+00> : vector<32x32xf32>
    %44 = tpu.matmul %43, %33, %cst_37 {dimension_numbers = #tpu.dot_dimension_numbers<[1], [0], [0], [1], [0, 0, 1, 1], [], []>} : vector<32x32xf32>, vector<32x32xf32>, vector<32x32xf32> -> vector<32x32xf32>
    %45 = vector.broadcast %34 : vector<1x32xf32> to vector<32x32xf32>
    %46 = arith.addf %44, %45 : vector<32x32xf32>
    %cst_38 = arith.constant dense<0.000000e+00> : vector<32xf32>
    %47 = vector.multi_reduction <add>, %46, %cst_38 [1] : vector<32x32xf32> to vector<32xf32>
    %48 = vector.shape_cast %47 : vector<32xf32> to vector<32x1xf32>
    %cst_39 = arith.constant 3.200000e+01 : f32
    %49 = vector.broadcast %cst_39 : f32 to vector<32x1xf32>
    %50 = arith.divf %48, %49 : vector<32x1xf32>
    %51 = vector.broadcast %50 : vector<32x1xf32> to vector<32x32xf32>
    %52 = arith.subf %46, %51 : vector<32x32xf32>
    %53 = arith.mulf %52, %52 : vector<32x32xf32>
    %cst_40 = arith.constant dense<0.000000e+00> : vector<32xf32>
    %54 = vector.multi_reduction <add>, %53, %cst_40 [1] : vector<32x32xf32> to vector<32xf32>
    %55 = vector.shape_cast %54 : vector<32xf32> to vector<32x1xf32>
    %cst_41 = arith.constant 3.200000e+01 : f32
    %56 = vector.broadcast %cst_41 : f32 to vector<32x1xf32>
    %57 = arith.divf %55, %56 : vector<32x1xf32>
    %58 = vector.broadcast %50 : vector<32x1xf32> to vector<32x32xf32>
    %59 = arith.subf %46, %58 : vector<32x32xf32>
    %cst_42 = arith.constant 9.99999974E-6 : f32
    %60 = vector.broadcast %cst_42 : f32 to vector<32x1xf32>
    %61 = arith.addf %57, %60 : vector<32x1xf32>
    %62 = math.rsqrt %61 : vector<32x1xf32>
    %63 = vector.broadcast %62 : vector<32x1xf32> to vector<32x32xf32>
    %64 = arith.mulf %59, %63 : vector<32x32xf32>
    %65 = vector.broadcast %35 : vector<1x32xf32> to vector<32x32xf32>
    %66 = arith.mulf %64, %65 : vector<32x32xf32>
    %67 = vector.broadcast %36 : vector<1x32xf32> to vector<32x32xf32>
    %68 = arith.addf %66, %67 : vector<32x32xf32>
    %69 = arith.addf %68, %10 : vector<32x32xf32>
    %c0_43 = arith.constant 0 : index
    %c0_44 = arith.constant 0 : index
    %c0_45 = arith.constant 0 : index
    %70 = vector.load %arg26[%c0_43, %c0_44, %c0_45] : memref<1x32x32xf32, #tpu.memory_space<vmem>>, vector<1x32x32xf32>
    %71 = vector.shape_cast %70 : vector<1x32x32xf32> to vector<32x32xf32>
    %72 = vector.shape_cast %69 : vector<32x32xf32> to vector<1x32x32xf32>
    tpu.vector_store %arg26[%c0_43, %c0_44, %c0_45], %72 {strides = array<i32>} : memref<1x32x32xf32, #tpu.memory_space<vmem>>, vector<1x32x32xf32>,
    %c0_46 = arith.constant 0 : index
    %c0_47 = arith.constant 0 : index
    %73 = vector.load %arg27[%c0_46, %c0_47] : memref<16x32xf32, #tpu.memory_space<vmem>>, vector<16x32xf32>
    %cst_48 = arith.constant dense<0.000000e+00> : vector<16x32xf32>
    %74 = tpu.matmul %19, %68, %cst_48 {dimension_numbers = #tpu.dot_dimension_numbers<[1], [0], [0], [1], [0, 0, 1, 1], [], []>} : vector<16x32xf32>, vector<32x32xf32>, vector<16x32xf32> -> vector<16x32xf32>
    %75 = arith.addf %73, %74 : vector<16x32xf32>
    %c0_49 = arith.constant 0 : index
    %c0_50 = arith.constant 0 : index
    %76 = vector.load %arg27[%c0_49, %c0_50] : memref<16x32xf32, #tpu.memory_space<vmem>>, vector<16x32xf32>
    tpu.vector_store %arg27[%c0_49, %c0_50], %75 {strides = array<i32>} : memref<16x32xf32, #tpu.memory_space<vmem>>, vector<16x32xf32>,
    %c0_i32_51 = arith.constant 0 : i32
    %77 = arith.cmpi eq, %arg1, %c0_i32_51 : i32
    %78 = arith.extui %77 : i1 to i32
    %c0_i32_52 = arith.constant 0 : i32
    %79 = arith.cmpi ne, %78, %c0_i32_52 : i32
    scf.if %79 {
      %c0_53 = arith.constant 0 : index
      %c0_54 = arith.constant 0 : index
      %80 = vector.load %arg16[%c0_53, %c0_54] : memref<32x32xf32, #tpu.memory_space<vmem>>, vector<32x32xf32>
      %cst_55 = arith.constant dense<0.000000e+00> : vector<16x32xf32>
      %81 = tpu.matmul %1, %80, %cst_55 {dimension_numbers = #tpu.dot_dimension_numbers<[1], [0], [0], [1], [0, 0, 1, 1], [], []>} : vector<16x32xf32>, vector<32x32xf32>, vector<16x32xf32> -> vector<16x32xf32>
      %c0_56 = arith.constant 0 : index
      %c0_57 = arith.constant 0 : index
      %82 = vector.load %arg27[%c0_56, %c0_57] : memref<16x32xf32, #tpu.memory_space<vmem>>, vector<16x32xf32>
      %c0_58 = arith.constant 0 : index
      %c0_59 = arith.constant 0 : index
      %83 = vector.load %arg17[%c0_58, %c0_59] : memref<32x32xf32, #tpu.memory_space<vmem>>, vector<32x32xf32>
      %cst_60 = arith.constant dense<0.000000e+00> : vector<16x32xf32>
      %84 = tpu.matmul %82, %83, %cst_60 {dimension_numbers = #tpu.dot_dimension_numbers<[1], [0], [0], [1], [0, 0, 1, 1], [], []>} : vector<16x32xf32>, vector<32x32xf32>, vector<16x32xf32> -> vector<16x32xf32>
      %85 = arith.addf %81, %84 : vector<16x32xf32>
      %c0_61 = arith.constant 0 : index
      %c0_62 = arith.constant 0 : index
      %86 = vector.load %arg18[%c0_61, %c0_62] : memref<1x32xf32, #tpu.memory_space<vmem>>, vector<1x32xf32>
      %87 = vector.broadcast %86 : vector<1x32xf32> to vector<16x32xf32>
      %88 = arith.addf %85, %87 : vector<16x32xf32>
      %c0_63 = arith.constant 0 : index
      %c0_64 = arith.constant 0 : index
      %89 = vector.load %arg19[%c0_63, %c0_64] : memref<32x32xf32, #tpu.memory_space<vmem>>, vector<32x32xf32>
      %c0_65 = arith.constant 0 : index
      %c0_66 = arith.constant 0 : index
      %90 = vector.load %arg20[%c0_65, %c0_66] : memref<1x32xf32, #tpu.memory_space<vmem>>, vector<1x32xf32>
      %c0_67 = arith.constant 0 : index
      %c0_68 = arith.constant 0 : index
      %91 = vector.load %arg21[%c0_67, %c0_68] : memref<32x32xf32, #tpu.memory_space<vmem>>, vector<32x32xf32>
      %c0_69 = arith.constant 0 : index
      %c0_70 = arith.constant 0 : index
      %92 = vector.load %arg22[%c0_69, %c0_70] : memref<1x32xf32, #tpu.memory_space<vmem>>, vector<1x32xf32>
      %c0_71 = arith.constant 0 : index
      %c0_72 = arith.constant 0 : index
      %93 = vector.load %arg23[%c0_71, %c0_72] : memref<1x32xf32, #tpu.memory_space<vmem>>, vector<1x32xf32>
      %c0_73 = arith.constant 0 : index
      %c0_74 = arith.constant 0 : index
      %94 = vector.load %arg24[%c0_73, %c0_74] : memref<1x32xf32, #tpu.memory_space<vmem>>, vector<1x32xf32>
      %cst_75 = arith.constant 0.000000e+00 : f32
      %95 = vector.broadcast %cst_75 : f32 to vector<16x32xf32>
      %96 = arith.maximumf %88, %95 : vector<16x32xf32>
      %cst_76 = arith.constant dense<0.000000e+00> : vector<16x32xf32>
      %97 = tpu.matmul %96, %89, %cst_76 {dimension_numbers = #tpu.dot_dimension_numbers<[1], [0], [0], [1], [0, 0, 1, 1], [], []>} : vector<16x32xf32>, vector<32x32xf32>, vector<16x32xf32> -> vector<16x32xf32>
      %98 = vector.broadcast %90 : vector<1x32xf32> to vector<16x32xf32>
      %99 = arith.addf %97, %98 : vector<16x32xf32>
      %cst_77 = arith.constant 0.000000e+00 : f32
      %100 = vector.broadcast %cst_77 : f32 to vector<16x32xf32>
      %101 = arith.maximumf %99, %100 : vector<16x32xf32>
      %cst_78 = arith.constant dense<0.000000e+00> : vector<16x32xf32>
      %102 = tpu.matmul %101, %91, %cst_78 {dimension_numbers = #tpu.dot_dimension_numbers<[1], [0], [0], [1], [0, 0, 1, 1], [], []>} : vector<16x32xf32>, vector<32x32xf32>, vector<16x32xf32> -> vector<16x32xf32>
      %103 = vector.broadcast %92 : vector<1x32xf32> to vector<16x32xf32>
      %104 = arith.addf %102, %103 : vector<16x32xf32>
      %cst_79 = arith.constant dense<0.000000e+00> : vector<16xf32>
      %105 = vector.multi_reduction <add>, %104, %cst_79 [1] : vector<16x32xf32> to vector<16xf32>
      %106 = vector.shape_cast %105 : vector<16xf32> to vector<16x1xf32>
      %cst_80 = arith.constant 3.200000e+01 : f32
      %107 = vector.broadcast %cst_80 : f32 to vector<16x1xf32>
      %108 = arith.divf %106, %107 : vector<16x1xf32>
      %109 = vector.broadcast %108 : vector<16x1xf32> to vector<16x32xf32>
      %110 = arith.subf %104, %109 : vector<16x32xf32>
      %111 = arith.mulf %110, %110 : vector<16x32xf32>
      %cst_81 = arith.constant dense<0.000000e+00> : vector<16xf32>
      %112 = vector.multi_reduction <add>, %111, %cst_81 [1] : vector<16x32xf32> to vector<16xf32>
      %113 = vector.shape_cast %112 : vector<16xf32> to vector<16x1xf32>
      %cst_82 = arith.constant 3.200000e+01 : f32
      %114 = vector.broadcast %cst_82 : f32 to vector<16x1xf32>
      %115 = arith.divf %113, %114 : vector<16x1xf32>
      %116 = vector.broadcast %108 : vector<16x1xf32> to vector<16x32xf32>
      %117 = arith.subf %104, %116 : vector<16x32xf32>
      %cst_83 = arith.constant 9.99999974E-6 : f32
      %118 = vector.broadcast %cst_83 : f32 to vector<16x1xf32>
      %119 = arith.addf %115, %118 : vector<16x1xf32>
      %120 = math.rsqrt %119 : vector<16x1xf32>
      %121 = vector.broadcast %120 : vector<16x1xf32> to vector<16x32xf32>
      %122 = arith.mulf %117, %121 : vector<16x32xf32>
      %123 = vector.broadcast %93 : vector<1x32xf32> to vector<16x32xf32>
      %124 = arith.mulf %122, %123 : vector<16x32xf32>
      %125 = vector.broadcast %94 : vector<1x32xf32> to vector<16x32xf32>
      %126 = arith.addf %124, %125 : vector<16x32xf32>
      %127 = arith.addf %126, %1 : vector<16x32xf32>
      %c0_84 = arith.constant 0 : index
      %c0_85 = arith.constant 0 : index
      %c0_86 = arith.constant 0 : index
      %128 = vector.load %arg25[%c0_84, %c0_85, %c0_86] : memref<1x16x32xf32, #tpu.memory_space<vmem>>, vector<1x16x32xf32>
      %129 = vector.shape_cast %128 : vector<1x16x32xf32> to vector<16x32xf32>
      %130 = vector.shape_cast %127 : vector<16x32xf32> to vector<1x16x32xf32>
      tpu.vector_store %arg25[%c0_84, %c0_85, %c0_86], %130 {strides = array<i32>} : memref<1x16x32xf32, #tpu.memory_space<vmem>>, vector<1x16x32xf32>,
    } else {
    }
    return
  }
  func.func @transform_0(%arg0: i32, %arg1: i32) -> (i32, i32, i32) {
    %c0_i32 = arith.constant 0 : i32
    %c0_i32_0 = arith.constant 0 : i32
    return %arg0, %c0_i32, %arg1 : i32, i32, i32
  }
  func.func @transform_1(%arg0: i32, %arg1: i32) -> (i32, i32, i32) {
    %c0_i32 = arith.constant 0 : i32
    %c0_i32_0 = arith.constant 0 : i32
    return %arg0, %c0_i32, %arg1 : i32, i32, i32
  }
  func.func @transform_2(%arg0: i32, %arg1: i32) -> (i32, i32, i32) {
    %c0_i32 = arith.constant 0 : i32
    %c0_i32_0 = arith.constant 0 : i32
    %c0_i32_1 = arith.constant 0 : i32
    return %arg0, %c0_i32, %c0_i32_0 : i32, i32, i32
  }
  func.func @transform_3(%arg0: i32, %arg1: i32) -> (i32, i32, i32) {
    %c0_i32 = arith.constant 0 : i32
    %c0_i32_0 = arith.constant 0 : i32
    return %arg0, %arg1, %c0_i32 : i32, i32, i32
  }
  func.func @transform_4(%arg0: i32, %arg1: i32) -> (i32, i32) {
    %c0_i32 = arith.constant 0 : i32
    %c0_i32_0 = arith.constant 0 : i32
    %c0_i32_1 = arith.constant 0 : i32
    return %c0_i32, %c0_i32_0 : i32, i32
  }
  func.func @transform_5(%arg0: i32, %arg1: i32) -> (i32, i32) {
    %c0_i32 = arith.constant 0 : i32
    %c0_i32_0 = arith.constant 0 : i32
    %c0_i32_1 = arith.constant 0 : i32
    return %c0_i32, %c0_i32_0 : i32, i32
  }
  func.func @transform_6(%arg0: i32, %arg1: i32) -> (i32, i32) {
    %c0_i32 = arith.constant 0 : i32
    %c0_i32_0 = arith.constant 0 : i32
    %c0_i32_1 = arith.constant 0 : i32
    return %c0_i32, %c0_i32_0 : i32, i32
  }
  func.func @transform_7(%arg0: i32, %arg1: i32) -> (i32, i32) {
    %c0_i32 = arith.constant 0 : i32
    %c0_i32_0 = arith.constant 0 : i32
    %c0_i32_1 = arith.constant 0 : i32
    return %c0_i32, %c0_i32_0 : i32, i32
  }
  func.func @transform_8(%arg0: i32, %arg1: i32) -> (i32, i32) {
    %c0_i32 = arith.constant 0 : i32
    %c0_i32_0 = arith.constant 0 : i32
    %c0_i32_1 = arith.constant 0 : i32
    return %c0_i32, %c0_i32_0 : i32, i32
  }
  func.func @transform_9(%arg0: i32, %arg1: i32) -> (i32, i32) {
    %c0_i32 = arith.constant 0 : i32
    %c0_i32_0 = arith.constant 0 : i32
    %c0_i32_1 = arith.constant 0 : i32
    return %c0_i32, %c0_i32_0 : i32, i32
  }
  func.func @transform_10(%arg0: i32, %arg1: i32) -> (i32, i32) {
    %c0_i32 = arith.constant 0 : i32
    %c0_i32_0 = arith.constant 0 : i32
    %c0_i32_1 = arith.constant 0 : i32
    return %c0_i32, %c0_i32_0 : i32, i32
  }
  func.func @transform_11(%arg0: i32, %arg1: i32) -> (i32, i32) {
    %c0_i32 = arith.constant 0 : i32
    %c0_i32_0 = arith.constant 0 : i32
    %c0_i32_1 = arith.constant 0 : i32
    return %c0_i32, %c0_i32_0 : i32, i32
  }
  func.func @transform_12(%arg0: i32, %arg1: i32) -> (i32, i32) {
    %c0_i32 = arith.constant 0 : i32
    %c0_i32_0 = arith.constant 0 : i32
    %c0_i32_1 = arith.constant 0 : i32
    return %c0_i32, %c0_i32_0 : i32, i32
  }
  func.func @transform_13(%arg0: i32, %arg1: i32) -> (i32, i32) {
    %c0_i32 = arith.constant 0 : i32
    %c0_i32_0 = arith.constant 0 : i32
    %c0_i32_1 = arith.constant 0 : i32
    return %c0_i32, %c0_i32_0 : i32, i32
  }
  func.func @transform_14(%arg0: i32, %arg1: i32) -> (i32, i32) {
    %c0_i32 = arith.constant 0 : i32
    %c0_i32_0 = arith.constant 0 : i32
    %c0_i32_1 = arith.constant 0 : i32
    return %c0_i32, %c0_i32_0 : i32, i32
  }
  func.func @transform_15(%arg0: i32, %arg1: i32) -> (i32, i32) {
    %c0_i32 = arith.constant 0 : i32
    %c0_i32_0 = arith.constant 0 : i32
    %c0_i32_1 = arith.constant 0 : i32
    return %c0_i32, %c0_i32_0 : i32, i32
  }
  func.func @transform_16(%arg0: i32, %arg1: i32) -> (i32, i32) {
    %c0_i32 = arith.constant 0 : i32
    %c0_i32_0 = arith.constant 0 : i32
    %c0_i32_1 = arith.constant 0 : i32
    return %c0_i32, %c0_i32_0 : i32, i32
  }
  func.func @transform_17(%arg0: i32, %arg1: i32) -> (i32, i32) {
    %c0_i32 = arith.constant 0 : i32
    %c0_i32_0 = arith.constant 0 : i32
    %c0_i32_1 = arith.constant 0 : i32
    return %c0_i32, %c0_i32_0 : i32, i32
  }
  func.func @transform_18(%arg0: i32, %arg1: i32) -> (i32, i32) {
    %c0_i32 = arith.constant 0 : i32
    %c0_i32_0 = arith.constant 0 : i32
    %c0_i32_1 = arith.constant 0 : i32
    return %c0_i32, %c0_i32_0 : i32, i32
  }
  func.func @transform_19(%arg0: i32, %arg1: i32) -> (i32, i32) {
    %c0_i32 = arith.constant 0 : i32
    %c0_i32_0 = arith.constant 0 : i32
    %c0_i32_1 = arith.constant 0 : i32
    return %c0_i32, %c0_i32_0 : i32, i32
  }
  func.func @transform_20(%arg0: i32, %arg1: i32) -> (i32, i32) {
    %c0_i32 = arith.constant 0 : i32
    %c0_i32_0 = arith.constant 0 : i32
    %c0_i32_1 = arith.constant 0 : i32
    return %c0_i32, %c0_i32_0 : i32, i32
  }
  func.func @transform_21(%arg0: i32, %arg1: i32) -> (i32, i32) {
    %c0_i32 = arith.constant 0 : i32
    %c0_i32_0 = arith.constant 0 : i32
    %c0_i32_1 = arith.constant 0 : i32
    return %c0_i32, %c0_i32_0 : i32, i32
  }
  func.func @transform_22(%arg0: i32, %arg1: i32) -> (i32, i32) {
    %c0_i32 = arith.constant 0 : i32
    %c0_i32_0 = arith.constant 0 : i32
    %c0_i32_1 = arith.constant 0 : i32
    return %c0_i32, %c0_i32_0 : i32, i32
  }
  func.func @transform_23(%arg0: i32, %arg1: i32) -> (i32, i32, i32) {
    %c0_i32 = arith.constant 0 : i32
    %c0_i32_0 = arith.constant 0 : i32
    %c0_i32_1 = arith.constant 0 : i32
    return %arg0, %c0_i32, %c0_i32_0 : i32, i32, i32
  }
  func.func @transform_24(%arg0: i32, %arg1: i32) -> (i32, i32, i32) {
    %c0_i32 = arith.constant 0 : i32
    %c0_i32_0 = arith.constant 0 : i32
    return %arg0, %arg1, %c0_i32 : i32, i32, i32
  }
}

</mosaic_0001>

<llo_original>
// kernel: tpu_custom_call.1
$region0: #{tpu_custom_call.1}
  #allocation0 [shape = 'u32[]', space=smem, size = 0x4, offset = 0x4, fixed_abs, tag = 'smem constant byte address 0x4 - core index']
  #allocation1 [shape = 'u32[144,128]{1,0:T(1,128)}', space=vmem, size = 0x12000, scoped, tag = 'internal scratch']
  #allocation2 [shape = 'f32[16,32]{1,0:T(8,128)}', space=vmem, size = 0x2000, scoped, tag = 'scratch operand']
  #allocation3 [shape = 'f32[16,32]{1,0:T(8,128)}', space=vmem, size = 0x2000, scoped, tag = 'scratch operand']
  #allocation4 [shape = 'f32[16,32]{1,0:T(8,128)}', space=vmem, size = 0x2000, scoped, tag = 'scratch operand']
  %s0 = inlined_call_operand.hbm [shape: s32[2,1,32], index: 0, kind: input, shape index: {}]
  %s1 = inlined_call_operand.hbm [shape: s32[2,1,32], index: 1, kind: input, shape index: {}]
  %s2 = inlined_call_operand.hbm [shape: f32[2,16,32], index: 2, kind: input, shape index: {}]
  %s3 = inlined_call_operand.hbm [shape: f32[2,32,32], index: 3, kind: input, shape index: {}]
  %s4 = inlined_call_operand.hbm [shape: f32[32,32], index: 4, kind: input, shape index: {}]
  %s5 = inlined_call_operand.hbm [shape: f32[32,32], index: 5, kind: input, shape index: {}]
  %s6 = inlined_call_operand.hbm [shape: f32[32,32], index: 6, kind: input, shape index: {}]
  %s7 = inlined_call_operand.hbm [shape: f32[1,32], index: 7, kind: input, shape index: {}]
  %s8 = inlined_call_operand.hbm [shape: f32[32,32], index: 8, kind: input, shape index: {}]
  %s9 = inlined_call_operand.hbm [shape: f32[1,32], index: 9, kind: input, shape index: {}]
  %s10 = inlined_call_operand.vmem [shape: f32[32,32], index: 10, kind: input, shape index: {}]
  %s11 = inlined_call_operand.hbm [shape: f32[1,32], index: 11, kind: input, shape index: {}]
  %s12 = inlined_call_operand.hbm [shape: f32[1,32], index: 12, kind: input, shape index: {}]
  %s13 = inlined_call_operand.hbm [shape: f32[1,32], index: 13, kind: input, shape index: {}]
  %s14 = inlined_call_operand.hbm [shape: f32[32,32], index: 14, kind: input, shape index: {}]
  %s15 = inlined_call_operand.hbm [shape: f32[32,32], index: 15, kind: input, shape index: {}]
  %s16 = inlined_call_operand.hbm [shape: f32[1,32], index: 16, kind: input, shape index: {}]
  %s17 = inlined_call_operand.vmem [shape: f32[32,32], index: 17, kind: input, shape index: {}]
  %s18 = inlined_call_operand.vmem [shape: f32[1,32], index: 18, kind: input, shape index: {}]
  %s19 = inlined_call_operand.hbm [shape: f32[32,32], index: 19, kind: input, shape index: {}]
  %s20 = inlined_call_operand.vmem [shape: f32[1,32], index: 20, kind: input, shape index: {}]
  %s21 = inlined_call_operand.vmem [shape: f32[1,32], index: 21, kind: input, shape index: {}]
  %s22 = inlined_call_operand.vmem [shape: f32[1,32], index: 22, kind: input, shape index: {}]
  %s23 = inlined_call_operand.hbm [shape: f32[2,16,32], index: 23, kind: output, shape index: {0}]
  %s24 = inlined_call_operand.hbm [shape: f32[2,32,32], index: 24, kind: output, shape index: {1}]
  %25 = xla_tuple %s23, %s24
  %s26 = sld [smem:[#allocation0]]
  $region209: #{tpu_custom_call.1} parent=0
    _
  %s28 = ssub.s32 1, %s26
  %s29 = scalar_select 0, %s28, %s26
  $region1: #{tpu_custom_call.1} parent=0
    #allocation5 [shape = 'u8[1024]{0}', space=vmem, size = 0x400, scoped, tag = 'input window, operand 0']
    #allocation6 [shape = 's32[2]{0}', space=sflag, size = 0x8, scoped, tag = 'scoped memory for tpu_custom_call.1']
    #allocation7 [shape = 's32[2]{0}', space=sflag, size = 0x8, scoped, tag = 'scoped memory for tpu_custom_call.1']
    #allocation8 [shape = 'u8[1024]{0}', space=vmem, size = 0x400, scoped, tag = 'input window, operand 1']
    #allocation9 [shape = 's32[2]{0}', space=sflag, size = 0x8, scoped, tag = 'scoped memory for tpu_custom_call.1']
    #allocation10 [shape = 'u8[16384]{0}', space=vmem, size = 0x4000, scoped, tag = 'input window, operand 2']
    #allocation11 [shape = 'u8[32768]{0}', space=vmem, size = 0x8000, scoped, tag = 'input window, operand 3']
    #allocation12 [shape = 's32[2]{0}', space=sflag, size = 0x8, scoped, tag = 'scoped memory for tpu_custom_call.1']
    #allocation13 [shape = 'u8[16384]{0}', space=vmem, size = 0x4000, scoped, tag = 'input window, operand 4, single buffered']
    #allocation14 [shape = 'u8[16384]{0}', space=vmem, size = 0x4000, scoped, tag = 'input window, operand 5, single buffered']
    #allocation15 [shape = 's32[1]{0}', space=sflag, size = 0x4, scoped, tag = 'scoped memory for tpu_custom_call.1']
    #allocation16 [shape = 'u8[16384]{0}', space=vmem, size = 0x4000, scoped, tag = 'input window, operand 6, single buffered']
    #allocation17 [shape = 'u8[512]{0}', space=vmem, size = 0x400, scoped, tag = 'input window, operand 7, single buffered']
    #allocation18 [shape = 's32[1]{0}', space=sflag, size = 0x4, scoped, tag = 'scoped memory for tpu_custom_call.1']
    #allocation19 [shape = 'u8[16384]{0}', space=vmem, size = 0x4000, scoped, tag = 'input window, operand 8, single buffered']
    #allocation20 [shape = 'u8[512]{0}', space=vmem, size = 0x400, scoped, tag = 'input window, operand 9, single buffered']
    #allocation21 [shape = 's32[1]{0}', space=sflag, size = 0x4, scoped, tag = 'scoped memory for tpu_custom_call.1']
    #allocation22 [shape = 'u8[512]{0}', space=vmem, size = 0x400, scoped, tag = 'input window, operand 11, single buffered']
    #allocation23 [shape = 'u8[512]{0}', space=vmem, size = 0x400, scoped, tag = 'input window, operand 12, single buffered']
    #allocation24 [shape = 's32[1]{0}', space=sflag, size = 0x4, scoped, tag = 'scoped memory for tpu_custom_call.1']
    #allocation25 [shape = 'u8[512]{0}', space=vmem, size = 0x400, scoped, tag = 'input window, operand 13, single buffered']
    #allocation26 [shape = 'u8[16384]{0}', space=vmem, size = 0x4000, scoped, tag = 'input window, operand 14, single buffered']
    #allocation27 [shape = 's32[1]{0}', space=sflag, size = 0x4, scoped, tag = 'scoped memory for tpu_custom_call.1']
    #allocation28 [shape = 'u8[16384]{0}', space=vmem, size = 0x4000, scoped, tag = 'input window, operand 15, single buffered']
    #allocation29 [shape = 'u8[512]{0}', space=vmem, size = 0x400, scoped, tag = 'input window, operand 16, single buffered']
    #allocation30 [shape = 's32[1]{0}', space=sflag, size = 0x4, scoped, tag = 'scoped memory for tpu_custom_call.1']
    #allocation31 [shape = 'u8[16384]{0}', space=vmem, size = 0x4000, scoped, tag = 'input window, operand 19, single buffered']
    #allocation32 [shape = 'u8[16384]{0}', space=vmem, size = 0x4000, scoped, tag = 'output window, operand 0']
    #allocation33 [shape = 'u8[32768]{0}', space=vmem, size = 0x8000, scoped, tag = 'output window, operand 1']
    #allocation34 [shape = 's32[2]{0}', space=sflag, size = 0x8, scoped, tag = 'scoped memory for tpu_custom_call.1']
    %30 = vsyncpa [#allocation6], 0
    %s31 = scalar_lea.sflag [#allocation6], 1
    %32 = vsyncpa %s31, 0
    %33 = vsyncpa [#allocation9], 0
    %s34 = scalar_lea.sflag [#allocation9], 1
    %35 = vsyncpa %s34, 0
    %36 = vsyncpa [#allocation12], 0
    %s37 = scalar_lea.sflag [#allocation12], 1
    %38 = vsyncpa %s37, 0
    %39 = vsyncpa [#allocation15], 0
    %40 = vsyncpa [#allocation18], 0
    %41 = vsyncpa [#allocation21], 0
    %42 = vsyncpa [#allocation24], 0
    %43 = vsyncpa [#allocation27], 0
    %44 = vsyncpa [#allocation30], 0
    %45 = vsyncpa [#allocation7], 0
    %s46 = scalar_lea.sflag [#allocation7], 1
    %47 = vsyncpa %s46, 0
    %48 = vsyncpa [#allocation34], 0
    %s49 = scalar_lea.sflag [#allocation34], 1
    %50 = vsyncpa %s49, 0
    loop: start=0, step=1, limit=4
    $region2: #{tpu_custom_call.1} parent=1 // loop_pre_header
      _
    $region3: #{tpu_custom_call.1} parent=1 // loop_header
      %s52 = sphi 0, %s56
      %p53 = scmp.ge.s32.totalorder %s52, 4
      %s59 = sphi 0, %s71
      %s60 = sphi 0, %s67
      %s61 = sphi 0, %s59
      %s62 = sphi 0, %s60
      %s63 = sphi 0, %s61
      %s64 = sphi 0, %s62
      %s76 = sphi 0, %s78
      %s79 = sphi 0, %s76
      %s80 = sphi 0, %s79
      %s96 = sphi 0, %s80
      %s104 = sphi 0, %s106
      %s107 = sphi 0, %s104
      %s108 = sphi 0, %s107
      %s124 = sphi 0, %s108
      %s130 = sphi 0, %s132
      %s133 = sphi 0, %s130
      %s134 = sphi 0, %s133
      %s150 = sphi 0, %s134
      %s158 = sphi 0, %s160
      %s161 = sphi 0, %s158
      %s162 = sphi 0, %s161
      %s178 = sphi 0, %s162
      %s182 = sphi 0, %s182
      %s184 = sphi 0, %s182
      %s185 = sphi 0, %s184
      %s199 = sphi 0, %s185
      %s203 = sphi 0, %s203
      %s205 = sphi 0, %s203
      %s206 = sphi 0, %s205
      %s220 = sphi 0, %s206
      %s224 = sphi 0, %s224
      %s226 = sphi 0, %s224
      %s227 = sphi 0, %s226
      %s241 = sphi 0, %s227
      %s245 = sphi 0, %s245
      %s247 = sphi 0, %s245
      %s248 = sphi 0, %s247
      %s262 = sphi 0, %s248
      %s266 = sphi 0, %s266
      %s268 = sphi 0, %s266
      %s269 = sphi 0, %s268
      %s283 = sphi 0, %s269
      %s287 = sphi 0, %s287
      %s289 = sphi 0, %s287
      %s290 = sphi 0, %s289
      %s304 = sphi 0, %s290
      %s308 = sphi 0, %s308
      %s310 = sphi 0, %s308
      %s311 = sphi 0, %s310
      %s325 = sphi 0, %s311
      %s329 = sphi 0, %s329
      %s331 = sphi 0, %s329
      %s332 = sphi 0, %s331
      %s346 = sphi 0, %s332
      %s350 = sphi 0, %s350
      %s352 = sphi 0, %s350
      %s353 = sphi 0, %s352
      %s367 = sphi 0, %s353
      %s371 = sphi 0, %s371
      %s373 = sphi 0, %s371
      %s374 = sphi 0, %s373
      %s388 = sphi 0, %s374
      %s392 = sphi 0, %s392
      %s394 = sphi 0, %s392
      %s395 = sphi 0, %s394
      %s409 = sphi 0, %s395
      %s413 = sphi 0, %s413
      %s415 = sphi 0, %s413
      %s416 = sphi 0, %s415
      %s430 = sphi 0, %s416
      %s434 = sphi 0, %s434
      %s436 = sphi 0, %s434
      %s437 = sphi 0, %s436
      %s451 = sphi 0, %s437
      %s455 = sphi 0, %s455
      %s457 = sphi 0, %s455
      %s458 = sphi 0, %s457
      %s472 = sphi 0, %s458
      %s476 = sphi 0, %s476
      %s478 = sphi 0, %s476
      %s479 = sphi 0, %s478
      %s493 = sphi 0, %s479
      %s497 = sphi 0, %s497
      %s499 = sphi 0, %s497
      %s500 = sphi 0, %s499
      %s514 = sphi 0, %s500
      %s518 = sphi 0, %s518
      %s520 = sphi 0, %s518
      %s521 = sphi 0, %s520
      %s535 = sphi 0, %s521
      %s539 = sphi 0, %s539
      %s541 = sphi 0, %s539
      %s542 = sphi 0, %s541
      %s556 = sphi 0, %s542
      %s560 = sphi 0, %s560
      %s562 = sphi 0, %s560
      %s563 = sphi 0, %s562
      %s577 = sphi 0, %s563
      %s583 = sphi 0, %s585
      %s586 = sphi 0, %s583
      %s587 = sphi 0, %s586
      %s603 = sphi 0, %s587
      %s611 = sphi 0, %s613
      %s614 = sphi 0, %s611
      %s615 = sphi 0, %s614
      %s631 = sphi 0, %s615
    $region4: #{tpu_custom_call.1} parent=1 // loop_header_branch
      %55 = sbr.rel (%p53) target = $region8
    $region5: #{tpu_custom_call.1} parent=1 // loop_body
      %s57 = ssub.s32 %s52, 1
      %s58 = ssub.s32 %s52, 2
      %s65 = sadd.s32 1, %s60
      %p66 = scmp.ge.s32.totalorder %s65, 1
      %s67 = scalar_select %p66, 0, %s65
      %s68 = sadd.s32 1, %s59
      %s69 = scalar_select %p66, %s68, %s59
      %p70 = scmp.ge.s32.totalorder %s69, 2
      %s71 = scalar_select %p70, 0, %s69
      %s72 = ssub.s32 %s59, %s71
      %s73 = ssub.s32 %s60, %s67
      %s74 = sor.u32 %s72, %s73
      %p75 = scmp.eq.s32.totalorder %s74, 0
      %s77 = sadd.s32 %s76, 1
      %s78 = scalar_select %p75, %s76, %s77
      %p81 = pneg %p75
      %p82 = scmp.eq.s32.totalorder %s52, 1
      %p83 = por %p81, %p82
      %p84 = scmp.ne.s32.totalorder %s76, %s79
      %p85 = scmp.eq.s32.totalorder %s52, 0
      %p86 = por %p84, %p85
      %p87 = scmp.ne.s32.totalorder %s76, %s79
      %p88 = scmp.eq.s32.totalorder %s57, 1
      %p89 = por %p87, %p88
      %p90 = scmp.ne.s32.totalorder %s79, %s80
      %p91 = scmp.eq.s32.totalorder %s57, 0
      %p92 = por %p90, %p91
      %p93 = scmp.ne.s32.totalorder %s79, %s80
      %p94 = scmp.eq.s32.totalorder %s58, 1
      %p95 = por %p93, %p94
      %p97 = scmp.ne.s32.totalorder %s80, %s96
      %p98 = scmp.eq.s32.totalorder %s58, 0
      %p99 = por %p97, %p98
      %s100 = ssub.s32 %s59, %s71
      %s101 = ssub.s32 %s60, %s67
      %s102 = sor.u32 %s100, %s101
      %p103 = scmp.eq.s32.totalorder %s102, 0
      %s105 = sadd.s32 %s104, 1
      %s106 = scalar_select %p103, %s104, %s105
      %p109 = pneg %p103
      %p110 = scmp.eq.s32.totalorder %s52, 1
      %p111 = por %p109, %p110
      %p112 = scmp.ne.s32.totalorder %s104, %s107
      %p113 = scmp.eq.s32.totalorder %s52, 0
      %p114 = por %p112, %p113
      %p115 = scmp.ne.s32.totalorder %s104, %s107
      %p116 = scmp.eq.s32.totalorder %s57, 1
      %p117 = por %p115, %p116
      %p118 = scmp.ne.s32.totalorder %s107, %s108
      %p119 = scmp.eq.s32.totalorder %s57, 0
      %p120 = por %p118, %p119
      %p121 = scmp.ne.s32.totalorder %s107, %s108
      %p122 = scmp.eq.s32.totalorder %s58, 1
      %p123 = por %p121, %p122
      %p125 = scmp.ne.s32.totalorder %s108, %s124
      %p126 = scmp.eq.s32.totalorder %s58, 0
      %p127 = por %p125, %p126
      %s128 = ssub.s32 %s59, %s71
      %p129 = scmp.eq.s32.totalorder %s128, 0
      %s131 = sadd.s32 %s130, 1
      %s132 = scalar_select %p129, %s130, %s131
      %p135 = pneg %p129
      %p136 = scmp.eq.s32.totalorder %s52, 1
      %p137 = por %p135, %p136
      %p138 = scmp.ne.s32.totalorder %s130, %s133
      %p139 = scmp.eq.s32.totalorder %s52, 0
      %p140 = por %p138, %p139
      %p141 = scmp.ne.s32.totalorder %s130, %s133
      %p142 = scmp.eq.s32.totalorder %s57, 1
      %p143 = por %p141, %p142
      %p144 = scmp.ne.s32.totalorder %s133, %s134
      %p145 = scmp.eq.s32.totalorder %s57, 0
      %p146 = por %p144, %p145
      %p147 = scmp.ne.s32.totalorder %s133, %s134
      %p148 = scmp.eq.s32.totalorder %s58, 1
      %p149 = por %p147, %p148
      %p151 = scmp.ne.s32.totalorder %s134, %s150
      %p152 = scmp.eq.s32.totalorder %s58, 0
      %p153 = por %p151, %p152
      %s154 = ssub.s32 %s59, %s71
      %s155 = ssub.s32 %s60, %s67
      %s156 = sor.u32 %s154, %s155
      %p157 = scmp.eq.s32.totalorder %s156, 0
      %s159 = sadd.s32 %s158, 1
      %s160 = scalar_select %p157, %s158, %s159
      %p163 = pneg %p157
      %p164 = scmp.eq.s32.totalorder %s52, 1
      %p165 = por %p163, %p164
      %p166 = scmp.ne.s32.totalorder %s158, %s161
      %p167 = scmp.eq.s32.totalorder %s52, 0
      %p168 = por %p166, %p167
      %p169 = scmp.ne.s32.totalorder %s158, %s161
      %p170 = scmp.eq.s32.totalorder %s57, 1
      %p171 = por %p169, %p170
      %p172 = scmp.ne.s32.totalorder %s161, %s162
      %p173 = scmp.eq.s32.totalorder %s57, 0
      %p174 = por %p172, %p173
      %p175 = scmp.ne.s32.totalorder %s161, %s162
      %p176 = scmp.eq.s32.totalorder %s58, 1
      %p177 = por %p175, %p176
      %p179 = scmp.ne.s32.totalorder %s162, %s178
      %p180 = scmp.eq.s32.totalorder %s58, 0
      %p181 = por %p179, %p180
      %s183 = sadd.s32 %s182, 1
      %p186 = scmp.eq.s32.totalorder %s52, 1
      %p187 = scmp.ne.s32.totalorder %s182, %s184
      %p188 = scmp.eq.s32.totalorder %s52, 0
      %p189 = por %p187, %p188
      %p190 = scmp.ne.s32.totalorder %s182, %s184
      %p191 = scmp.eq.s32.totalorder %s57, 1
      %p192 = por %p190, %p191
      %p193 = scmp.ne.s32.totalorder %s184, %s185
      %p194 = scmp.eq.s32.totalorder %s57, 0
      %p195 = por %p193, %p194
      %p196 = scmp.ne.s32.totalorder %s184, %s185
      %p197 = scmp.eq.s32.totalorder %s58, 1
      %p198 = por %p196, %p197
      %p200 = scmp.ne.s32.totalorder %s185, %s199
      %p201 = scmp.eq.s32.totalorder %s58, 0
      %p202 = por %p200, %p201
      %s204 = sadd.s32 %s203, 1
      %p207 = scmp.eq.s32.totalorder %s52, 1
      %p208 = scmp.ne.s32.totalorder %s203, %s205
      %p209 = scmp.eq.s32.totalorder %s52, 0
      %p210 = por %p208, %p209
      %p211 = scmp.ne.s32.totalorder %s203, %s205
      %p212 = scmp.eq.s32.totalorder %s57, 1
      %p213 = por %p211, %p212
      %p214 = scmp.ne.s32.totalorder %s205, %s206
      %p215 = scmp.eq.s32.totalorder %s57, 0
      %p216 = por %p214, %p215
      %p217 = scmp.ne.s32.totalorder %s205, %s206
      %p218 = scmp.eq.s32.totalorder %s58, 1
      %p219 = por %p217, %p218
      %p221 = scmp.ne.s32.totalorder %s206, %s220
      %p222 = scmp.eq.s32.totalorder %s58, 0
      %p223 = por %p221, %p222
      %s225 = sadd.s32 %s224, 1
      %p228 = scmp.eq.s32.totalorder %s52, 1
      %p229 = scmp.ne.s32.totalorder %s224, %s226
      %p230 = scmp.eq.s32.totalorder %s52, 0
      %p231 = por %p229, %p230
      %p232 = scmp.ne.s32.totalorder %s224, %s226
      %p233 = scmp.eq.s32.totalorder %s57, 1
      %p234 = por %p232, %p233
      %p235 = scmp.ne.s32.totalorder %s226, %s227
      %p236 = scmp.eq.s32.totalorder %s57, 0
      %p237 = por %p235, %p236
      %p238 = scmp.ne.s32.totalorder %s226, %s227
      %p239 = scmp.eq.s32.totalorder %s58, 1
      %p240 = por %p238, %p239
      %p242 = scmp.ne.s32.totalorder %s227, %s241
      %p243 = scmp.eq.s32.totalorder %s58, 0
      %p244 = por %p242, %p243
      %s246 = sadd.s32 %s245, 1
      %p249 = scmp.eq.s32.totalorder %s52, 1
      %p250 = scmp.ne.s32.totalorder %s245, %s247
      %p251 = scmp.eq.s32.totalorder %s52, 0
      %p252 = por %p250, %p251
      %p253 = scmp.ne.s32.totalorder %s245, %s247
      %p254 = scmp.eq.s32.totalorder %s57, 1
      %p255 = por %p253, %p254
      %p256 = scmp.ne.s32.totalorder %s247, %s248
      %p257 = scmp.eq.s32.totalorder %s57, 0
      %p258 = por %p256, %p257
      %p259 = scmp.ne.s32.totalorder %s247, %s248
      %p260 = scmp.eq.s32.totalorder %s58, 1
      %p261 = por %p259, %p260
      %p263 = scmp.ne.s32.totalorder %s248, %s262
      %p264 = scmp.eq.s32.totalorder %s58, 0
      %p265 = por %p263, %p264
      %s267 = sadd.s32 %s266, 1
      %p270 = scmp.eq.s32.totalorder %s52, 1
      %p271 = scmp.ne.s32.totalorder %s266, %s268
      %p272 = scmp.eq.s32.totalorder %s52, 0
      %p273 = por %p271, %p272
      %p274 = scmp.ne.s32.totalorder %s266, %s268
      %p275 = scmp.eq.s32.totalorder %s57, 1
      %p276 = por %p274, %p275
      %p277 = scmp.ne.s32.totalorder %s268, %s269
      %p278 = scmp.eq.s32.totalorder %s57, 0
      %p279 = por %p277, %p278
      %p280 = scmp.ne.s32.totalorder %s268, %s269
      %p281 = scmp.eq.s32.totalorder %s58, 1
      %p282 = por %p280, %p281
      %p284 = scmp.ne.s32.totalorder %s269, %s283
      %p285 = scmp.eq.s32.totalorder %s58, 0
      %p286 = por %p284, %p285
      %s288 = sadd.s32 %s287, 1
      %p291 = scmp.eq.s32.totalorder %s52, 1
      %p292 = scmp.ne.s32.totalorder %s287, %s289
      %p293 = scmp.eq.s32.totalorder %s52, 0
      %p294 = por %p292, %p293
      %p295 = scmp.ne.s32.totalorder %s287, %s289
      %p296 = scmp.eq.s32.totalorder %s57, 1
      %p297 = por %p295, %p296
      %p298 = scmp.ne.s32.totalorder %s289, %s290
      %p299 = scmp.eq.s32.totalorder %s57, 0
      %p300 = por %p298, %p299
      %p301 = scmp.ne.s32.totalorder %s289, %s290
      %p302 = scmp.eq.s32.totalorder %s58, 1
      %p303 = por %p301, %p302
      %p305 = scmp.ne.s32.totalorder %s290, %s304
      %p306 = scmp.eq.s32.totalorder %s58, 0
      %p307 = por %p305, %p306
      %s309 = sadd.s32 %s308, 1
      %p312 = scmp.eq.s32.totalorder %s52, 1
      %p313 = scmp.ne.s32.totalorder %s308, %s310
      %p314 = scmp.eq.s32.totalorder %s52, 0
      %p315 = por %p313, %p314
      %p316 = scmp.ne.s32.totalorder %s308, %s310
      %p317 = scmp.eq.s32.totalorder %s57, 1
      %p318 = por %p316, %p317
      %p319 = scmp.ne.s32.totalorder %s310, %s311
      %p320 = scmp.eq.s32.totalorder %s57, 0
      %p321 = por %p319, %p320
      %p322 = scmp.ne.s32.totalorder %s310, %s311
      %p323 = scmp.eq.s32.totalorder %s58, 1
      %p324 = por %p322, %p323
      %p326 = scmp.ne.s32.totalorder %s311, %s325
      %p327 = scmp.eq.s32.totalorder %s58, 0
      %p328 = por %p326, %p327
      %s330 = sadd.s32 %s329, 1
      %p333 = scmp.eq.s32.totalorder %s52, 1
      %p334 = scmp.ne.s32.totalorder %s329, %s331
      %p335 = scmp.eq.s32.totalorder %s52, 0
      %p336 = por %p334, %p335
      %p337 = scmp.ne.s32.totalorder %s329, %s331
      %p338 = scmp.eq.s32.totalorder %s57, 1
      %p339 = por %p337, %p338
      %p340 = scmp.ne.s32.totalorder %s331, %s332
      %p341 = scmp.eq.s32.totalorder %s57, 0
      %p342 = por %p340, %p341
      %p343 = scmp.ne.s32.totalorder %s331, %s332
      %p344 = scmp.eq.s32.totalorder %s58, 1
      %p345 = por %p343, %p344
      %p347 = scmp.ne.s32.totalorder %s332, %s346
      %p348 = scmp.eq.s32.totalorder %s58, 0
      %p349 = por %p347, %p348
      %s351 = sadd.s32 %s350, 1
      %p354 = scmp.eq.s32.totalorder %s52, 1
      %p355 = scmp.ne.s32.totalorder %s350, %s352
      %p356 = scmp.eq.s32.totalorder %s52, 0
      %p357 = por %p355, %p356
      %p358 = scmp.ne.s32.totalorder %s350, %s352
      %p359 = scmp.eq.s32.totalorder %s57, 1
      %p360 = por %p358, %p359
      %p361 = scmp.ne.s32.totalorder %s352, %s353
      %p362 = scmp.eq.s32.totalorder %s57, 0
      %p363 = por %p361, %p362
      %p364 = scmp.ne.s32.totalorder %s352, %s353
      %p365 = scmp.eq.s32.totalorder %s58, 1
      %p366 = por %p364, %p365
      %p368 = scmp.ne.s32.totalorder %s353, %s367
      %p369 = scmp.eq.s32.totalorder %s58, 0
      %p370 = por %p368, %p369
      %s372 = sadd.s32 %s371, 1
      %p375 = scmp.eq.s32.totalorder %s52, 1
      %p376 = scmp.ne.s32.totalorder %s371, %s373
      %p377 = scmp.eq.s32.totalorder %s52, 0
      %p378 = por %p376, %p377
      %p379 = scmp.ne.s32.totalorder %s371, %s373
      %p380 = scmp.eq.s32.totalorder %s57, 1
      %p381 = por %p379, %p380
      %p382 = scmp.ne.s32.totalorder %s373, %s374
      %p383 = scmp.eq.s32.totalorder %s57, 0
      %p384 = por %p382, %p383
      %p385 = scmp.ne.s32.totalorder %s373, %s374
      %p386 = scmp.eq.s32.totalorder %s58, 1
      %p387 = por %p385, %p386
      %p389 = scmp.ne.s32.totalorder %s374, %s388
      %p390 = scmp.eq.s32.totalorder %s58, 0
      %p391 = por %p389, %p390
      %s393 = sadd.s32 %s392, 1
      %p396 = scmp.eq.s32.totalorder %s52, 1
      %p397 = scmp.ne.s32.totalorder %s392, %s394
      %p398 = scmp.eq.s32.totalorder %s52, 0
      %p399 = por %p397, %p398
      %p400 = scmp.ne.s32.totalorder %s392, %s394
      %p401 = scmp.eq.s32.totalorder %s57, 1
      %p402 = por %p400, %p401
      %p403 = scmp.ne.s32.totalorder %s394, %s395
      %p404 = scmp.eq.s32.totalorder %s57, 0
      %p405 = por %p403, %p404
      %p406 = scmp.ne.s32.totalorder %s394, %s395
      %p407 = scmp.eq.s32.totalorder %s58, 1
      %p408 = por %p406, %p407
      %p410 = scmp.ne.s32.totalorder %s395, %s409
      %p411 = scmp.eq.s32.totalorder %s58, 0
      %p412 = por %p410, %p411
      %s414 = sadd.s32 %s413, 1
      %p417 = scmp.eq.s32.totalorder %s52, 1
      %p418 = scmp.ne.s32.totalorder %s413, %s415
      %p419 = scmp.eq.s32.totalorder %s52, 0
      %p420 = por %p418, %p419
      %p421 = scmp.ne.s32.totalorder %s413, %s415
      %p422 = scmp.eq.s32.totalorder %s57, 1
      %p423 = por %p421, %p422
      %p424 = scmp.ne.s32.totalorder %s415, %s416
      %p425 = scmp.eq.s32.totalorder %s57, 0
      %p426 = por %p424, %p425
      %p427 = scmp.ne.s32.totalorder %s415, %s416
      %p428 = scmp.eq.s32.totalorder %s58, 1
      %p429 = por %p427, %p428
      %p431 = scmp.ne.s32.totalorder %s416, %s430
      %p432 = scmp.eq.s32.totalorder %s58, 0
      %p433 = por %p431, %p432
      %s435 = sadd.s32 %s434, 1
      %p438 = scmp.eq.s32.totalorder %s52, 1
      %p439 = scmp.ne.s32.totalorder %s434, %s436
      %p440 = scmp.eq.s32.totalorder %s52, 0
      %p441 = por %p439, %p440
      %p442 = scmp.ne.s32.totalorder %s434, %s436
      %p443 = scmp.eq.s32.totalorder %s57, 1
      %p444 = por %p442, %p443
      %p445 = scmp.ne.s32.totalorder %s436, %s437
      %p446 = scmp.eq.s32.totalorder %s57, 0
      %p447 = por %p445, %p446
      %p448 = scmp.ne.s32.totalorder %s436, %s437
      %p449 = scmp.eq.s32.totalorder %s58, 1
      %p450 = por %p448, %p449
      %p452 = scmp.ne.s32.totalorder %s437, %s451
      %p453 = scmp.eq.s32.totalorder %s58, 0
      %p454 = por %p452, %p453
      %s456 = sadd.s32 %s455, 1
      %p459 = scmp.eq.s32.totalorder %s52, 1
      %p460 = scmp.ne.s32.totalorder %s455, %s457
      %p461 = scmp.eq.s32.totalorder %s52, 0
      %p462 = por %p460, %p461
      %p463 = scmp.ne.s32.totalorder %s455, %s457
      %p464 = scmp.eq.s32.totalorder %s57, 1
      %p465 = por %p463, %p464
      %p466 = scmp.ne.s32.totalorder %s457, %s458
      %p467 = scmp.eq.s32.totalorder %s57, 0
      %p468 = por %p466, %p467
      %p469 = scmp.ne.s32.totalorder %s457, %s458
      %p470 = scmp.eq.s32.totalorder %s58, 1
      %p471 = por %p469, %p470
      %p473 = scmp.ne.s32.totalorder %s458, %s472
      %p474 = scmp.eq.s32.totalorder %s58, 0
      %p475 = por %p473, %p474
      %s477 = sadd.s32 %s476, 1
      %p480 = scmp.eq.s32.totalorder %s52, 1
      %p481 = scmp.ne.s32.totalorder %s476, %s478
      %p482 = scmp.eq.s32.totalorder %s52, 0
      %p483 = por %p481, %p482
      %p484 = scmp.ne.s32.totalorder %s476, %s478
      %p485 = scmp.eq.s32.totalorder %s57, 1
      %p486 = por %p484, %p485
      %p487 = scmp.ne.s32.totalorder %s478, %s479
      %p488 = scmp.eq.s32.totalorder %s57, 0
      %p489 = por %p487, %p488
      %p490 = scmp.ne.s32.totalorder %s478, %s479
      %p491 = scmp.eq.s32.totalorder %s58, 1
      %p492 = por %p490, %p491
      %p494 = scmp.ne.s32.totalorder %s479, %s493
      %p495 = scmp.eq.s32.totalorder %s58, 0
      %p496 = por %p494, %p495
      %s498 = sadd.s32 %s497, 1
      %p501 = scmp.eq.s32.totalorder %s52, 1
      %p502 = scmp.ne.s32.totalorder %s497, %s499
      %p503 = scmp.eq.s32.totalorder %s52, 0
      %p504 = por %p502, %p503
      %p505 = scmp.ne.s32.totalorder %s497, %s499
      %p506 = scmp.eq.s32.totalorder %s57, 1
      %p507 = por %p505, %p506
      %p508 = scmp.ne.s32.totalorder %s499, %s500
      %p509 = scmp.eq.s32.totalorder %s57, 0
      %p510 = por %p508, %p509
      %p511 = scmp.ne.s32.totalorder %s499, %s500
      %p512 = scmp.eq.s32.totalorder %s58, 1
      %p513 = por %p511, %p512
      %p515 = scmp.ne.s32.totalorder %s500, %s514
      %p516 = scmp.eq.s32.totalorder %s58, 0
      %p517 = por %p515, %p516
      %s519 = sadd.s32 %s518, 1
      %p522 = scmp.eq.s32.totalorder %s52, 1
      %p523 = scmp.ne.s32.totalorder %s518, %s520
      %p524 = scmp.eq.s32.totalorder %s52, 0
      %p525 = por %p523, %p524
      %p526 = scmp.ne.s32.totalorder %s518, %s520
      %p527 = scmp.eq.s32.totalorder %s57, 1
      %p528 = por %p526, %p527
      %p529 = scmp.ne.s32.totalorder %s520, %s521
      %p530 = scmp.eq.s32.totalorder %s57, 0
      %p531 = por %p529, %p530
      %p532 = scmp.ne.s32.totalorder %s520, %s521
      %p533 = scmp.eq.s32.totalorder %s58, 1
      %p534 = por %p532, %p533
      %p536 = scmp.ne.s32.totalorder %s521, %s535
      %p537 = scmp.eq.s32.totalorder %s58, 0
      %p538 = por %p536, %p537
      %s540 = sadd.s32 %s539, 1
      %p543 = scmp.eq.s32.totalorder %s52, 1
      %p544 = scmp.ne.s32.totalorder %s539, %s541
      %p545 = scmp.eq.s32.totalorder %s52, 0
      %p546 = por %p544, %p545
      %p547 = scmp.ne.s32.totalorder %s539, %s541
      %p548 = scmp.eq.s32.totalorder %s57, 1
      %p549 = por %p547, %p548
      %p550 = scmp.ne.s32.totalorder %s541, %s542
      %p551 = scmp.eq.s32.totalorder %s57, 0
      %p552 = por %p550, %p551
      %p553 = scmp.ne.s32.totalorder %s541, %s542
      %p554 = scmp.eq.s32.totalorder %s58, 1
      %p555 = por %p553, %p554
      %p557 = scmp.ne.s32.totalorder %s542, %s556
      %p558 = scmp.eq.s32.totalorder %s58, 0
      %p559 = por %p557, %p558
      %s561 = sadd.s32 %s560, 1
      %p564 = scmp.eq.s32.totalorder %s52, 1
      %p565 = scmp.ne.s32.totalorder %s560, %s562
      %p566 = scmp.eq.s32.totalorder %s52, 0
      %p567 = por %p565, %p566
      %p568 = scmp.ne.s32.totalorder %s560, %s562
      %p569 = scmp.eq.s32.totalorder %s57, 1
      %p570 = por %p568, %p569
      %p571 = scmp.ne.s32.totalorder %s562, %s563
      %p572 = scmp.eq.s32.totalorder %s57, 0
      %p573 = por %p571, %p572
      %p574 = scmp.ne.s32.totalorder %s562, %s563
      %p575 = scmp.eq.s32.totalorder %s58, 1
      %p576 = por %p574, %p575
      %p578 = scmp.ne.s32.totalorder %s563, %s577
      %p579 = scmp.eq.s32.totalorder %s58, 0
      %p580 = por %p578, %p579
      %s581 = ssub.s32 %s59, %s71
      %p582 = scmp.eq.s32.totalorder %s581, 0
      %s584 = sadd.s32 %s583, 1
      %s585 = scalar_select %p582, %s583, %s584
      %p588 = pneg %p582
      %p589 = scmp.eq.s32.totalorder %s52, 1
      %p590 = por %p588, %p589
      %p591 = scmp.ne.s32.totalorder %s583, %s586
      %p592 = scmp.eq.s32.totalorder %s52, 0
      %p593 = por %p591, %p592
      %p594 = scmp.ne.s32.totalorder %s583, %s586
      %p595 = scmp.eq.s32.totalorder %s57, 1
      %p596 = por %p594, %p595
      %p597 = scmp.ne.s32.totalorder %s586, %s587
      %p598 = scmp.eq.s32.totalorder %s57, 0
      %p599 = por %p597, %p598
      %p600 = scmp.ne.s32.totalorder %s586, %s587
      %p601 = scmp.eq.s32.totalorder %s58, 1
      %p602 = por %p600, %p601
      %p604 = scmp.ne.s32.totalorder %s587, %s603
      %p605 = scmp.eq.s32.totalorder %s58, 0
      %p606 = por %p604, %p605
      %s607 = ssub.s32 %s59, %s71
      %s608 = ssub.s32 %s60, %s67
      %s609 = sor.u32 %s607, %s608
      %p610 = scmp.eq.s32.totalorder %s609, 0
      %s612 = sadd.s32 %s611, 1
      %s613 = scalar_select %p610, %s611, %s612
      %p616 = pneg %p610
      %p617 = scmp.eq.s32.totalorder %s52, 1
      %p618 = por %p616, %p617
      %p619 = scmp.ne.s32.totalorder %s611, %s614
      %p620 = scmp.eq.s32.totalorder %s52, 0
      %p621 = por %p619, %p620
      %p622 = scmp.ne.s32.totalorder %s611, %s614
      %p623 = scmp.eq.s32.totalorder %s57, 1
      %p624 = por %p622, %p623
      %p625 = scmp.ne.s32.totalorder %s614, %s615
      %p626 = scmp.eq.s32.totalorder %s57, 0
      %p627 = por %p625, %p626
      %p628 = scmp.ne.s32.totalorder %s614, %s615
      %p629 = scmp.eq.s32.totalorder %s58, 1
      %p630 = por %p628, %p629
      %p632 = scmp.ne.s32.totalorder %s615, %s631
      %p633 = scmp.eq.s32.totalorder %s58, 0
      %p634 = por %p632, %p633
      %p635 = scmp.le.s32.totalorder 1, %s52
      %p636 = scmp.lt.s32.totalorder %s52, 3
      %p637 = pnand %p635, %p636
      %p638 = pneg %p637
      // Predicated region
      $region9: #{tpu_custom_call.1} parent=5 // pred_check
        _
      $region10: #{tpu_custom_call.1} parent=5 // pred_check_branch
        %640 = sbr.rel (%p637) target = $region12
      $region11: #{tpu_custom_call.1} parent=5 // pred_region
        %s641 = ssub.s32 %s52, 1
        // Predicated region
        $region13: #{tpu_custom_call.1} parent=11 // pred_check
          %p642 = pneg %p195
        $region14: #{tpu_custom_call.1} parent=11 // pred_check_branch
          %644 = sbr.rel (%p642) target = $region16
        $region15: #{tpu_custom_call.1} parent=11 // pred_region
          %s646 = ssub.s32 512, 512
          %647 = vsyncadd [#allocation12], %s646
          %s648 = sshll.u32 [#allocation13], 4
          %s649 = int_to_ptr.vmem [resolvable:$true] %s648
          %654 = dma.hbm_to_vmem [thread:$0]  %s4, 512, %s649, [#allocation12], 128, 128, 8
        $region16: #{tpu_custom_call.1} parent=11 // pred_fallthru
          _
        // Predicated region
        $region17: #{tpu_custom_call.1} parent=11 // pred_check
          %p655 = pneg %p216
        $region18: #{tpu_custom_call.1} parent=11 // pred_check_branch
          %657 = sbr.rel (%p655) target = $region20
        $region19: #{tpu_custom_call.1} parent=11 // pred_region
          %s659 = ssub.s32 512, 512
          %660 = vsyncadd [#allocation15], %s659
          %s661 = sshll.u32 [#allocation14], 4
          %s662 = int_to_ptr.vmem [resolvable:$true] %s661
          %667 = dma.hbm_to_vmem [thread:$0]  %s5, 512, %s662, [#allocation15], 128, 128, 8
        $region20: #{tpu_custom_call.1} parent=11 // pred_fallthru
          _
        // Predicated region
        $region21: #{tpu_custom_call.1} parent=11 // pred_check
          %p668 = pneg %p237
        $region22: #{tpu_custom_call.1} parent=11 // pred_check_branch
          %670 = sbr.rel (%p668) target = $region24
        $region23: #{tpu_custom_call.1} parent=11 // pred_region
          %s672 = ssub.s32 512, 512
          %673 = vsyncadd [#allocation15], %s672
          %s674 = sshll.u32 [#allocation16], 4
          %s675 = int_to_ptr.vmem [resolvable:$true] %s674
          %680 = dma.hbm_to_vmem [thread:$0]  %s6, 512, %s675, [#allocation15], 128, 128, 8
        $region24: #{tpu_custom_call.1} parent=11 // pred_fallthru
          _
        // Predicated region
        $region25: #{tpu_custom_call.1} parent=11 // pred_check
          %p681 = pneg %p258
        $region26: #{tpu_custom_call.1} parent=11 // pred_check_branch
          %683 = sbr.rel (%p681) target = $region28
        $region27: #{tpu_custom_call.1} parent=11 // pred_region
          %s685 = ssub.s32 16, 16
          %686 = vsyncadd [#allocation18], %s685
          %s688 = sshll.u32 [#allocation17], 4
          %s689 = int_to_ptr.vmem [resolvable:$true] %s688
          %691 = dma.hbm_to_vmem [thread:$0]  %s7, 16, %s689, [#allocation18]
        $region28: #{tpu_custom_call.1} parent=11 // pred_fallthru
          _
        // Predicated region
        $region29: #{tpu_custom_call.1} parent=11 // pred_check
          %p692 = pneg %p279
        $region30: #{tpu_custom_call.1} parent=11 // pred_check_branch
          %694 = sbr.rel (%p692) target = $region32
        $region31: #{tpu_custom_call.1} parent=11 // pred_region
          %s696 = ssub.s32 512, 512
          %697 = vsyncadd [#allocation18], %s696
          %s698 = sshll.u32 [#allocation19], 4
          %s699 = int_to_ptr.vmem [resolvable:$true] %s698
          %704 = dma.hbm_to_vmem [thread:$0]  %s8, 512, %s699, [#allocation18], 128, 128, 8
        $region32: #{tpu_custom_call.1} parent=11 // pred_fallthru
          _
        // Predicated region
        $region33: #{tpu_custom_call.1} parent=11 // pred_check
          %p705 = pneg %p300
        $region34: #{tpu_custom_call.1} parent=11 // pred_check_branch
          %707 = sbr.rel (%p705) target = $region36
        $region35: #{tpu_custom_call.1} parent=11 // pred_region
          %s709 = ssub.s32 16, 16
          %710 = vsyncadd [#allocation21], %s709
          %s712 = sshll.u32 [#allocation20], 4
          %s713 = int_to_ptr.vmem [resolvable:$true] %s712
          %715 = dma.hbm_to_vmem [thread:$0]  %s9, 16, %s713, [#allocation21]
        $region36: #{tpu_custom_call.1} parent=11 // pred_fallthru
          _
        // Predicated region
        $region37: #{tpu_custom_call.1} parent=11 // pred_check
          %p716 = pneg %p321
        $region38: #{tpu_custom_call.1} parent=11 // pred_check_branch
          %718 = sbr.rel (%p716) target = $region40
        $region39: #{tpu_custom_call.1} parent=11 // pred_region
          _
        $region40: #{tpu_custom_call.1} parent=11 // pred_fallthru
          _
        // Predicated region
        $region41: #{tpu_custom_call.1} parent=11 // pred_check
          %p719 = pneg %p342
        $region42: #{tpu_custom_call.1} parent=11 // pred_check_branch
          %721 = sbr.rel (%p719) target = $region44
        $region43: #{tpu_custom_call.1} parent=11 // pred_region
          %s723 = ssub.s32 16, 16
          %724 = vsyncadd [#allocation21], %s723
          %s726 = sshll.u32 [#allocation22], 4
          %s727 = int_to_ptr.vmem [resolvable:$true] %s726
          %729 = dma.hbm_to_vmem [thread:$0]  %s11, 16, %s727, [#allocation21]
        $region44: #{tpu_custom_call.1} parent=11 // pred_fallthru
          _
        // Predicated region
        $region45: #{tpu_custom_call.1} parent=11 // pred_check
          %p730 = pneg %p363
        $region46: #{tpu_custom_call.1} parent=11 // pred_check_branch
          %732 = sbr.rel (%p730) target = $region48
        $region47: #{tpu_custom_call.1} parent=11 // pred_region
          %s734 = ssub.s32 16, 16
          %735 = vsyncadd [#allocation24], %s734
          %s737 = sshll.u32 [#allocation23], 4
          %s738 = int_to_ptr.vmem [resolvable:$true] %s737
          %740 = dma.hbm_to_vmem [thread:$0]  %s12, 16, %s738, [#allocation24]
        $region48: #{tpu_custom_call.1} parent=11 // pred_fallthru
          _
        // Predicated region
        $region49: #{tpu_custom_call.1} parent=11 // pred_check
          %p741 = pneg %p384
        $region50: #{tpu_custom_call.1} parent=11 // pred_check_branch
          %743 = sbr.rel (%p741) target = $region52
        $region51: #{tpu_custom_call.1} parent=11 // pred_region
          %s745 = ssub.s32 16, 16
          %746 = vsyncadd [#allocation24], %s745
          %s748 = sshll.u32 [#allocation25], 4
          %s749 = int_to_ptr.vmem [resolvable:$true] %s748
          %751 = dma.hbm_to_vmem [thread:$0]  %s13, 16, %s749, [#allocation24]
        $region52: #{tpu_custom_call.1} parent=11 // pred_fallthru
          _
        // Predicated region
        $region53: #{tpu_custom_call.1} parent=11 // pred_check
          %p752 = pneg %p405
        $region54: #{tpu_custom_call.1} parent=11 // pred_check_branch
          %754 = sbr.rel (%p752) target = $region56
        $region55: #{tpu_custom_call.1} parent=11 // pred_region
          %s756 = ssub.s32 512, 512
          %757 = vsyncadd [#allocation27], %s756
          %s758 = sshll.u32 [#allocation26], 4
          %s759 = int_to_ptr.vmem [resolvable:$true] %s758
          %764 = dma.hbm_to_vmem [thread:$0]  %s14, 512, %s759, [#allocation27], 128, 128, 8
        $region56: #{tpu_custom_call.1} parent=11 // pred_fallthru
          _
        // Predicated region
        $region57: #{tpu_custom_call.1} parent=11 // pred_check
          %p765 = pneg %p426
        $region58: #{tpu_custom_call.1} parent=11 // pred_check_branch
          %767 = sbr.rel (%p765) target = $region60
        $region59: #{tpu_custom_call.1} parent=11 // pred_region
          %s769 = ssub.s32 512, 512
          %770 = vsyncadd [#allocation27], %s769
          %s771 = sshll.u32 [#allocation28], 4
          %s772 = int_to_ptr.vmem [resolvable:$true] %s771
          %777 = dma.hbm_to_vmem [thread:$0]  %s15, 512, %s772, [#allocation27], 128, 128, 8
        $region60: #{tpu_custom_call.1} parent=11 // pred_fallthru
          _
        // Predicated region
        $region61: #{tpu_custom_call.1} parent=11 // pred_check
          %p778 = pneg %p447
        $region62: #{tpu_custom_call.1} parent=11 // pred_check_branch
          %780 = sbr.rel (%p778) target = $region64
        $region63: #{tpu_custom_call.1} parent=11 // pred_region
          %s782 = ssub.s32 16, 16
          %783 = vsyncadd [#allocation30], %s782
          %s785 = sshll.u32 [#allocation29], 4
          %s786 = int_to_ptr.vmem [resolvable:$true] %s785
          %788 = dma.hbm_to_vmem [thread:$0]  %s16, 16, %s786, [#allocation30]
        $region64: #{tpu_custom_call.1} parent=11 // pred_fallthru
          _
        // Predicated region
        $region65: #{tpu_custom_call.1} parent=11 // pred_check
          %p789 = pneg %p468
        $region66: #{tpu_custom_call.1} parent=11 // pred_check_branch
          %791 = sbr.rel (%p789) target = $region68
        $region67: #{tpu_custom_call.1} parent=11 // pred_region
          _
        $region68: #{tpu_custom_call.1} parent=11 // pred_fallthru
          _
        // Predicated region
        $region69: #{tpu_custom_call.1} parent=11 // pred_check
          %p792 = pneg %p489
        $region70: #{tpu_custom_call.1} parent=11 // pred_check_branch
          %794 = sbr.rel (%p792) target = $region72
        $region71: #{tpu_custom_call.1} parent=11 // pred_region
          _
        $region72: #{tpu_custom_call.1} parent=11 // pred_fallthru
          _
        // Predicated region
        $region73: #{tpu_custom_call.1} parent=11 // pred_check
          %p795 = pneg %p510
        $region74: #{tpu_custom_call.1} parent=11 // pred_check_branch
          %797 = sbr.rel (%p795) target = $region76
        $region75: #{tpu_custom_call.1} parent=11 // pred_region
          %s799 = ssub.s32 512, 512
          %800 = vsyncadd [#allocation30], %s799
          %s801 = sshll.u32 [#allocation31], 4
          %s802 = int_to_ptr.vmem [resolvable:$true] %s801
          %807 = dma.hbm_to_vmem [thread:$0]  %s19, 512, %s802, [#allocation30], 128, 128, 8
        $region76: #{tpu_custom_call.1} parent=11 // pred_fallthru
          _
        // Predicated region
        $region77: #{tpu_custom_call.1} parent=11 // pred_check
          %p808 = pneg %p531
        $region78: #{tpu_custom_call.1} parent=11 // pred_check_branch
          %810 = sbr.rel (%p808) target = $region80
        $region79: #{tpu_custom_call.1} parent=11 // pred_region
          _
        $region80: #{tpu_custom_call.1} parent=11 // pred_fallthru
          _
        // Predicated region
        $region81: #{tpu_custom_call.1} parent=11 // pred_check
          %p811 = pneg %p552
        $region82: #{tpu_custom_call.1} parent=11 // pred_check_branch
          %813 = sbr.rel (%p811) target = $region84
        $region83: #{tpu_custom_call.1} parent=11 // pred_region
          _
        $region84: #{tpu_custom_call.1} parent=11 // pred_fallthru
          _
        // Predicated region
        $region85: #{tpu_custom_call.1} parent=11 // pred_check
          %p814 = pneg %p573
        $region86: #{tpu_custom_call.1} parent=11 // pred_check_branch
          %816 = sbr.rel (%p814) target = $region88
        $region87: #{tpu_custom_call.1} parent=11 // pred_region
          _
        $region88: #{tpu_custom_call.1} parent=11 // pred_fallthru
          _
      $region12: #{tpu_custom_call.1} parent=5 // pred_fallthru
        _
      %p817 = scmp.lt.s32.totalorder %s52, 2
      // Predicated region
      $region89: #{tpu_custom_call.1} parent=5 // pred_check
        %p818 = pneg %p817
      $region90: #{tpu_custom_call.1} parent=5 // pred_check_branch
        %820 = sbr.rel (%p818) target = $region92
      $region91: #{tpu_custom_call.1} parent=5 // pred_region
        // Predicated region
        $region93: #{tpu_custom_call.1} parent=91 // pred_check
          %p821 = pneg %p86
        $region94: #{tpu_custom_call.1} parent=91 // pred_check_branch
          %823 = sbr.rel (%p821) target = $region96
        $region95: #{tpu_custom_call.1} parent=91 // pred_region
          %s824 = sand.u32 %s76, 1
          %s825 = scalar_lea.sflag [#allocation6], %s824
          %s826 = sand.u32 %s76, 1
          %s827 = scalar_lea.vmem [#allocation5], %s826
          %s829 = ssub.s32 16, 16
          %830 = vsyncadd %s825, %s829
          %s831 = sadd.s32 %s60, %s59
          %s832 = smul.addr %s831, 16
          %s833 = scalar_lea.hbm %s0, %s832
          %s835 = sshll.u32 %s827, 4
          %s836 = int_to_ptr.vmem [resolvable:$true] %s835
          %838 = dma.hbm_to_vmem [thread:$0]  %s833, 16, %s836, %s825
        $region96: #{tpu_custom_call.1} parent=91 // pred_fallthru
          _
        // Predicated region
        $region97: #{tpu_custom_call.1} parent=91 // pred_check
          %p839 = pneg %p114
        $region98: #{tpu_custom_call.1} parent=91 // pred_check_branch
          %841 = sbr.rel (%p839) target = $region100
        $region99: #{tpu_custom_call.1} parent=91 // pred_region
          %s842 = sand.u32 %s52, 1
          %s843 = scalar_lea.sflag [#allocation9], %s842
          %s844 = sand.u32 %s104, 1
          %s845 = scalar_lea.vmem [#allocation8], %s844
          %s847 = ssub.s32 16, 16
          %848 = vsyncadd %s843, %s847
          %s849 = sadd.s32 %s60, %s59
          %s850 = smul.addr %s849, 16
          %s851 = scalar_lea.hbm %s1, %s850
          %s853 = sshll.u32 %s845, 4
          %s854 = int_to_ptr.vmem [resolvable:$true] %s853
          %856 = dma.hbm_to_vmem [thread:$0]  %s851, 16, %s854, %s843
        $region100: #{tpu_custom_call.1} parent=91 // pred_fallthru
          _
        // Predicated region
        $region101: #{tpu_custom_call.1} parent=91 // pred_check
          %p857 = pneg %p140
        $region102: #{tpu_custom_call.1} parent=91 // pred_check_branch
          %859 = sbr.rel (%p857) target = $region104
        $region103: #{tpu_custom_call.1} parent=91 // pred_region
          %s860 = sand.u32 %s52, 1
          %s861 = scalar_lea.sflag [#allocation9], %s860
          %s862 = sand.u32 %s130, 1
          %s863 = smul.addr %s862, 16
          %s864 = scalar_lea.vmem [#allocation10], %s863
          %s866 = ssub.s32 256, 256
          %867 = vsyncadd %s861, %s866
          %s868 = smul.addr %s59, 2
          %s869 = smul.addr %s868, 128
          %s870 = scalar_lea.hbm %s2, %s869
          %s871 = sshll.u32 %s864, 4
          %s872 = int_to_ptr.vmem [resolvable:$true] %s871
          %877 = dma.hbm_to_vmem [thread:$0]  %s870, 256, %s872, %s861, 128, 128, 8
        $region104: #{tpu_custom_call.1} parent=91 // pred_fallthru
          _
        // Predicated region
        $region105: #{tpu_custom_call.1} parent=91 // pred_check
          %p878 = pneg %p168
        $region106: #{tpu_custom_call.1} parent=91 // pred_check_branch
          %880 = sbr.rel (%p878) target = $region108
        $region107: #{tpu_custom_call.1} parent=91 // pred_region
          %s881 = sand.u32 %s52, 1
          %s882 = scalar_lea.sflag [#allocation12], %s881
          %s883 = sand.u32 %s158, 1
          %s884 = smul.addr %s883, 32
          %s885 = scalar_lea.vmem [#allocation11], %s884
          %s886 = smul.u32 4, %s60
          %s888 = ssub.s32 512, 512
          %889 = vsyncadd %s882, %s888
          %s890 = smul.addr %s59, 4
          %s891 = sadd.s32 %s886, %s890
          %s892 = smul.addr %s891, 128
          %s893 = scalar_lea.hbm %s3, %s892
          %s894 = sshll.u32 %s885, 4
          %s895 = int_to_ptr.vmem [resolvable:$true] %s894
          %900 = dma.hbm_to_vmem [thread:$0]  %s893, 512, %s895, %s882, 128, 128, 8
        $region108: #{tpu_custom_call.1} parent=91 // pred_fallthru
          _
      $region92: #{tpu_custom_call.1} parent=5 // pred_fallthru
        _
      %p901 = scmp.le.s32.totalorder 1, %s52
      %p902 = scmp.lt.s32.totalorder %s52, 3
      %p903 = pnand %p901, %p902
      %p904 = pneg %p903
      // Predicated region
      $region109: #{tpu_custom_call.1} parent=5 // pred_check
        _
      $region110: #{tpu_custom_call.1} parent=5 // pred_check_branch
        %906 = sbr.rel (%p903) target = $region112
      $region111: #{tpu_custom_call.1} parent=5 // pred_region
        %s907 = ssub.s32 %s52, 1
        %s908 = sand.u32 %s79, 1
        %s909 = scalar_lea.sflag [#allocation6], %s908
        %s910 = sand.u32 %s79, 1
        %s911 = scalar_lea.vmem [#allocation5], %s910
        // Predicated region
        $region113: #{tpu_custom_call.1} parent=111 // pred_check
          %p912 = pneg %p92
        $region114: #{tpu_custom_call.1} parent=111 // pred_check_branch
          %914 = sbr.rel (%p912) target = $region116
        $region115: #{tpu_custom_call.1} parent=111 // pred_region
          %915 = dma.done %s909, 16
        $region116: #{tpu_custom_call.1} parent=111 // pred_fallthru
          _
        %s916 = sand.u32 %s57, 1
        %s917 = scalar_lea.sflag [#allocation9], %s916
        %s918 = sand.u32 %s107, 1
        %s919 = scalar_lea.vmem [#allocation8], %s918
        // Predicated region
        $region117: #{tpu_custom_call.1} parent=111 // pred_check
          %p920 = pneg %p120
        $region118: #{tpu_custom_call.1} parent=111 // pred_check_branch
          %922 = sbr.rel (%p920) target = $region120
        $region119: #{tpu_custom_call.1} parent=111 // pred_region
          %923 = dma.done %s917, 16
        $region120: #{tpu_custom_call.1} parent=111 // pred_fallthru
          _
        %s924 = sand.u32 %s57, 1
        %s925 = scalar_lea.sflag [#allocation9], %s924
        %s926 = sand.u32 %s133, 1
        %s927 = smul.addr %s926, 16
        %s928 = scalar_lea.vmem [#allocation10], %s927
        // Predicated region
        $region121: #{tpu_custom_call.1} parent=111 // pred_check
          %p929 = pneg %p146
        $region122: #{tpu_custom_call.1} parent=111 // pred_check_branch
          %931 = sbr.rel (%p929) target = $region124
        $region123: #{tpu_custom_call.1} parent=111 // pred_region
          %932 = dma.done %s925, 256
        $region124: #{tpu_custom_call.1} parent=111 // pred_fallthru
          _
        %s933 = sand.u32 %s57, 1
        %s934 = scalar_lea.sflag [#allocation12], %s933
        %s935 = sand.u32 %s161, 1
        %s936 = smul.addr %s935, 32
        %s937 = scalar_lea.vmem [#allocation11], %s936
        // Predicated region
        $region125: #{tpu_custom_call.1} parent=111 // pred_check
          %p938 = pneg %p174
        $region126: #{tpu_custom_call.1} parent=111 // pred_check_branch
          %940 = sbr.rel (%p938) target = $region128
        $region127: #{tpu_custom_call.1} parent=111 // pred_region
          %941 = dma.done %s934, 512
        $region128: #{tpu_custom_call.1} parent=111 // pred_fallthru
          _
        // Predicated region
        $region129: #{tpu_custom_call.1} parent=111 // pred_check
          %p942 = pneg %p195
        $region130: #{tpu_custom_call.1} parent=111 // pred_check_branch
          %944 = sbr.rel (%p942) target = $region132
        $region131: #{tpu_custom_call.1} parent=111 // pred_region
          %945 = dma.done [#allocation12], 512
        $region132: #{tpu_custom_call.1} parent=111 // pred_fallthru
          _
        // Predicated region
        $region133: #{tpu_custom_call.1} parent=111 // pred_check
          %p946 = pneg %p216
        $region134: #{tpu_custom_call.1} parent=111 // pred_check_branch
          %948 = sbr.rel (%p946) target = $region136
        $region135: #{tpu_custom_call.1} parent=111 // pred_region
          %949 = dma.done [#allocation15], 512
        $region136: #{tpu_custom_call.1} parent=111 // pred_fallthru
          _
        // Predicated region
        $region137: #{tpu_custom_call.1} parent=111 // pred_check
          %p950 = pneg %p237
        $region138: #{tpu_custom_call.1} parent=111 // pred_check_branch
          %952 = sbr.rel (%p950) target = $region140
        $region139: #{tpu_custom_call.1} parent=111 // pred_region
          %953 = dma.done [#allocation15], 512
        $region140: #{tpu_custom_call.1} parent=111 // pred_fallthru
          _
        // Predicated region
        $region141: #{tpu_custom_call.1} parent=111 // pred_check
          %p954 = pneg %p258
        $region142: #{tpu_custom_call.1} parent=111 // pred_check_branch
          %956 = sbr.rel (%p954) target = $region144
        $region143: #{tpu_custom_call.1} parent=111 // pred_region
          %957 = dma.done [#allocation18], 16
        $region144: #{tpu_custom_call.1} parent=111 // pred_fallthru
          _
        // Predicated region
        $region145: #{tpu_custom_call.1} parent=111 // pred_check
          %p958 = pneg %p279
        $region146: #{tpu_custom_call.1} parent=111 // pred_check_branch
          %960 = sbr.rel (%p958) target = $region148
        $region147: #{tpu_custom_call.1} parent=111 // pred_region
          %961 = dma.done [#allocation18], 512
        $region148: #{tpu_custom_call.1} parent=111 // pred_fallthru
          _
        // Predicated region
        $region149: #{tpu_custom_call.1} parent=111 // pred_check
          %p962 = pneg %p300
        $region150: #{tpu_custom_call.1} parent=111 // pred_check_branch
          %964 = sbr.rel (%p962) target = $region152
        $region151: #{tpu_custom_call.1} parent=111 // pred_region
          %965 = dma.done [#allocation21], 16
        $region152: #{tpu_custom_call.1} parent=111 // pred_fallthru
          _
        // Predicated region
        $region153: #{tpu_custom_call.1} parent=111 // pred_check
          %p966 = pneg %p342
        $region154: #{tpu_custom_call.1} parent=111 // pred_check_branch
          %968 = sbr.rel (%p966) target = $region156
        $region155: #{tpu_custom_call.1} parent=111 // pred_region
          %969 = dma.done [#allocation21], 16
        $region156: #{tpu_custom_call.1} parent=111 // pred_fallthru
          _
        // Predicated region
        $region157: #{tpu_custom_call.1} parent=111 // pred_check
          %p970 = pneg %p363
        $region158: #{tpu_custom_call.1} parent=111 // pred_check_branch
          %972 = sbr.rel (%p970) target = $region160
        $region159: #{tpu_custom_call.1} parent=111 // pred_region
          %973 = dma.done [#allocation24], 16
        $region160: #{tpu_custom_call.1} parent=111 // pred_fallthru
          _
        // Predicated region
        $region161: #{tpu_custom_call.1} parent=111 // pred_check
          %p974 = pneg %p384
        $region162: #{tpu_custom_call.1} parent=111 // pred_check_branch
          %976 = sbr.rel (%p974) target = $region164
        $region163: #{tpu_custom_call.1} parent=111 // pred_region
          %977 = dma.done [#allocation24], 16
        $region164: #{tpu_custom_call.1} parent=111 // pred_fallthru
          _
        // Predicated region
        $region165: #{tpu_custom_call.1} parent=111 // pred_check
          %p978 = pneg %p405
        $region166: #{tpu_custom_call.1} parent=111 // pred_check_branch
          %980 = sbr.rel (%p978) target = $region168
        $region167: #{tpu_custom_call.1} parent=111 // pred_region
          %981 = dma.done [#allocation27], 512
        $region168: #{tpu_custom_call.1} parent=111 // pred_fallthru
          _
        // Predicated region
        $region169: #{tpu_custom_call.1} parent=111 // pred_check
          %p982 = pneg %p426
        $region170: #{tpu_custom_call.1} parent=111 // pred_check_branch
          %984 = sbr.rel (%p982) target = $region172
        $region171: #{tpu_custom_call.1} parent=111 // pred_region
          %985 = dma.done [#allocation27], 512
        $region172: #{tpu_custom_call.1} parent=111 // pred_fallthru
          _
        // Predicated region
        $region173: #{tpu_custom_call.1} parent=111 // pred_check
          %p986 = pneg %p447
        $region174: #{tpu_custom_call.1} parent=111 // pred_check_branch
          %988 = sbr.rel (%p986) target = $region176
        $region175: #{tpu_custom_call.1} parent=111 // pred_region
          %989 = dma.done [#allocation30], 16
        $region176: #{tpu_custom_call.1} parent=111 // pred_fallthru
          _
        // Predicated region
        $region177: #{tpu_custom_call.1} parent=111 // pred_check
          %p990 = pneg %p510
        $region178: #{tpu_custom_call.1} parent=111 // pred_check_branch
          %992 = sbr.rel (%p990) target = $region180
        $region179: #{tpu_custom_call.1} parent=111 // pred_region
          %993 = dma.done [#allocation30], 512
        $region180: #{tpu_custom_call.1} parent=111 // pred_fallthru
          _
        %s994 = sand.u32 %s79, 1
        %s995 = scalar_lea.sflag [#allocation6], %s994
        %s996 = sand.u32 %s79, 1
        %s997 = scalar_lea.vmem [#allocation5], %s996
        %p998 = pneg %p92
        %p999 = pneg %p89
        %s1000 = sand.u32 %s57, 1
        %s1001 = scalar_lea.sflag [#allocation9], %s1000
        %s1002 = sand.u32 %s107, 1
        %s1003 = scalar_lea.vmem [#allocation8], %s1002
        %p1004 = pneg %p120
        %p1005 = pneg %p117
        %s1006 = sand.u32 %s57, 1
        %s1007 = scalar_lea.sflag [#allocation9], %s1006
        %s1008 = sand.u32 %s133, 1
        %s1009 = smul.addr %s1008, 16
        %s1010 = scalar_lea.vmem [#allocation10], %s1009
        %p1011 = pneg %p146
        %p1012 = pneg %p143
        %s1013 = sand.u32 %s57, 1
        %s1014 = scalar_lea.sflag [#allocation12], %s1013
        %s1015 = sand.u32 %s161, 1
        %s1016 = smul.addr %s1015, 32
        %s1017 = scalar_lea.vmem [#allocation11], %s1016
        %p1018 = pneg %p174
        %p1019 = pneg %p171
        %p1020 = pneg %p195
        %p1021 = pneg %p192
        %p1022 = pneg %p216
        %p1023 = pneg %p213
        %p1024 = pneg %p237
        %p1025 = pneg %p234
        %p1026 = pneg %p258
        %p1027 = pneg %p255
        %p1028 = pneg %p279
        %p1029 = pneg %p276
        %p1030 = pneg %p300
        %p1031 = pneg %p297
        %p1032 = pneg %p321
        %p1033 = pneg %p318
        %p1034 = pneg %p342
        %p1035 = pneg %p339
        %p1036 = pneg %p363
        %p1037 = pneg %p360
        %p1038 = pneg %p384
        %p1039 = pneg %p381
        %p1040 = pneg %p405
        %p1041 = pneg %p402
        %p1042 = pneg %p426
        %p1043 = pneg %p423
        %p1044 = pneg %p447
        %p1045 = pneg %p444
        %p1046 = pneg %p468
        %p1047 = pneg %p465
        %p1048 = pneg %p489
        %p1049 = pneg %p486
        %p1050 = pneg %p510
        %p1051 = pneg %p507
        %p1052 = pneg %p531
        %p1053 = pneg %p528
        %p1054 = pneg %p552
        %p1055 = pneg %p549
        %p1056 = pneg %p573
        %p1057 = pneg %p570
        %p1058 = pneg %p599
        %p1059 = pneg %p596
        %s1060 = sand.u32 %s586, 1
        %s1061 = scalar_lea.sflag [#allocation7], %s1060
        %s1062 = sand.u32 %s586, 1
        %s1063 = smul.addr %s1062, 16
        %s1064 = scalar_lea.vmem [#allocation32], %s1063
        %p1065 = pneg %p627
        %p1066 = pneg %p624
        %s1067 = sand.u32 %s614, 1
        %s1068 = scalar_lea.sflag [#allocation34], %s1067
        %s1069 = sand.u32 %s614, 1
        %s1070 = smul.addr %s1069, 32
        %s1071 = scalar_lea.vmem [#allocation33], %s1070
        %s1072 = smul.u32 4, %s62
        %s1073 = smul.u32 4, %s62
        %v1074 = vld [vmem:[%s928] sm:$0xff]
        %v1075 = vld [vmem:[%s928 + $0x8] sm:$0xff]
        %p1076 = scmp.eq.s32.totalorder %s62, 0
        // Predicated region
        $region181: #{tpu_custom_call.1} parent=111 // pred_check
          %p1077 = pneg %p1076
        $region182: #{tpu_custom_call.1} parent=111 // pred_check_branch
          %1079 = sbr.rel (%p1077) target = $region184
        $region183: #{tpu_custom_call.1} parent=111 // pred_region
          %vm1080 = vcmask 261120
          %1081 = vst.msk [vmem:[#allocation2] sm:$0xff] %vm1080, 0.0
          %1082 = vst.msk [vmem:[#allocation2 + $0x8] sm:$0xff] %vm1080, 0.0
          %v1083 = vld [vmem:[#allocation13] sm:$0xff]
          %v1084 = vld [vmem:[#allocation13 + $0x8] sm:$0xff]
          %v1085 = vld [vmem:[#allocation13 + $0x10] sm:$0xff]
          %v1086 = vld [vmem:[#allocation13 + $0x18] sm:$0xff]
          %v1088 = vsel %vm1080, %v1074, 0
          %v1091 = vsel %vm1080, %v1075, 0
          %1093 = vmatprep.subr.mxu0 0.0
          %1094 = vmatpush1.msra.mxu0 %v1083
          %1095 = vmatprep.subr.mxu0 0.0
          %1096 = vmatpush1.msra.mxu0 %v1084
          %1097 = vmatprep.subr.mxu0 0.0
          %1098 = vmatpush1.msra.mxu0 %v1085
          %1099 = vmatprep.subr.mxu0 0.0
          %1100 = vmatpush1.msra.mxu0 %v1086
          %1101 = vmatprep.subr.mxu0 0.0
          %1102 = vmatpush1.msra.mxu0 0.0
          %1103 = vmatprep.subr.mxu0 0.0
          %1104 = vmatpush1.msra.mxu0 0.0
          %1105 = vmatprep.subr.mxu0 0.0
          %1106 = vmatpush1.msra.mxu0 0.0
          %1107 = vmatprep.subr.mxu0 0.0
          %1108 = vmatpush1.msra.mxu0 0.0
          %1109 = vmatprep.subr.mxu0 0.0
          %1110 = vmatpush1.msra.mxu0 0.0
          %1111 = vmatprep.subr.mxu0 0.0
          %1112 = vmatpush1.msra.mxu0 0.0
          %1113 = vmatprep.subr.mxu0 0.0
          %1114 = vmatpush1.msra.mxu0 0.0
          %1115 = vmatprep.subr.mxu0 0.0
          %1116 = vmatpush1.msra.mxu0 0.0
          %1117 = vmatprep.subr.mxu0 0.0
          %1118 = vmatpush1.msra.mxu0 0.0
          %1119 = vmatprep.subr.mxu0 0.0
          %1120 = vmatpush1.msra.mxu0 0.0
          %1121 = vmatprep.subr.mxu0 0.0
          %1122 = vmatpush1.msra.mxu0 0.0
          %1123 = vmatprep.subr.mxu0 0.0
          %1124 = vmatpush1.msra.mxu0 0.0
          %1125 = vmatprep.subr.mxu0 0.0
          %1126 = vmatpush1.msra.mxu0 0.0
          %1127 = vmatprep.subr.mxu0 0.0
          %1128 = vmatpush1.msra.mxu0 0.0
          %1129 = vmatprep.subr.mxu0 0.0
          %1130 = vmatpush1.msra.mxu0 0.0
          %1131 = vmatprep.subr.mxu0 0.0
          %1132 = vmatpush1.msra.mxu0 0.0
          %1133 = vmatprep.subr.mxu0 0.0
          %1134 = vmatpush1.msra.mxu0 0.0
          %1135 = vmatprep.subr.mxu0 0.0
          %1136 = vmatpush1.msra.mxu0 0.0
          %1137 = vmatprep.subr.mxu0 0.0
          %1138 = vmatpush1.msra.mxu0 0.0
          %1139 = vmatprep.subr.mxu0 0.0
          %1140 = vmatpush1.msra.mxu0 0.0
          %1141 = vmatprep.subr.mxu0 0.0
          %1142 = vmatpush1.msra.mxu0 0.0
          %1143 = vmatprep.subr.mxu0 0.0
          %1144 = vmatpush1.msra.mxu0 0.0
          %1145 = vmatprep.subr.mxu0 0.0
          %1146 = vmatpush1.msra.mxu0 0.0
          %1147 = vmatprep.subr.mxu0 0.0
          %1148 = vmatpush1.msra.mxu0 0.0
          %1149 = vmatprep.subr.mxu0 0.0
          %1150 = vmatpush1.msra.mxu0 0.0
          %1151 = vmatprep.subr.mxu0 0.0
          %1152 = vmatpush1.msra.mxu0 0.0
          %1153 = vmatprep.subr.mxu0 0.0
          %1154 = vmatpush1.msra.mxu0 0.0
          %1155 = vmatprep.subr.mxu0 0.0
          %1156 = vmatpush1.msra.mxu0 0.0
          %1157 = vmatprep.mubr.f32.mxu0 0.0
          %1158 = vmatmul.mubr.f32.gmra.mrb[0].mxu0 %v1088
          %v1159 = vpop.f32.mrb[0].mxu0
          %v1160 = vadd.f32 0.0, %v1159
          %v1161 = vpop.f32.mrb[0].mxu0
          %1162 = vmatprep.mubr.f32.mxu0 0.0
          %1163 = vmatmul.mubr.f32.gmra.mrb[0].mxu0 %v1091
          %v1164 = vpop.f32.mrb[0].mxu0
          %v1165 = vadd.f32 0.0, %v1164
          %v1166 = vpop.f32.mrb[0].mxu0
          %1167 = vdwg.mxu0
          %1168 = vst.msk [vmem:[#allocation3] sm:$0xff] %vm1080, %v1160
          %1169 = vst.msk [vmem:[#allocation3 + $0x8] sm:$0xff] %vm1080, %v1165
          %v1170 = vld [vmem:[#allocation14] sm:$0xff]
          %v1171 = vld [vmem:[#allocation14 + $0x8] sm:$0xff]
          %v1172 = vld [vmem:[#allocation14 + $0x10] sm:$0xff]
          %v1173 = vld [vmem:[#allocation14 + $0x18] sm:$0xff]
          %1174 = vmatprep.subr.mxu0 0.0
          %1175 = vmatpush1.msra.mxu0 %v1170
          %1176 = vmatprep.subr.mxu0 0.0
          %1177 = vmatpush1.msra.mxu0 %v1171
          %1178 = vmatprep.subr.mxu0 0.0
          %1179 = vmatpush1.msra.mxu0 %v1172
          %1180 = vmatprep.subr.mxu0 0.0
          %1181 = vmatpush1.msra.mxu0 %v1173
          %1182 = vmatprep.subr.mxu0 0.0
          %1183 = vmatpush1.msra.mxu0 0.0
          %1184 = vmatprep.subr.mxu0 0.0
          %1185 = vmatpush1.msra.mxu0 0.0
          %1186 = vmatprep.subr.mxu0 0.0
          %1187 = vmatpush1.msra.mxu0 0.0
          %1188 = vmatprep.subr.mxu0 0.0
          %1189 = vmatpush1.msra.mxu0 0.0
          %1190 = vmatprep.subr.mxu0 0.0
          %1191 = vmatpush1.msra.mxu0 0.0
          %1192 = vmatprep.subr.mxu0 0.0
          %1193 = vmatpush1.msra.mxu0 0.0
          %1194 = vmatprep.subr.mxu0 0.0
          %1195 = vmatpush1.msra.mxu0 0.0
          %1196 = vmatprep.subr.mxu0 0.0
          %1197 = vmatpush1.msra.mxu0 0.0
          %1198 = vmatprep.subr.mxu0 0.0
          %1199 = vmatpush1.msra.mxu0 0.0
          %1200 = vmatprep.subr.mxu0 0.0
          %1201 = vmatpush1.msra.mxu0 0.0
          %1202 = vmatprep.subr.mxu0 0.0
          %1203 = vmatpush1.msra.mxu0 0.0
          %1204 = vmatprep.subr.mxu0 0.0
          %1205 = vmatpush1.msra.mxu0 0.0
          %1206 = vmatprep.subr.mxu0 0.0
          %1207 = vmatpush1.msra.mxu0 0.0
          %1208 = vmatprep.subr.mxu0 0.0
          %1209 = vmatpush1.msra.mxu0 0.0
          %1210 = vmatprep.subr.mxu0 0.0
          %1211 = vmatpush1.msra.mxu0 0.0
          %1212 = vmatprep.subr.mxu0 0.0
          %1213 = vmatpush1.msra.mxu0 0.0
          %1214 = vmatprep.subr.mxu0 0.0
          %1215 = vmatpush1.msra.mxu0 0.0
          %1216 = vmatprep.subr.mxu0 0.0
          %1217 = vmatpush1.msra.mxu0 0.0
          %1218 = vmatprep.subr.mxu0 0.0
          %1219 = vmatpush1.msra.mxu0 0.0
          %1220 = vmatprep.subr.mxu0 0.0
          %1221 = vmatpush1.msra.mxu0 0.0
          %1222 = vmatprep.subr.mxu0 0.0
          %1223 = vmatpush1.msra.mxu0 0.0
          %1224 = vmatprep.subr.mxu0 0.0
          %1225 = vmatpush1.msra.mxu0 0.0
          %1226 = vmatprep.subr.mxu0 0.0
          %1227 = vmatpush1.msra.mxu0 0.0
          %1228 = vmatprep.subr.mxu0 0.0
          %1229 = vmatpush1.msra.mxu0 0.0
          %1230 = vmatprep.subr.mxu0 0.0
          %1231 = vmatpush1.msra.mxu0 0.0
          %1232 = vmatprep.subr.mxu0 0.0
          %1233 = vmatpush1.msra.mxu0 0.0
          %1234 = vmatprep.subr.mxu0 0.0
          %1235 = vmatpush1.msra.mxu0 0.0
          %1236 = vmatprep.subr.mxu0 0.0
          %1237 = vmatpush1.msra.mxu0 0.0
          %1238 = vmatprep.mubr.f32.mxu0 0.0
          %1239 = vmatmul.mubr.f32.gmra.mrb[0].mxu0 %v1088
          %v1240 = vpop.f32.mrb[0].mxu0
          %v1241 = vadd.f32 0.0, %v1240
          %v1242 = vpop.f32.mrb[0].mxu0
          %1243 = vmatprep.mubr.f32.mxu0 0.0
          %1244 = vmatmul.mubr.f32.gmra.mrb[0].mxu0 %v1091
          %v1245 = vpop.f32.mrb[0].mxu0
          %v1246 = vadd.f32 0.0, %v1245
          %v1247 = vpop.f32.mrb[0].mxu0
          %1248 = vdwg.mxu0
          %1249 = vst.msk [vmem:[#allocation4] sm:$0xff] %vm1080, %v1241
          %1250 = vst.msk [vmem:[#allocation4 + $0x8] sm:$0xff] %vm1080, %v1246
        $region184: #{tpu_custom_call.1} parent=111 // pred_fallthru
          _
        %v1251 = vld [vmem:[%s911] sm:$0x1]
        %v1252 = vld [vmem:[%s919] sm:$0x1]
        %v1253 = vld [vmem:[%s937] sm:$0xff]
        %v1254 = vld [vmem:[%s937 + $0x8] sm:$0xff]
        %v1255 = vld [vmem:[%s937 + $0x10] sm:$0xff]
        %v1256 = vld [vmem:[%s937 + $0x18] sm:$0xff]
        %v1257 = vlaneseq
        %v1258 = vshrl.u32 %v1257, 7
        %v1259 = vadd.s32 %v1258, 8
        %v1260 = vlaneseq
        %v1261 = vshrl.u32 %v1260, 7
        %v1262 = vsub.s32 0, %v1261
        %v1263 = vrot.slane %v1251, %v1262
        %vm1264 = vcmp.eq.s32.totalorder %v1258, %v1263
        %vm1265 = vcmp.eq.s32.totalorder %v1259, %v1263
        %v1266 = vsel %vm1264, 1, 0
        %v1267 = vsel %vm1265, 1, 0
        %v1268 = vcvt.s32.f32 %v1266
        %v1269 = vcvt.s32.f32 %v1267
        %v1270 = vlaneseq
        %v1271 = vshrl.u32 %v1270, 7
        %v1272 = vsub.s32 0, %v1271
        %v1273 = vrot.slane %v1252, %v1272
        %vm1274 = vcmp.eq.s32.totalorder %v1258, %v1273
        %vm1275 = vcmp.eq.s32.totalorder %v1259, %v1273
        %v1276 = vsel %vm1274, 1, 0
        %v1277 = vsel %vm1275, 1, 0
        %v1278 = vcvt.s32.f32 %v1276
        %v1279 = vcvt.s32.f32 %v1277
        %v1280 = vld [vmem:[#allocation3] sm:$0xff]
        %v1281 = vld [vmem:[#allocation3 + $0x8] sm:$0xff]
        %v1282 = vld [vmem:[#allocation4] sm:$0xff]
        %v1283 = vld [vmem:[#allocation4 + $0x8] sm:$0xff]
        %1284 = vxpose.xlu0.b32.start [1/16] %v1278, 128
        %1285 = vxpose.xlu0.b32.cont [2/16] %v1279, 128
        %1286 = vxpose.xlu0.b32.cont [3/16] 0.0, 128
        %1287 = vxpose.xlu0.b32.cont [4/16] 0.0, 128
        %1288 = vxpose.xlu0.b32.cont [5/16] 0.0, 128
        %1289 = vxpose.xlu0.b32.cont [6/16] 0.0, 128
        %1290 = vxpose.xlu0.b32.cont [7/16] 0.0, 128
        %1291 = vxpose.xlu0.b32.cont [8/16] 0.0, 128
        %1292 = vxpose.xlu0.b32.cont [9/16] 0.0, 128
        %1293 = vxpose.xlu0.b32.cont [10/16] 0.0, 128
        %1294 = vxpose.xlu0.b32.cont [11/16] 0.0, 128
        %1295 = vxpose.xlu0.b32.cont [12/16] 0.0, 128
        %1296 = vxpose.xlu0.b32.cont [13/16] 0.0, 128
        %1297 = vxpose.xlu0.b32.cont [14/16] 0.0, 128
        %1298 = vxpose.xlu0.b32.cont [15/16] 0.0, 128
        %1299 = vxpose.xlu0.b32.end [16/16] 0.0, 128
        %v1300 = vpop.trf.xlu0
        %v1301 = vpop.trf.xlu0
        %v1302 = vpop.trf.xlu0
        %v1303 = vpop.trf.xlu0
        %v1304 = vpop.trf.xlu0
        %v1305 = vpop.trf.xlu0
        %v1306 = vpop.trf.xlu0
        %v1307 = vpop.trf.xlu0
        %v1308 = vpop.trf.xlu0
        %v1309 = vpop.trf.xlu0
        %v1310 = vpop.trf.xlu0
        %v1311 = vpop.trf.xlu0
        %v1312 = vpop.trf.xlu0
        %v1313 = vpop.trf.xlu0
        %v1314 = vpop.trf.xlu0
        %v1315 = vpop.trf.xlu0
        %vm1316 = vcmask 130048
        %v1318 = vsel %vm1316, %v1300, 0
        %v1321 = vsel %vm1316, %v1301, 0
        %v1324 = vsel %vm1316, %v1302, 0
        %v1327 = vsel %vm1316, %v1303, 0
        %1329 = vmatprep.subr.mxu0 0.0
        %1330 = vmatpush1.msra.mxu0 %v1282
        %1331 = vmatprep.subr.mxu0 0.0
        %1332 = vmatpush1.msra.mxu0 %v1283
        %1333 = vmatprep.subr.mxu0 0.0
        %1334 = vmatpush1.msra.mxu0 0.0
        %1335 = vmatprep.subr.mxu0 0.0
        %1336 = vmatpush1.msra.mxu0 0.0
        %1337 = vmatprep.subr.mxu0 0.0
        %1338 = vmatpush1.msra.mxu0 0.0
        %1339 = vmatprep.subr.mxu0 0.0
        %1340 = vmatpush1.msra.mxu0 0.0
        %1341 = vmatprep.subr.mxu0 0.0
        %1342 = vmatpush1.msra.mxu0 0.0
        %1343 = vmatprep.subr.mxu0 0.0
        %1344 = vmatpush1.msra.mxu0 0.0
        %1345 = vmatprep.subr.mxu0 0.0
        %1346 = vmatpush1.msra.mxu0 0.0
        %1347 = vmatprep.subr.mxu0 0.0
        %1348 = vmatpush1.msra.mxu0 0.0
        %1349 = vmatprep.subr.mxu0 0.0
        %1350 = vmatpush1.msra.mxu0 0.0
        %1351 = vmatprep.subr.mxu0 0.0
        %1352 = vmatpush1.msra.mxu0 0.0
        %1353 = vmatprep.subr.mxu0 0.0
        %1354 = vmatpush1.msra.mxu0 0.0
        %1355 = vmatprep.subr.mxu0 0.0
        %1356 = vmatpush1.msra.mxu0 0.0
        %1357 = vmatprep.subr.mxu0 0.0
        %1358 = vmatpush1.msra.mxu0 0.0
        %1359 = vmatprep.subr.mxu0 0.0
        %1360 = vmatpush1.msra.mxu0 0.0
        %1361 = vmatprep.subr.mxu0 0.0
        %1362 = vmatpush1.msra.mxu0 0.0
        %1363 = vmatprep.subr.mxu0 0.0
        %1364 = vmatpush1.msra.mxu0 0.0
        %1365 = vmatprep.subr.mxu0 0.0
        %1366 = vmatpush1.msra.mxu0 0.0
        %1367 = vmatprep.subr.mxu0 0.0
        %1368 = vmatpush1.msra.mxu0 0.0
        %1369 = vmatprep.subr.mxu0 0.0
        %1370 = vmatpush1.msra.mxu0 0.0
        %1371 = vmatprep.subr.mxu0 0.0
        %1372 = vmatpush1.msra.mxu0 0.0
        %1373 = vmatprep.subr.mxu0 0.0
        %1374 = vmatpush1.msra.mxu0 0.0
        %1375 = vmatprep.subr.mxu0 0.0
        %1376 = vmatpush1.msra.mxu0 0.0
        %1377 = vmatprep.subr.mxu0 0.0
        %1378 = vmatpush1.msra.mxu0 0.0
        %1379 = vmatprep.subr.mxu0 0.0
        %1380 = vmatpush1.msra.mxu0 0.0
        %1381 = vmatprep.subr.mxu0 0.0
        %1382 = vmatpush1.msra.mxu0 0.0
        %1383 = vmatprep.subr.mxu0 0.0
        %1384 = vmatpush1.msra.mxu0 0.0
        %1385 = vmatprep.subr.mxu0 0.0
        %1386 = vmatpush1.msra.mxu0 0.0
        %1387 = vmatprep.subr.mxu0 0.0
        %1388 = vmatpush1.msra.mxu0 0.0
        %1389 = vmatprep.subr.mxu0 0.0
        %1390 = vmatpush1.msra.mxu0 0.0
        %1391 = vmatprep.subr.mxu0 0.0
        %1392 = vmatpush1.msra.mxu0 0.0
        %1393 = vmatprep.mubr.f32.mxu0 0.0
        %1394 = vmatmul.mubr.f32.gmra.mrb[0].mxu0 %v1318
        %v1395 = vpop.f32.mrb[0].mxu0
        %v1396 = vadd.f32 0.0, %v1395
        %v1397 = vpop.f32.mrb[0].mxu0
        %1398 = vmatprep.mubr.f32.mxu0 0.0
        %1399 = vmatmul.mubr.f32.gmra.mrb[0].mxu0 %v1321
        %v1400 = vpop.f32.mrb[0].mxu0
        %v1401 = vadd.f32 0.0, %v1400
        %v1402 = vpop.f32.mrb[0].mxu0
        %1403 = vmatprep.mubr.f32.mxu0 0.0
        %1404 = vmatmul.mubr.f32.gmra.mrb[0].mxu0 %v1324
        %v1405 = vpop.f32.mrb[0].mxu0
        %v1406 = vadd.f32 0.0, %v1405
        %v1407 = vpop.f32.mrb[0].mxu0
        %1408 = vmatprep.mubr.f32.mxu0 0.0
        %1409 = vmatmul.mubr.f32.gmra.mrb[0].mxu0 %v1327
        %v1410 = vpop.f32.mrb[0].mxu0
        %v1411 = vadd.f32 0.0, %v1410
        %v1412 = vpop.f32.mrb[0].mxu0
        %1413 = vdwg.mxu0
        %1414 = vxpose.xlu0.b32.start [1/16] %v1268, 128
        %1415 = vxpose.xlu0.b32.cont [2/16] %v1269, 128
        %1416 = vxpose.xlu0.b32.cont [3/16] 0.0, 128
        %1417 = vxpose.xlu0.b32.cont [4/16] 0.0, 128
        %1418 = vxpose.xlu0.b32.cont [5/16] 0.0, 128
        %1419 = vxpose.xlu0.b32.cont [6/16] 0.0, 128
        %1420 = vxpose.xlu0.b32.cont [7/16] 0.0, 128
        %1421 = vxpose.xlu0.b32.cont [8/16] 0.0, 128
        %1422 = vxpose.xlu0.b32.cont [9/16] 0.0, 128
        %1423 = vxpose.xlu0.b32.cont [10/16] 0.0, 128
        %1424 = vxpose.xlu0.b32.cont [11/16] 0.0, 128
        %1425 = vxpose.xlu0.b32.cont [12/16] 0.0, 128
        %1426 = vxpose.xlu0.b32.cont [13/16] 0.0, 128
        %1427 = vxpose.xlu0.b32.cont [14/16] 0.0, 128
        %1428 = vxpose.xlu0.b32.cont [15/16] 0.0, 128
        %1429 = vxpose.xlu0.b32.end [16/16] 0.0, 128
        %v1430 = vpop.trf.xlu0
        %v1431 = vpop.trf.xlu0
        %v1432 = vpop.trf.xlu0
        %v1433 = vpop.trf.xlu0
        %v1434 = vpop.trf.xlu0
        %v1435 = vpop.trf.xlu0
        %v1436 = vpop.trf.xlu0
        %v1437 = vpop.trf.xlu0
        %v1438 = vpop.trf.xlu0
        %v1439 = vpop.trf.xlu0
        %v1440 = vpop.trf.xlu0
        %v1441 = vpop.trf.xlu0
        %v1442 = vpop.trf.xlu0
        %v1443 = vpop.trf.xlu0
        %v1444 = vpop.trf.xlu0
        %v1445 = vpop.trf.xlu0
        %v1447 = vsel %vm1316, %v1430, 0
        %v1450 = vsel %vm1316, %v1431, 0
        %v1453 = vsel %vm1316, %v1432, 0
        %v1456 = vsel %vm1316, %v1433, 0
        %1458 = vmatprep.subr.mxu0 0.0
        %1459 = vmatpush1.msra.mxu0 %v1280
        %1460 = vmatprep.subr.mxu0 0.0
        %1461 = vmatpush1.msra.mxu0 %v1281
        %1462 = vmatprep.subr.mxu0 0.0
        %1463 = vmatpush1.msra.mxu0 0.0
        %1464 = vmatprep.subr.mxu0 0.0
        %1465 = vmatpush1.msra.mxu0 0.0
        %1466 = vmatprep.subr.mxu0 0.0
        %1467 = vmatpush1.msra.mxu0 0.0
        %1468 = vmatprep.subr.mxu0 0.0
        %1469 = vmatpush1.msra.mxu0 0.0
        %1470 = vmatprep.subr.mxu0 0.0
        %1471 = vmatpush1.msra.mxu0 0.0
        %1472 = vmatprep.subr.mxu0 0.0
        %1473 = vmatpush1.msra.mxu0 0.0
        %1474 = vmatprep.subr.mxu0 0.0
        %1475 = vmatpush1.msra.mxu0 0.0
        %1476 = vmatprep.subr.mxu0 0.0
        %1477 = vmatpush1.msra.mxu0 0.0
        %1478 = vmatprep.subr.mxu0 0.0
        %1479 = vmatpush1.msra.mxu0 0.0
        %1480 = vmatprep.subr.mxu0 0.0
        %1481 = vmatpush1.msra.mxu0 0.0
        %1482 = vmatprep.subr.mxu0 0.0
        %1483 = vmatpush1.msra.mxu0 0.0
        %1484 = vmatprep.subr.mxu0 0.0
        %1485 = vmatpush1.msra.mxu0 0.0
        %1486 = vmatprep.subr.mxu0 0.0
        %1487 = vmatpush1.msra.mxu0 0.0
        %1488 = vmatprep.subr.mxu0 0.0
        %1489 = vmatpush1.msra.mxu0 0.0
        %1490 = vmatprep.subr.mxu0 0.0
        %1491 = vmatpush1.msra.mxu0 0.0
        %1492 = vmatprep.subr.mxu0 0.0
        %1493 = vmatpush1.msra.mxu0 0.0
        %1494 = vmatprep.subr.mxu0 0.0
        %1495 = vmatpush1.msra.mxu0 0.0
        %1496 = vmatprep.subr.mxu0 0.0
        %1497 = vmatpush1.msra.mxu0 0.0
        %1498 = vmatprep.subr.mxu0 0.0
        %1499 = vmatpush1.msra.mxu0 0.0
        %1500 = vmatprep.subr.mxu0 0.0
        %1501 = vmatpush1.msra.mxu0 0.0
        %1502 = vmatprep.subr.mxu0 0.0
        %1503 = vmatpush1.msra.mxu0 0.0
        %1504 = vmatprep.subr.mxu0 0.0
        %1505 = vmatpush1.msra.mxu0 0.0
        %1506 = vmatprep.subr.mxu0 0.0
        %1507 = vmatpush1.msra.mxu0 0.0
        %1508 = vmatprep.subr.mxu0 0.0
        %1509 = vmatpush1.msra.mxu0 0.0
        %1510 = vmatprep.subr.mxu0 0.0
        %1511 = vmatpush1.msra.mxu0 0.0
        %1512 = vmatprep.subr.mxu0 0.0
        %1513 = vmatpush1.msra.mxu0 0.0
        %1514 = vmatprep.subr.mxu0 0.0
        %1515 = vmatpush1.msra.mxu0 0.0
        %1516 = vmatprep.subr.mxu0 0.0
        %1517 = vmatpush1.msra.mxu0 0.0
        %1518 = vmatprep.subr.mxu0 0.0
        %1519 = vmatpush1.msra.mxu0 0.0
        %1520 = vmatprep.subr.mxu0 0.0
        %1521 = vmatpush1.msra.mxu0 0.0
        %1522 = vmatprep.mubr.f32.mxu0 0.0
        %1523 = vmatmul.mubr.f32.gmra.mrb[0].mxu0 %v1447
        %v1524 = vpop.f32.mrb[0].mxu0
        %v1525 = vadd.f32 %v1396, %v1524
        %v1526 = vpop.f32.mrb[0].mxu0
        %1527 = vmatprep.mubr.f32.mxu0 0.0
        %1528 = vmatmul.mubr.f32.gmra.mrb[0].mxu0 %v1450
        %v1529 = vpop.f32.mrb[0].mxu0
        %v1530 = vadd.f32 %v1401, %v1529
        %v1531 = vpop.f32.mrb[0].mxu0
        %1532 = vmatprep.mubr.f32.mxu0 0.0
        %1533 = vmatmul.mubr.f32.gmra.mrb[0].mxu0 %v1453
        %v1534 = vpop.f32.mrb[0].mxu0
        %v1535 = vadd.f32 %v1406, %v1534
        %v1536 = vpop.f32.mrb[0].mxu0
        %1537 = vmatprep.mubr.f32.mxu0 0.0
        %1538 = vmatmul.mubr.f32.gmra.mrb[0].mxu0 %v1456
        %v1539 = vpop.f32.mrb[0].mxu0
        %v1540 = vadd.f32 %v1411, %v1539
        %v1541 = vpop.f32.mrb[0].mxu0
        %1542 = vdwg.mxu0
        %v1543 = vld [vmem:[#allocation16] sm:$0xff]
        %v1544 = vld [vmem:[#allocation16 + $0x8] sm:$0xff]
        %v1545 = vld [vmem:[#allocation16 + $0x10] sm:$0xff]
        %v1546 = vld [vmem:[#allocation16 + $0x18] sm:$0xff]
        %vm1547 = vcmask 261120
        %v1549 = vsel %vm1547, %v1253, 0
        %v1552 = vsel %vm1547, %v1254, 0
        %v1555 = vsel %vm1547, %v1255, 0
        %v1558 = vsel %vm1547, %v1256, 0
        %1560 = vmatprep.subr.mxu0 0.0
        %1561 = vmatpush1.msra.mxu0 %v1543
        %1562 = vmatprep.subr.mxu0 0.0
        %1563 = vmatpush1.msra.mxu0 %v1544
        %1564 = vmatprep.subr.mxu0 0.0
        %1565 = vmatpush1.msra.mxu0 %v1545
        %1566 = vmatprep.subr.mxu0 0.0
        %1567 = vmatpush1.msra.mxu0 %v1546
        %1568 = vmatprep.subr.mxu0 0.0
        %1569 = vmatpush1.msra.mxu0 0.0
        %1570 = vmatprep.subr.mxu0 0.0
        %1571 = vmatpush1.msra.mxu0 0.0
        %1572 = vmatprep.subr.mxu0 0.0
        %1573 = vmatpush1.msra.mxu0 0.0
        %1574 = vmatprep.subr.mxu0 0.0
        %1575 = vmatpush1.msra.mxu0 0.0
        %1576 = vmatprep.subr.mxu0 0.0
        %1577 = vmatpush1.msra.mxu0 0.0
        %1578 = vmatprep.subr.mxu0 0.0
        %1579 = vmatpush1.msra.mxu0 0.0
        %1580 = vmatprep.subr.mxu0 0.0
        %1581 = vmatpush1.msra.mxu0 0.0
        %1582 = vmatprep.subr.mxu0 0.0
        %1583 = vmatpush1.msra.mxu0 0.0
        %1584 = vmatprep.subr.mxu0 0.0
        %1585 = vmatpush1.msra.mxu0 0.0
        %1586 = vmatprep.subr.mxu0 0.0
        %1587 = vmatpush1.msra.mxu0 0.0
        %1588 = vmatprep.subr.mxu0 0.0
        %1589 = vmatpush1.msra.mxu0 0.0
        %1590 = vmatprep.subr.mxu0 0.0
        %1591 = vmatpush1.msra.mxu0 0.0
        %1592 = vmatprep.subr.mxu0 0.0
        %1593 = vmatpush1.msra.mxu0 0.0
        %1594 = vmatprep.subr.mxu0 0.0
        %1595 = vmatpush1.msra.mxu0 0.0
        %1596 = vmatprep.subr.mxu0 0.0
        %1597 = vmatpush1.msra.mxu0 0.0
        %1598 = vmatprep.subr.mxu0 0.0
        %1599 = vmatpush1.msra.mxu0 0.0
        %1600 = vmatprep.subr.mxu0 0.0
        %1601 = vmatpush1.msra.mxu0 0.0
        %1602 = vmatprep.subr.mxu0 0.0
        %1603 = vmatpush1.msra.mxu0 0.0
        %1604 = vmatprep.subr.mxu0 0.0
        %1605 = vmatpush1.msra.mxu0 0.0
        %1606 = vmatprep.subr.mxu0 0.0
        %1607 = vmatpush1.msra.mxu0 0.0
        %1608 = vmatprep.subr.mxu0 0.0
        %1609 = vmatpush1.msra.mxu0 0.0
        %1610 = vmatprep.subr.mxu0 0.0
        %1611 = vmatpush1.msra.mxu0 0.0
        %1612 = vmatprep.subr.mxu0 0.0
        %1613 = vmatpush1.msra.mxu0 0.0
        %1614 = vmatprep.subr.mxu0 0.0
        %1615 = vmatpush1.msra.mxu0 0.0
        %1616 = vmatprep.subr.mxu0 0.0
        %1617 = vmatpush1.msra.mxu0 0.0
        %1618 = vmatprep.subr.mxu0 0.0
        %1619 = vmatpush1.msra.mxu0 0.0
        %1620 = vmatprep.subr.mxu0 0.0
        %1621 = vmatpush1.msra.mxu0 0.0
        %1622 = vmatprep.subr.mxu0 0.0
        %1623 = vmatpush1.msra.mxu0 0.0
        %1624 = vmatprep.mubr.f32.mxu0 0.0
        %1625 = vmatmul.mubr.f32.gmra.mrb[0].mxu0 %v1549
        %v1626 = vpop.f32.mrb[0].mxu0
        %v1627 = vadd.f32 0.0, %v1626
        %v1628 = vpop.f32.mrb[0].mxu0
        %1629 = vmatprep.mubr.f32.mxu0 0.0
        %1630 = vmatmul.mubr.f32.gmra.mrb[0].mxu0 %v1552
        %v1631 = vpop.f32.mrb[0].mxu0
        %v1632 = vadd.f32 0.0, %v1631
        %v1633 = vpop.f32.mrb[0].mxu0
        %1634 = vmatprep.mubr.f32.mxu0 0.0
        %1635 = vmatmul.mubr.f32.gmra.mrb[0].mxu0 %v1555
        %v1636 = vpop.f32.mrb[0].mxu0
        %v1637 = vadd.f32 0.0, %v1636
        %v1638 = vpop.f32.mrb[0].mxu0
        %1639 = vmatprep.mubr.f32.mxu0 0.0
        %1640 = vmatmul.mubr.f32.gmra.mrb[0].mxu0 %v1558
        %v1641 = vpop.f32.mrb[0].mxu0
        %v1642 = vadd.f32 0.0, %v1641
        %v1643 = vpop.f32.mrb[0].mxu0
        %1644 = vdwg.mxu0
        %v1645 = vadd.f32 %v1525, %v1627
        %v1646 = vadd.f32 %v1530, %v1632
        %v1647 = vadd.f32 %v1535, %v1637
        %v1648 = vadd.f32 %v1540, %v1642
        %v1649 = vld [vmem:[#allocation17] sm:$0x1]
        %v1651 = vlaneseq
        %v1652 = vshrl.u32 %v1651, 7
        %v1653 = vsub.s32 0, %v1652
        %v1654 = vrot.slane %v1649, %v1653
        %v1656 = vadd.f32 %v1645, %v1654
        %v1657 = vadd.f32 %v1646, %v1654
        %v1658 = vadd.f32 %v1647, %v1654
        %v1659 = vadd.f32 %v1648, %v1654
        %v1660 = vld [vmem:[#allocation19] sm:$0xff]
        %v1661 = vld [vmem:[#allocation19 + $0x8] sm:$0xff]
        %v1662 = vld [vmem:[#allocation19 + $0x10] sm:$0xff]
        %v1663 = vld [vmem:[#allocation19 + $0x18] sm:$0xff]
        %v1664 = vld [vmem:[#allocation20] sm:$0x1]
        %v1665 = vld [vmem:[%s10] sm:$0xff]
        %v1666 = vld [vmem:[%s10 + $0x8] sm:$0xff]
        %v1667 = vld [vmem:[%s10 + $0x10] sm:$0xff]
        %v1668 = vld [vmem:[%s10 + $0x18] sm:$0xff]
        %v1669 = vld [vmem:[#allocation22] sm:$0x1]
        %v1670 = vld [vmem:[#allocation23] sm:$0x1]
        %v1671 = vld [vmem:[#allocation25] sm:$0x1]
        %v1672 = vmax.f32 %v1656, 0.0
        %v1673 = vmax.f32 %v1657, 0.0
        %v1674 = vmax.f32 %v1658, 0.0
        %v1675 = vmax.f32 %v1659, 0.0
        %v1677 = vlaneseq
        %v1678 = vshrl.u32 %v1677, 7
        %v1679 = vsub.s32 0, %v1678
        %v1680 = vrot.slane %v1664, %v1679
        %v1683 = vsel %vm1547, %v1672, 0
        %v1686 = vsel %vm1547, %v1673, 0
        %v1689 = vsel %vm1547, %v1674, 0
        %v1692 = vsel %vm1547, %v1675, 0
        %1694 = vmatprep.subr.mxu0 0.0
        %1695 = vmatpush1.msra.mxu0 %v1660
        %1696 = vmatprep.subr.mxu0 0.0
        %1697 = vmatpush1.msra.mxu0 %v1661
        %1698 = vmatprep.subr.mxu0 0.0
        %1699 = vmatpush1.msra.mxu0 %v1662
        %1700 = vmatprep.subr.mxu0 0.0
        %1701 = vmatpush1.msra.mxu0 %v1663
        %1702 = vmatprep.subr.mxu0 0.0
        %1703 = vmatpush1.msra.mxu0 0.0
        %1704 = vmatprep.subr.mxu0 0.0
        %1705 = vmatpush1.msra.mxu0 0.0
        %1706 = vmatprep.subr.mxu0 0.0
        %1707 = vmatpush1.msra.mxu0 0.0
        %1708 = vmatprep.subr.mxu0 0.0
        %1709 = vmatpush1.msra.mxu0 0.0
        %1710 = vmatprep.subr.mxu0 0.0
        %1711 = vmatpush1.msra.mxu0 0.0
        %1712 = vmatprep.subr.mxu0 0.0
        %1713 = vmatpush1.msra.mxu0 0.0
        %1714 = vmatprep.subr.mxu0 0.0
        %1715 = vmatpush1.msra.mxu0 0.0
        %1716 = vmatprep.subr.mxu0 0.0
        %1717 = vmatpush1.msra.mxu0 0.0
        %1718 = vmatprep.subr.mxu0 0.0
        %1719 = vmatpush1.msra.mxu0 0.0
        %1720 = vmatprep.subr.mxu0 0.0
        %1721 = vmatpush1.msra.mxu0 0.0
        %1722 = vmatprep.subr.mxu0 0.0
        %1723 = vmatpush1.msra.mxu0 0.0
        %1724 = vmatprep.subr.mxu0 0.0
        %1725 = vmatpush1.msra.mxu0 0.0
        %1726 = vmatprep.subr.mxu0 0.0
        %1727 = vmatpush1.msra.mxu0 0.0
        %1728 = vmatprep.subr.mxu0 0.0
        %1729 = vmatpush1.msra.mxu0 0.0
        %1730 = vmatprep.subr.mxu0 0.0
        %1731 = vmatpush1.msra.mxu0 0.0
        %1732 = vmatprep.subr.mxu0 0.0
        %1733 = vmatpush1.msra.mxu0 0.0
        %1734 = vmatprep.subr.mxu0 0.0
        %1735 = vmatpush1.msra.mxu0 0.0
        %1736 = vmatprep.subr.mxu0 0.0
        %1737 = vmatpush1.msra.mxu0 0.0
        %1738 = vmatprep.subr.mxu0 0.0
        %1739 = vmatpush1.msra.mxu0 0.0
        %1740 = vmatprep.subr.mxu0 0.0
        %1741 = vmatpush1.msra.mxu0 0.0
        %1742 = vmatprep.subr.mxu0 0.0
        %1743 = vmatpush1.msra.mxu0 0.0
        %1744 = vmatprep.subr.mxu0 0.0
        %1745 = vmatpush1.msra.mxu0 0.0
        %1746 = vmatprep.subr.mxu0 0.0
        %1747 = vmatpush1.msra.mxu0 0.0
        %1748 = vmatprep.subr.mxu0 0.0
        %1749 = vmatpush1.msra.mxu0 0.0
        %1750 = vmatprep.subr.mxu0 0.0
        %1751 = vmatpush1.msra.mxu0 0.0
        %1752 = vmatprep.subr.mxu0 0.0
        %1753 = vmatpush1.msra.mxu0 0.0
        %1754 = vmatprep.subr.mxu0 0.0
        %1755 = vmatpush1.msra.mxu0 0.0
        %1756 = vmatprep.subr.mxu0 0.0
        %1757 = vmatpush1.msra.mxu0 0.0
        %1758 = vmatprep.mubr.f32.mxu0 0.0
        %1759 = vmatmul.mubr.f32.gmra.mrb[0].mxu0 %v1683
        %v1760 = vpop.f32.mrb[0].mxu0
        %v1761 = vadd.f32 %v1680, %v1760
        %v1762 = vpop.f32.mrb[0].mxu0
        %1763 = vmatprep.mubr.f32.mxu0 0.0
        %1764 = vmatmul.mubr.f32.gmra.mrb[0].mxu0 %v1686
        %v1765 = vpop.f32.mrb[0].mxu0
        %v1766 = vadd.f32 %v1680, %v1765
        %v1767 = vpop.f32.mrb[0].mxu0
        %1768 = vmatprep.mubr.f32.mxu0 0.0
        %1769 = vmatmul.mubr.f32.gmra.mrb[0].mxu0 %v1689
        %v1770 = vpop.f32.mrb[0].mxu0
        %v1771 = vadd.f32 %v1680, %v1770
        %v1772 = vpop.f32.mrb[0].mxu0
        %1773 = vmatprep.mubr.f32.mxu0 0.0
        %1774 = vmatmul.mubr.f32.gmra.mrb[0].mxu0 %v1692
        %v1775 = vpop.f32.mrb[0].mxu0
        %v1776 = vadd.f32 %v1680, %v1775
        %v1777 = vpop.f32.mrb[0].mxu0
        %1778 = vdwg.mxu0
        %v1779 = vmax.f32 %v1761, 0.0
        %v1780 = vmax.f32 %v1766, 0.0
        %v1781 = vmax.f32 %v1771, 0.0
        %v1782 = vmax.f32 %v1776, 0.0
        %v1784 = vlaneseq
        %v1785 = vshrl.u32 %v1784, 7
        %v1786 = vsub.s32 0, %v1785
        %v1787 = vrot.slane %v1669, %v1786
        %v1790 = vsel %vm1547, %v1779, 0
        %v1793 = vsel %vm1547, %v1780, 0
        %v1796 = vsel %vm1547, %v1781, 0
        %v1799 = vsel %vm1547, %v1782, 0
        %1801 = vmatprep.subr.mxu0 0.0
        %1802 = vmatpush1.msra.mxu0 %v1665
        %1803 = vmatprep.subr.mxu0 0.0
        %1804 = vmatpush1.msra.mxu0 %v1666
        %1805 = vmatprep.subr.mxu0 0.0
        %1806 = vmatpush1.msra.mxu0 %v1667
        %1807 = vmatprep.subr.mxu0 0.0
        %1808 = vmatpush1.msra.mxu0 %v1668
        %1809 = vmatprep.subr.mxu0 0.0
        %1810 = vmatpush1.msra.mxu0 0.0
        %1811 = vmatprep.subr.mxu0 0.0
        %1812 = vmatpush1.msra.mxu0 0.0
        %1813 = vmatprep.subr.mxu0 0.0
        %1814 = vmatpush1.msra.mxu0 0.0
        %1815 = vmatprep.subr.mxu0 0.0
        %1816 = vmatpush1.msra.mxu0 0.0
        %1817 = vmatprep.subr.mxu0 0.0
        %1818 = vmatpush1.msra.mxu0 0.0
        %1819 = vmatprep.subr.mxu0 0.0
        %1820 = vmatpush1.msra.mxu0 0.0
        %1821 = vmatprep.subr.mxu0 0.0
        %1822 = vmatpush1.msra.mxu0 0.0
        %1823 = vmatprep.subr.mxu0 0.0
        %1824 = vmatpush1.msra.mxu0 0.0
        %1825 = vmatprep.subr.mxu0 0.0
        %1826 = vmatpush1.msra.mxu0 0.0
        %1827 = vmatprep.subr.mxu0 0.0
        %1828 = vmatpush1.msra.mxu0 0.0
        %1829 = vmatprep.subr.mxu0 0.0
        %1830 = vmatpush1.msra.mxu0 0.0
        %1831 = vmatprep.subr.mxu0 0.0
        %1832 = vmatpush1.msra.mxu0 0.0
        %1833 = vmatprep.subr.mxu0 0.0
        %1834 = vmatpush1.msra.mxu0 0.0
        %1835 = vmatprep.subr.mxu0 0.0
        %1836 = vmatpush1.msra.mxu0 0.0
        %1837 = vmatprep.subr.mxu0 0.0
        %1838 = vmatpush1.msra.mxu0 0.0
        %1839 = vmatprep.subr.mxu0 0.0
        %1840 = vmatpush1.msra.mxu0 0.0
        %1841 = vmatprep.subr.mxu0 0.0
        %1842 = vmatpush1.msra.mxu0 0.0
        %1843 = vmatprep.subr.mxu0 0.0
        %1844 = vmatpush1.msra.mxu0 0.0
        %1845 = vmatprep.subr.mxu0 0.0
        %1846 = vmatpush1.msra.mxu0 0.0
        %1847 = vmatprep.subr.mxu0 0.0
        %1848 = vmatpush1.msra.mxu0 0.0
        %1849 = vmatprep.subr.mxu0 0.0
        %1850 = vmatpush1.msra.mxu0 0.0
        %1851 = vmatprep.subr.mxu0 0.0
        %1852 = vmatpush1.msra.mxu0 0.0
        %1853 = vmatprep.subr.mxu0 0.0
        %1854 = vmatpush1.msra.mxu0 0.0
        %1855 = vmatprep.subr.mxu0 0.0
        %1856 = vmatpush1.msra.mxu0 0.0
        %1857 = vmatprep.subr.mxu0 0.0
        %1858 = vmatpush1.msra.mxu0 0.0
        %1859 = vmatprep.subr.mxu0 0.0
        %1860 = vmatpush1.msra.mxu0 0.0
        %1861 = vmatprep.subr.mxu0 0.0
        %1862 = vmatpush1.msra.mxu0 0.0
        %1863 = vmatprep.subr.mxu0 0.0
        %1864 = vmatpush1.msra.mxu0 0.0
        %1865 = vmatprep.mubr.f32.mxu0 0.0
        %1866 = vmatmul.mubr.f32.gmra.mrb[0].mxu0 %v1790
        %v1867 = vpop.f32.mrb[0].mxu0
        %v1868 = vadd.f32 %v1787, %v1867
        %v1869 = vpop.f32.mrb[0].mxu0
        %1870 = vmatprep.mubr.f32.mxu0 0.0
        %1871 = vmatmul.mubr.f32.gmra.mrb[0].mxu0 %v1793
        %v1872 = vpop.f32.mrb[0].mxu0
        %v1873 = vadd.f32 %v1787, %v1872
        %v1874 = vpop.f32.mrb[0].mxu0
        %1875 = vmatprep.mubr.f32.mxu0 0.0
        %1876 = vmatmul.mubr.f32.gmra.mrb[0].mxu0 %v1796
        %v1877 = vpop.f32.mrb[0].mxu0
        %v1878 = vadd.f32 %v1787, %v1877
        %v1879 = vpop.f32.mrb[0].mxu0
        %1880 = vmatprep.mubr.f32.mxu0 0.0
        %1881 = vmatmul.mubr.f32.gmra.mrb[0].mxu0 %v1799
        %v1882 = vpop.f32.mrb[0].mxu0
        %v1883 = vadd.f32 %v1787, %v1882
        %v1884 = vpop.f32.mrb[0].mxu0
        %1885 = vdwg.mxu0
        %v1886 = vsel %vm1547, %v1868, 0.0
        %1887 = vadd.xlane.f32.xlu0 %v1886
        %v1888 = vpop.xlane.xlu0 %1887
        %v1889 = vsel %vm1547, %v1873, 0.0
        %1890 = vadd.xlane.f32.xlu0 %v1889
        %v1891 = vpop.xlane.xlu0 %1890
        %v1892 = vsel %vm1547, %v1878, 0.0
        %1893 = vadd.xlane.f32.xlu0 %v1892
        %v1894 = vpop.xlane.xlu0 %1893
        %v1895 = vsel %vm1547, %v1883, 0.0
        %1896 = vadd.xlane.f32.xlu0 %v1895
        %v1897 = vpop.xlane.xlu0 %1896
        %v1898 = vrcp.pop 32.0
        %v1899 = vmul.f32 %v1888, %v1898
        %v1900 = vmul.f32 %v1891, %v1898
        %v1901 = vmul.f32 %v1894, %v1898
        %v1902 = vmul.f32 %v1897, %v1898
        %v1903 = vsub.f32 %v1868, %v1899
        %v1904 = vsub.f32 %v1873, %v1900
        %v1905 = vsub.f32 %v1878, %v1901
        %v1906 = vsub.f32 %v1883, %v1902
        %v1907 = vmul.f32 %v1903, %v1903
        %v1908 = vmul.f32 %v1904, %v1904
        %v1909 = vmul.f32 %v1905, %v1905
        %v1910 = vmul.f32 %v1906, %v1906
        %v1911 = vsel %vm1547, %v1907, 0.0
        %1912 = vadd.xlane.f32.xlu0 %v1911
        %v1913 = vpop.xlane.xlu0 %1912
        %v1914 = vsel %vm1547, %v1908, 0.0
        %1915 = vadd.xlane.f32.xlu0 %v1914
        %v1916 = vpop.xlane.xlu0 %1915
        %v1917 = vsel %vm1547, %v1909, 0.0
        %1918 = vadd.xlane.f32.xlu0 %v1917
        %v1919 = vpop.xlane.xlu0 %1918
        %v1920 = vsel %vm1547, %v1910, 0.0
        %1921 = vadd.xlane.f32.xlu0 %v1920
        %v1922 = vpop.xlane.xlu0 %1921
        %v1923 = vmul.f32 %v1913, %v1898
        %v1924 = vmul.f32 %v1916, %v1898
        %v1925 = vmul.f32 %v1919, %v1898
        %v1926 = vmul.f32 %v1922, %v1898
        %v1927 = vadd.f32 %v1923, 1e-05
        %v1928 = vadd.f32 %v1924, 1e-05
        %v1929 = vadd.f32 %v1925, 1e-05
        %v1930 = vadd.f32 %v1926, 1e-05
        %v1931 = vrsqrt.pop %v1927
        %v1932 = vrsqrt.pop %v1928
        %v1933 = vrsqrt.pop %v1929
        %v1934 = vrsqrt.pop %v1930
        %v1935 = vmul.f32 %v1903, %v1931
        %v1936 = vmul.f32 %v1904, %v1932
        %v1937 = vmul.f32 %v1905, %v1933
        %v1938 = vmul.f32 %v1906, %v1934
        %v1940 = vlaneseq
        %v1941 = vshrl.u32 %v1940, 7
        %v1942 = vsub.s32 0, %v1941
        %v1943 = vrot.slane %v1670, %v1942
        %v1945 = vmul.f32 %v1935, %v1943
        %v1946 = vmul.f32 %v1936, %v1943
        %v1947 = vmul.f32 %v1937, %v1943
        %v1948 = vmul.f32 %v1938, %v1943
        %v1950 = vlaneseq
        %v1951 = vshrl.u32 %v1950, 7
        %v1952 = vsub.s32 0, %v1951
        %v1953 = vrot.slane %v1671, %v1952
        %v1955 = vadd.f32 %v1945, %v1953
        %v1956 = vadd.f32 %v1946, %v1953
        %v1957 = vadd.f32 %v1947, %v1953
        %v1958 = vadd.f32 %v1948, %v1953
        %v1959 = vadd.f32 %v1955, %v1253
        %v1960 = vadd.f32 %v1956, %v1254
        %v1961 = vadd.f32 %v1957, %v1255
        %v1962 = vadd.f32 %v1958, %v1256
        %1963 = vst.msk [vmem:[%s1071] sm:$0xff] %vm1547, %v1959
        %1964 = vst.msk [vmem:[%s1071 + $0x8] sm:$0xff] %vm1547, %v1960
        %1965 = vst.msk [vmem:[%s1071 + $0x10] sm:$0xff] %vm1547, %v1961
        %1966 = vst.msk [vmem:[%s1071 + $0x18] sm:$0xff] %vm1547, %v1962
        %v1967 = vld [vmem:[#allocation2] sm:$0xff]
        %v1968 = vld [vmem:[#allocation2 + $0x8] sm:$0xff]
        %v1970 = vsel %vm1547, %v1278, 0
        %v1973 = vsel %vm1547, %v1279, 0
        %1975 = vmatprep.subr.mxu0 0.0
        %1976 = vmatpush1.msra.mxu0 %v1955
        %1977 = vmatprep.subr.mxu0 0.0
        %1978 = vmatpush1.msra.mxu0 %v1956
        %1979 = vmatprep.subr.mxu0 0.0
        %1980 = vmatpush1.msra.mxu0 %v1957
        %1981 = vmatprep.subr.mxu0 0.0
        %1982 = vmatpush1.msra.mxu0 %v1958
        %1983 = vmatprep.subr.mxu0 0.0
        %1984 = vmatpush1.msra.mxu0 0.0
        %1985 = vmatprep.subr.mxu0 0.0
        %1986 = vmatpush1.msra.mxu0 0.0
        %1987 = vmatprep.subr.mxu0 0.0
        %1988 = vmatpush1.msra.mxu0 0.0
        %1989 = vmatprep.subr.mxu0 0.0
        %1990 = vmatpush1.msra.mxu0 0.0
        %1991 = vmatprep.subr.mxu0 0.0
        %1992 = vmatpush1.msra.mxu0 0.0
        %1993 = vmatprep.subr.mxu0 0.0
        %1994 = vmatpush1.msra.mxu0 0.0
        %1995 = vmatprep.subr.mxu0 0.0
        %1996 = vmatpush1.msra.mxu0 0.0
        %1997 = vmatprep.subr.mxu0 0.0
        %1998 = vmatpush1.msra.mxu0 0.0
        %1999 = vmatprep.subr.mxu0 0.0
        %2000 = vmatpush1.msra.mxu0 0.0
        %2001 = vmatprep.subr.mxu0 0.0
        %2002 = vmatpush1.msra.mxu0 0.0
        %2003 = vmatprep.subr.mxu0 0.0
        %2004 = vmatpush1.msra.mxu0 0.0
        %2005 = vmatprep.subr.mxu0 0.0
        %2006 = vmatpush1.msra.mxu0 0.0
        %2007 = vmatprep.subr.mxu0 0.0
        %2008 = vmatpush1.msra.mxu0 0.0
        %2009 = vmatprep.subr.mxu0 0.0
        %2010 = vmatpush1.msra.mxu0 0.0
        %2011 = vmatprep.subr.mxu0 0.0
        %2012 = vmatpush1.msra.mxu0 0.0
        %2013 = vmatprep.subr.mxu0 0.0
        %2014 = vmatpush1.msra.mxu0 0.0
        %2015 = vmatprep.subr.mxu0 0.0
        %2016 = vmatpush1.msra.mxu0 0.0
        %2017 = vmatprep.subr.mxu0 0.0
        %2018 = vmatpush1.msra.mxu0 0.0
        %2019 = vmatprep.subr.mxu0 0.0
        %2020 = vmatpush1.msra.mxu0 0.0
        %2021 = vmatprep.subr.mxu0 0.0
        %2022 = vmatpush1.msra.mxu0 0.0
        %2023 = vmatprep.subr.mxu0 0.0
        %2024 = vmatpush1.msra.mxu0 0.0
        %2025 = vmatprep.subr.mxu0 0.0
        %2026 = vmatpush1.msra.mxu0 0.0
        %2027 = vmatprep.subr.mxu0 0.0
        %2028 = vmatpush1.msra.mxu0 0.0
        %2029 = vmatprep.subr.mxu0 0.0
        %2030 = vmatpush1.msra.mxu0 0.0
        %2031 = vmatprep.subr.mxu0 0.0
        %2032 = vmatpush1.msra.mxu0 0.0
        %2033 = vmatprep.subr.mxu0 0.0
        %2034 = vmatpush1.msra.mxu0 0.0
        %2035 = vmatprep.subr.mxu0 0.0
        %2036 = vmatpush1.msra.mxu0 0.0
        %2037 = vmatprep.subr.mxu0 0.0
        %2038 = vmatpush1.msra.mxu0 0.0
        %2039 = vmatprep.mubr.f32.mxu0 0.0
        %2040 = vmatmul.mubr.f32.gmra.mrb[0].mxu0 %v1970
        %v2041 = vpop.f32.mrb[0].mxu0
        %v2042 = vadd.f32 0.0, %v2041
        %v2043 = vpop.f32.mrb[0].mxu0
        %2044 = vmatprep.mubr.f32.mxu0 0.0
        %2045 = vmatmul.mubr.f32.gmra.mrb[0].mxu0 %v1973
        %v2046 = vpop.f32.mrb[0].mxu0
        %v2047 = vadd.f32 0.0, %v2046
        %v2048 = vpop.f32.mrb[0].mxu0
        %2049 = vdwg.mxu0
        %v2050 = vadd.f32 %v1967, %v2042
        %v2051 = vadd.f32 %v1968, %v2047
        %2052 = vst.msk [vmem:[#allocation2] sm:$0xff] %vm1547, %v2050
        %2053 = vst.msk [vmem:[#allocation2 + $0x8] sm:$0xff] %vm1547, %v2051
        // Predicated region
        $region185: #{tpu_custom_call.1} parent=111 // pred_check
          %p2054 = pneg %p1076
        $region186: #{tpu_custom_call.1} parent=111 // pred_check_branch
          %2056 = sbr.rel (%p2054) target = $region188
        $region187: #{tpu_custom_call.1} parent=111 // pred_region
          %v2057 = vld [vmem:[#allocation26] sm:$0xff]
          %v2058 = vld [vmem:[#allocation26 + $0x8] sm:$0xff]
          %v2059 = vld [vmem:[#allocation26 + $0x10] sm:$0xff]
          %v2060 = vld [vmem:[#allocation26 + $0x18] sm:$0xff]
          %v2061 = vld [vmem:[#allocation2] sm:$0xff]
          %v2062 = vld [vmem:[#allocation2 + $0x8] sm:$0xff]
          %v2063 = vld [vmem:[#allocation28] sm:$0xff]
          %v2064 = vld [vmem:[#allocation28 + $0x8] sm:$0xff]
          %v2065 = vld [vmem:[#allocation28 + $0x10] sm:$0xff]
          %v2066 = vld [vmem:[#allocation28 + $0x18] sm:$0xff]
          %v2068 = vsel %vm1547, %v2061, 0
          %v2071 = vsel %vm1547, %v2062, 0
          %2073 = vmatprep.subr.mxu0 0.0
          %2074 = vmatpush1.msra.mxu0 %v2063
          %2075 = vmatprep.subr.mxu0 0.0
          %2076 = vmatpush1.msra.mxu0 %v2064
          %2077 = vmatprep.subr.mxu0 0.0
          %2078 = vmatpush1.msra.mxu0 %v2065
          %2079 = vmatprep.subr.mxu0 0.0
          %2080 = vmatpush1.msra.mxu0 %v2066
          %2081 = vmatprep.subr.mxu0 0.0
          %2082 = vmatpush1.msra.mxu0 0.0
          %2083 = vmatprep.subr.mxu0 0.0
          %2084 = vmatpush1.msra.mxu0 0.0
          %2085 = vmatprep.subr.mxu0 0.0
          %2086 = vmatpush1.msra.mxu0 0.0
          %2087 = vmatprep.subr.mxu0 0.0
          %2088 = vmatpush1.msra.mxu0 0.0
          %2089 = vmatprep.subr.mxu0 0.0
          %2090 = vmatpush1.msra.mxu0 0.0
          %2091 = vmatprep.subr.mxu0 0.0
          %2092 = vmatpush1.msra.mxu0 0.0
          %2093 = vmatprep.subr.mxu0 0.0
          %2094 = vmatpush1.msra.mxu0 0.0
          %2095 = vmatprep.subr.mxu0 0.0
          %2096 = vmatpush1.msra.mxu0 0.0
          %2097 = vmatprep.subr.mxu0 0.0
          %2098 = vmatpush1.msra.mxu0 0.0
          %2099 = vmatprep.subr.mxu0 0.0
          %2100 = vmatpush1.msra.mxu0 0.0
          %2101 = vmatprep.subr.mxu0 0.0
          %2102 = vmatpush1.msra.mxu0 0.0
          %2103 = vmatprep.subr.mxu0 0.0
          %2104 = vmatpush1.msra.mxu0 0.0
          %2105 = vmatprep.subr.mxu0 0.0
          %2106 = vmatpush1.msra.mxu0 0.0
          %2107 = vmatprep.subr.mxu0 0.0
          %2108 = vmatpush1.msra.mxu0 0.0
          %2109 = vmatprep.subr.mxu0 0.0
          %2110 = vmatpush1.msra.mxu0 0.0
          %2111 = vmatprep.subr.mxu0 0.0
          %2112 = vmatpush1.msra.mxu0 0.0
          %2113 = vmatprep.subr.mxu0 0.0
          %2114 = vmatpush1.msra.mxu0 0.0
          %2115 = vmatprep.subr.mxu0 0.0
          %2116 = vmatpush1.msra.mxu0 0.0
          %2117 = vmatprep.subr.mxu0 0.0
          %2118 = vmatpush1.msra.mxu0 0.0
          %2119 = vmatprep.subr.mxu0 0.0
          %2120 = vmatpush1.msra.mxu0 0.0
          %2121 = vmatprep.subr.mxu0 0.0
          %2122 = vmatpush1.msra.mxu0 0.0
          %2123 = vmatprep.subr.mxu0 0.0
          %2124 = vmatpush1.msra.mxu0 0.0
          %2125 = vmatprep.subr.mxu0 0.0
          %2126 = vmatpush1.msra.mxu0 0.0
          %2127 = vmatprep.subr.mxu0 0.0
          %2128 = vmatpush1.msra.mxu0 0.0
          %2129 = vmatprep.subr.mxu0 0.0
          %2130 = vmatpush1.msra.mxu0 0.0
          %2131 = vmatprep.subr.mxu0 0.0
          %2132 = vmatpush1.msra.mxu0 0.0
          %2133 = vmatprep.subr.mxu0 0.0
          %2134 = vmatpush1.msra.mxu0 0.0
          %2135 = vmatprep.subr.mxu0 0.0
          %2136 = vmatpush1.msra.mxu0 0.0
          %2137 = vmatprep.mubr.f32.mxu0 0.0
          %2138 = vmatmul.mubr.f32.gmra.mrb[0].mxu0 %v2068
          %v2139 = vpop.f32.mrb[0].mxu0
          %v2140 = vadd.f32 0.0, %v2139
          %v2141 = vpop.f32.mrb[0].mxu0
          %2142 = vmatprep.mubr.f32.mxu0 0.0
          %2143 = vmatmul.mubr.f32.gmra.mrb[0].mxu0 %v2071
          %v2144 = vpop.f32.mrb[0].mxu0
          %v2145 = vadd.f32 0.0, %v2144
          %v2146 = vpop.f32.mrb[0].mxu0
          %2147 = vdwg.mxu0
          %v2149 = vsel %vm1547, %v1074, 0
          %v2152 = vsel %vm1547, %v1075, 0
          %2154 = vmatprep.subr.mxu0 0.0
          %2155 = vmatpush1.msra.mxu0 %v2057
          %2156 = vmatprep.subr.mxu0 0.0
          %2157 = vmatpush1.msra.mxu0 %v2058
          %2158 = vmatprep.subr.mxu0 0.0
          %2159 = vmatpush1.msra.mxu0 %v2059
          %2160 = vmatprep.subr.mxu0 0.0
          %2161 = vmatpush1.msra.mxu0 %v2060
          %2162 = vmatprep.subr.mxu0 0.0
          %2163 = vmatpush1.msra.mxu0 0.0
          %2164 = vmatprep.subr.mxu0 0.0
          %2165 = vmatpush1.msra.mxu0 0.0
          %2166 = vmatprep.subr.mxu0 0.0
          %2167 = vmatpush1.msra.mxu0 0.0
          %2168 = vmatprep.subr.mxu0 0.0
          %2169 = vmatpush1.msra.mxu0 0.0
          %2170 = vmatprep.subr.mxu0 0.0
          %2171 = vmatpush1.msra.mxu0 0.0
          %2172 = vmatprep.subr.mxu0 0.0
          %2173 = vmatpush1.msra.mxu0 0.0
          %2174 = vmatprep.subr.mxu0 0.0
          %2175 = vmatpush1.msra.mxu0 0.0
          %2176 = vmatprep.subr.mxu0 0.0
          %2177 = vmatpush1.msra.mxu0 0.0
          %2178 = vmatprep.subr.mxu0 0.0
          %2179 = vmatpush1.msra.mxu0 0.0
          %2180 = vmatprep.subr.mxu0 0.0
          %2181 = vmatpush1.msra.mxu0 0.0
          %2182 = vmatprep.subr.mxu0 0.0
          %2183 = vmatpush1.msra.mxu0 0.0
          %2184 = vmatprep.subr.mxu0 0.0
          %2185 = vmatpush1.msra.mxu0 0.0
          %2186 = vmatprep.subr.mxu0 0.0
          %2187 = vmatpush1.msra.mxu0 0.0
          %2188 = vmatprep.subr.mxu0 0.0
          %2189 = vmatpush1.msra.mxu0 0.0
          %2190 = vmatprep.subr.mxu0 0.0
          %2191 = vmatpush1.msra.mxu0 0.0
          %2192 = vmatprep.subr.mxu0 0.0
          %2193 = vmatpush1.msra.mxu0 0.0
          %2194 = vmatprep.subr.mxu0 0.0
          %2195 = vmatpush1.msra.mxu0 0.0
          %2196 = vmatprep.subr.mxu0 0.0
          %2197 = vmatpush1.msra.mxu0 0.0
          %2198 = vmatprep.subr.mxu0 0.0
          %2199 = vmatpush1.msra.mxu0 0.0
          %2200 = vmatprep.subr.mxu0 0.0
          %2201 = vmatpush1.msra.mxu0 0.0
          %2202 = vmatprep.subr.mxu0 0.0
          %2203 = vmatpush1.msra.mxu0 0.0
          %2204 = vmatprep.subr.mxu0 0.0
          %2205 = vmatpush1.msra.mxu0 0.0
          %2206 = vmatprep.subr.mxu0 0.0
          %2207 = vmatpush1.msra.mxu0 0.0
          %2208 = vmatprep.subr.mxu0 0.0
          %2209 = vmatpush1.msra.mxu0 0.0
          %2210 = vmatprep.subr.mxu0 0.0
          %2211 = vmatpush1.msra.mxu0 0.0
          %2212 = vmatprep.subr.mxu0 0.0
          %2213 = vmatpush1.msra.mxu0 0.0
          %2214 = vmatprep.subr.mxu0 0.0
          %2215 = vmatpush1.msra.mxu0 0.0
          %2216 = vmatprep.subr.mxu0 0.0
          %2217 = vmatpush1.msra.mxu0 0.0
          %2218 = vmatprep.mubr.f32.mxu0 0.0
          %2219 = vmatmul.mubr.f32.gmra.mrb[0].mxu0 %v2149
          %v2220 = vpop.f32.mrb[0].mxu0
          %v2221 = vadd.f32 %v2140, %v2220
          %v2222 = vpop.f32.mrb[0].mxu0
          %2223 = vmatprep.mubr.f32.mxu0 0.0
          %2224 = vmatmul.mubr.f32.gmra.mrb[0].mxu0 %v2152
          %v2225 = vpop.f32.mrb[0].mxu0
          %v2226 = vadd.f32 %v2145, %v2225
          %v2227 = vpop.f32.mrb[0].mxu0
          %2228 = vdwg.mxu0
          %v2229 = vld [vmem:[#allocation29] sm:$0x1]
          %v2231 = vlaneseq
          %v2232 = vshrl.u32 %v2231, 7
          %v2233 = vsub.s32 0, %v2232
          %v2234 = vrot.slane %v2229, %v2233
          %v2236 = vadd.f32 %v2221, %v2234
          %v2237 = vadd.f32 %v2226, %v2234
          %v2238 = vld [vmem:[%s17] sm:$0xff]
          %v2239 = vld [vmem:[%s17 + $0x8] sm:$0xff]
          %v2240 = vld [vmem:[%s17 + $0x10] sm:$0xff]
          %v2241 = vld [vmem:[%s17 + $0x18] sm:$0xff]
          %v2242 = vld [vmem:[%s18] sm:$0x1]
          %v2243 = vld [vmem:[#allocation31] sm:$0xff]
          %v2244 = vld [vmem:[#allocation31 + $0x8] sm:$0xff]
          %v2245 = vld [vmem:[#allocation31 + $0x10] sm:$0xff]
          %v2246 = vld [vmem:[#allocation31 + $0x18] sm:$0xff]
          %v2247 = vld [vmem:[%s20] sm:$0x1]
          %v2248 = vld [vmem:[%s21] sm:$0x1]
          %v2249 = vld [vmem:[%s22] sm:$0x1]
          %v2250 = vmax.f32 %v2236, 0.0
          %v2251 = vmax.f32 %v2237, 0.0
          %v2253 = vlaneseq
          %v2254 = vshrl.u32 %v2253, 7
          %v2255 = vsub.s32 0, %v2254
          %v2256 = vrot.slane %v2242, %v2255
          %v2259 = vsel %vm1547, %v2250, 0
          %v2262 = vsel %vm1547, %v2251, 0
          %2264 = vmatprep.subr.mxu0 0.0
          %2265 = vmatpush1.msra.mxu0 %v2238
          %2266 = vmatprep.subr.mxu0 0.0
          %2267 = vmatpush1.msra.mxu0 %v2239
          %2268 = vmatprep.subr.mxu0 0.0
          %2269 = vmatpush1.msra.mxu0 %v2240
          %2270 = vmatprep.subr.mxu0 0.0
          %2271 = vmatpush1.msra.mxu0 %v2241
          %2272 = vmatprep.subr.mxu0 0.0
          %2273 = vmatpush1.msra.mxu0 0.0
          %2274 = vmatprep.subr.mxu0 0.0
          %2275 = vmatpush1.msra.mxu0 0.0
          %2276 = vmatprep.subr.mxu0 0.0
          %2277 = vmatpush1.msra.mxu0 0.0
          %2278 = vmatprep.subr.mxu0 0.0
          %2279 = vmatpush1.msra.mxu0 0.0
          %2280 = vmatprep.subr.mxu0 0.0
          %2281 = vmatpush1.msra.mxu0 0.0
          %2282 = vmatprep.subr.mxu0 0.0
          %2283 = vmatpush1.msra.mxu0 0.0
          %2284 = vmatprep.subr.mxu0 0.0
          %2285 = vmatpush1.msra.mxu0 0.0
          %2286 = vmatprep.subr.mxu0 0.0
          %2287 = vmatpush1.msra.mxu0 0.0
          %2288 = vmatprep.subr.mxu0 0.0
          %2289 = vmatpush1.msra.mxu0 0.0
          %2290 = vmatprep.subr.mxu0 0.0
          %2291 = vmatpush1.msra.mxu0 0.0
          %2292 = vmatprep.subr.mxu0 0.0
          %2293 = vmatpush1.msra.mxu0 0.0
          %2294 = vmatprep.subr.mxu0 0.0
          %2295 = vmatpush1.msra.mxu0 0.0
          %2296 = vmatprep.subr.mxu0 0.0
          %2297 = vmatpush1.msra.mxu0 0.0
          %2298 = vmatprep.subr.mxu0 0.0
          %2299 = vmatpush1.msra.mxu0 0.0
          %2300 = vmatprep.subr.mxu0 0.0
          %2301 = vmatpush1.msra.mxu0 0.0
          %2302 = vmatprep.subr.mxu0 0.0
          %2303 = vmatpush1.msra.mxu0 0.0
          %2304 = vmatprep.subr.mxu0 0.0
          %2305 = vmatpush1.msra.mxu0 0.0
          %2306 = vmatprep.subr.mxu0 0.0
          %2307 = vmatpush1.msra.mxu0 0.0
          %2308 = vmatprep.subr.mxu0 0.0
          %2309 = vmatpush1.msra.mxu0 0.0
          %2310 = vmatprep.subr.mxu0 0.0
          %2311 = vmatpush1.msra.mxu0 0.0
          %2312 = vmatprep.subr.mxu0 0.0
          %2313 = vmatpush1.msra.mxu0 0.0
          %2314 = vmatprep.subr.mxu0 0.0
          %2315 = vmatpush1.msra.mxu0 0.0
          %2316 = vmatprep.subr.mxu0 0.0
          %2317 = vmatpush1.msra.mxu0 0.0
          %2318 = vmatprep.subr.mxu0 0.0
          %2319 = vmatpush1.msra.mxu0 0.0
          %2320 = vmatprep.subr.mxu0 0.0
          %2321 = vmatpush1.msra.mxu0 0.0
          %2322 = vmatprep.subr.mxu0 0.0
          %2323 = vmatpush1.msra.mxu0 0.0
          %2324 = vmatprep.subr.mxu0 0.0
          %2325 = vmatpush1.msra.mxu0 0.0
          %2326 = vmatprep.subr.mxu0 0.0
          %2327 = vmatpush1.msra.mxu0 0.0
          %2328 = vmatprep.mubr.f32.mxu0 0.0
          %2329 = vmatmul.mubr.f32.gmra.mrb[0].mxu0 %v2259
          %v2330 = vpop.f32.mrb[0].mxu0
          %v2331 = vadd.f32 %v2256, %v2330
          %v2332 = vpop.f32.mrb[0].mxu0
          %2333 = vmatprep.mubr.f32.mxu0 0.0
          %2334 = vmatmul.mubr.f32.gmra.mrb[0].mxu0 %v2262
          %v2335 = vpop.f32.mrb[0].mxu0
          %v2336 = vadd.f32 %v2256, %v2335
          %v2337 = vpop.f32.mrb[0].mxu0
          %2338 = vdwg.mxu0
          %v2339 = vmax.f32 %v2331, 0.0
          %v2340 = vmax.f32 %v2336, 0.0
          %v2342 = vlaneseq
          %v2343 = vshrl.u32 %v2342, 7
          %v2344 = vsub.s32 0, %v2343
          %v2345 = vrot.slane %v2247, %v2344
          %v2348 = vsel %vm1547, %v2339, 0
          %v2351 = vsel %vm1547, %v2340, 0
          %2353 = vmatprep.subr.mxu0 0.0
          %2354 = vmatpush1.msra.mxu0 %v2243
          %2355 = vmatprep.subr.mxu0 0.0
          %2356 = vmatpush1.msra.mxu0 %v2244
          %2357 = vmatprep.subr.mxu0 0.0
          %2358 = vmatpush1.msra.mxu0 %v2245
          %2359 = vmatprep.subr.mxu0 0.0
          %2360 = vmatpush1.msra.mxu0 %v2246
          %2361 = vmatprep.subr.mxu0 0.0
          %2362 = vmatpush1.msra.mxu0 0.0
          %2363 = vmatprep.subr.mxu0 0.0
          %2364 = vmatpush1.msra.mxu0 0.0
          %2365 = vmatprep.subr.mxu0 0.0
          %2366 = vmatpush1.msra.mxu0 0.0
          %2367 = vmatprep.subr.mxu0 0.0
          %2368 = vmatpush1.msra.mxu0 0.0
          %2369 = vmatprep.subr.mxu0 0.0
          %2370 = vmatpush1.msra.mxu0 0.0
          %2371 = vmatprep.subr.mxu0 0.0
          %2372 = vmatpush1.msra.mxu0 0.0
          %2373 = vmatprep.subr.mxu0 0.0
          %2374 = vmatpush1.msra.mxu0 0.0
          %2375 = vmatprep.subr.mxu0 0.0
          %2376 = vmatpush1.msra.mxu0 0.0
          %2377 = vmatprep.subr.mxu0 0.0
          %2378 = vmatpush1.msra.mxu0 0.0
          %2379 = vmatprep.subr.mxu0 0.0
          %2380 = vmatpush1.msra.mxu0 0.0
          %2381 = vmatprep.subr.mxu0 0.0
          %2382 = vmatpush1.msra.mxu0 0.0
          %2383 = vmatprep.subr.mxu0 0.0
          %2384 = vmatpush1.msra.mxu0 0.0
          %2385 = vmatprep.subr.mxu0 0.0
          %2386 = vmatpush1.msra.mxu0 0.0
          %2387 = vmatprep.subr.mxu0 0.0
          %2388 = vmatpush1.msra.mxu0 0.0
          %2389 = vmatprep.subr.mxu0 0.0
          %2390 = vmatpush1.msra.mxu0 0.0
          %2391 = vmatprep.subr.mxu0 0.0
          %2392 = vmatpush1.msra.mxu0 0.0
          %2393 = vmatprep.subr.mxu0 0.0
          %2394 = vmatpush1.msra.mxu0 0.0
          %2395 = vmatprep.subr.mxu0 0.0
          %2396 = vmatpush1.msra.mxu0 0.0
          %2397 = vmatprep.subr.mxu0 0.0
          %2398 = vmatpush1.msra.mxu0 0.0
          %2399 = vmatprep.subr.mxu0 0.0
          %2400 = vmatpush1.msra.mxu0 0.0
          %2401 = vmatprep.subr.mxu0 0.0
          %2402 = vmatpush1.msra.mxu0 0.0
          %2403 = vmatprep.subr.mxu0 0.0
          %2404 = vmatpush1.msra.mxu0 0.0
          %2405 = vmatprep.subr.mxu0 0.0
          %2406 = vmatpush1.msra.mxu0 0.0
          %2407 = vmatprep.subr.mxu0 0.0
          %2408 = vmatpush1.msra.mxu0 0.0
          %2409 = vmatprep.subr.mxu0 0.0
          %2410 = vmatpush1.msra.mxu0 0.0
          %2411 = vmatprep.subr.mxu0 0.0
          %2412 = vmatpush1.msra.mxu0 0.0
          %2413 = vmatprep.subr.mxu0 0.0
          %2414 = vmatpush1.msra.mxu0 0.0
          %2415 = vmatprep.subr.mxu0 0.0
          %2416 = vmatpush1.msra.mxu0 0.0
          %2417 = vmatprep.mubr.f32.mxu0 0.0
          %2418 = vmatmul.mubr.f32.gmra.mrb[0].mxu0 %v2348
          %v2419 = vpop.f32.mrb[0].mxu0
          %v2420 = vadd.f32 %v2345, %v2419
          %v2421 = vpop.f32.mrb[0].mxu0
          %2422 = vmatprep.mubr.f32.mxu0 0.0
          %2423 = vmatmul.mubr.f32.gmra.mrb[0].mxu0 %v2351
          %v2424 = vpop.f32.mrb[0].mxu0
          %v2425 = vadd.f32 %v2345, %v2424
          %v2426 = vpop.f32.mrb[0].mxu0
          %2427 = vdwg.mxu0
          %v2428 = vsel %vm1547, %v2420, 0.0
          %2429 = vadd.xlane.f32.xlu0 %v2428
          %v2430 = vpop.xlane.xlu0 %2429
          %v2431 = vsel %vm1547, %v2425, 0.0
          %2432 = vadd.xlane.f32.xlu0 %v2431
          %v2433 = vpop.xlane.xlu0 %2432
          %v2434 = vmul.f32 %v2430, %v1898
          %v2435 = vmul.f32 %v2433, %v1898
          %v2436 = vsub.f32 %v2420, %v2434
          %v2437 = vsub.f32 %v2425, %v2435
          %v2438 = vmul.f32 %v2436, %v2436
          %v2439 = vmul.f32 %v2437, %v2437
          %v2440 = vsel %vm1547, %v2438, 0.0
          %2441 = vadd.xlane.f32.xlu0 %v2440
          %v2442 = vpop.xlane.xlu0 %2441
          %v2443 = vsel %vm1547, %v2439, 0.0
          %2444 = vadd.xlane.f32.xlu0 %v2443
          %v2445 = vpop.xlane.xlu0 %2444
          %v2446 = vmul.f32 %v2442, %v1898
          %v2447 = vmul.f32 %v2445, %v1898
          %v2448 = vadd.f32 %v2446, 1e-05
          %v2449 = vadd.f32 %v2447, 1e-05
          %v2450 = vrsqrt.pop %v2448
          %v2451 = vrsqrt.pop %v2449
          %v2452 = vmul.f32 %v2436, %v2450
          %v2453 = vmul.f32 %v2437, %v2451
          %v2455 = vlaneseq
          %v2456 = vshrl.u32 %v2455, 7
          %v2457 = vsub.s32 0, %v2456
          %v2458 = vrot.slane %v2248, %v2457
          %v2460 = vmul.f32 %v2452, %v2458
          %v2461 = vmul.f32 %v2453, %v2458
          %v2463 = vlaneseq
          %v2464 = vshrl.u32 %v2463, 7
          %v2465 = vsub.s32 0, %v2464
          %v2466 = vrot.slane %v2249, %v2465
          %v2468 = vadd.f32 %v2460, %v2466
          %v2469 = vadd.f32 %v2461, %v2466
          %v2470 = vadd.f32 %v2468, %v1074
          %v2471 = vadd.f32 %v2469, %v1075
          %2472 = vst.msk [vmem:[%s1064] sm:$0xff] %vm1547, %v2470
          %2473 = vst.msk [vmem:[%s1064 + $0x8] sm:$0xff] %vm1547, %v2471
        $region188: #{tpu_custom_call.1} parent=111 // pred_fallthru
          _
        %s2474 = sand.u32 %s586, 1
        %s2475 = scalar_lea.sflag [#allocation7], %s2474
        %s2476 = sand.u32 %s586, 1
        %s2477 = smul.addr %s2476, 16
        %s2478 = scalar_lea.vmem [#allocation32], %s2477
        %s2479 = sand.u32 %s614, 1
        %s2480 = scalar_lea.sflag [#allocation34], %s2479
        %s2481 = sand.u32 %s614, 1
        %s2482 = smul.addr %s2481, 32
        %s2483 = scalar_lea.vmem [#allocation33], %s2482
        // Predicated region
        $region189: #{tpu_custom_call.1} parent=111 // pred_check
          %p2484 = pneg %p596
        $region190: #{tpu_custom_call.1} parent=111 // pred_check_branch
          %2486 = sbr.rel (%p2484) target = $region192
        $region191: #{tpu_custom_call.1} parent=111 // pred_region
          %s2488 = ssub.s32 256, 256
          %2489 = vsyncadd %s2475, %s2488
          %s2490 = smul.addr %s61, 2
          %s2491 = smul.addr %s2490, 128
          %s2492 = scalar_lea.hbm %s23, %s2491
          %s2493 = sshll.u32 %s2478, 4
          %s2494 = int_to_ptr.vmem [resolvable:$true] %s2493
          %2499 = dma.vmem_to_hbm [thread:$0]  %s2494, 256, %s2492, %s2475, 128, 128, 8
        $region192: #{tpu_custom_call.1} parent=111 // pred_fallthru
          _
        // Predicated region
        $region193: #{tpu_custom_call.1} parent=111 // pred_check
          %p2500 = pneg %p624
        $region194: #{tpu_custom_call.1} parent=111 // pred_check_branch
          %2502 = sbr.rel (%p2500) target = $region196
        $region195: #{tpu_custom_call.1} parent=111 // pred_region
          %s2503 = smul.u32 4, %s62
          %s2505 = ssub.s32 512, 512
          %2506 = vsyncadd %s2480, %s2505
          %s2507 = smul.addr %s61, 4
          %s2508 = sadd.s32 %s2503, %s2507
          %s2509 = smul.addr %s2508, 128
          %s2510 = scalar_lea.hbm %s24, %s2509
          %s2511 = sshll.u32 %s2483, 4
          %s2512 = int_to_ptr.vmem [resolvable:$true] %s2511
          %2517 = dma.vmem_to_hbm [thread:$0]  %s2512, 512, %s2510, %s2480, 128, 128, 8
        $region196: #{tpu_custom_call.1} parent=111 // pred_fallthru
          _
      $region112: #{tpu_custom_call.1} parent=5 // pred_fallthru
        _
      %p2518 = scmp.le.s32.totalorder 2, %s52
      // Predicated region
      $region197: #{tpu_custom_call.1} parent=5 // pred_check
        %p2519 = pneg %p2518
      $region198: #{tpu_custom_call.1} parent=5 // pred_check_branch
        %2521 = sbr.rel (%p2519) target = $region200
      $region199: #{tpu_custom_call.1} parent=5 // pred_region
        %s2522 = ssub.s32 %s52, 2
        // Predicated region
        $region201: #{tpu_custom_call.1} parent=199 // pred_check
          %p2523 = pneg %p602
        $region202: #{tpu_custom_call.1} parent=199 // pred_check_branch
          %2525 = sbr.rel (%p2523) target = $region204
        $region203: #{tpu_custom_call.1} parent=199 // pred_region
          %s2526 = sand.u32 %s587, 1
          %s2527 = scalar_lea.sflag [#allocation7], %s2526
          %s2528 = sand.u32 %s587, 1
          %s2529 = smul.addr %s2528, 16
          %s2530 = scalar_lea.vmem [#allocation32], %s2529
          %2531 = dma.done %s2527, 256
        $region204: #{tpu_custom_call.1} parent=199 // pred_fallthru
          _
        // Predicated region
        $region205: #{tpu_custom_call.1} parent=199 // pred_check
          %p2532 = pneg %p630
        $region206: #{tpu_custom_call.1} parent=199 // pred_check_branch
          %2534 = sbr.rel (%p2532) target = $region208
        $region207: #{tpu_custom_call.1} parent=199 // pred_region
          %s2535 = sand.u32 %s615, 1
          %s2536 = scalar_lea.sflag [#allocation34], %s2535
          %s2537 = sand.u32 %s615, 1
          %s2538 = smul.addr %s2537, 32
          %s2539 = scalar_lea.vmem [#allocation33], %s2538
          %2540 = dma.done %s2536, 512
        $region208: #{tpu_custom_call.1} parent=199 // pred_fallthru
          _
      $region200: #{tpu_custom_call.1} parent=5 // pred_fallthru
        _
    $region6: #{tpu_custom_call.1} parent=1 // loop_footer
      %s56 = sadd.s32 1, %s52
    $region7: #{tpu_custom_call.1} parent=1 // loop_footer_branch
      %51 = sbr.rel target = $region3
    $region8: #{tpu_custom_call.1} parent=1 // loop_exit
      _
    %2541 = vsyncpa [#allocation6], 1
    %s2542 = scalar_lea.sflag [#allocation6], 1
    %2543 = vsyncpa %s2542, 1
    %2544 = vsyncpa [#allocation9], 1
    %s2545 = scalar_lea.sflag [#allocation9], 1
    %2546 = vsyncpa %s2545, 1
    %2547 = vsyncpa [#allocation12], 1
    %s2548 = scalar_lea.sflag [#allocation12], 1
    %2549 = vsyncpa %s2548, 1
    %2550 = vsyncpa [#allocation15], 1
    %2551 = vsyncpa [#allocation18], 1
    %2552 = vsyncpa [#allocation21], 1
    %2553 = vsyncpa [#allocation24], 1
    %2554 = vsyncpa [#allocation27], 1
    %2555 = vsyncpa [#allocation30], 1
    %2556 = vsyncpa [#allocation7], 1
    %s2557 = scalar_lea.sflag [#allocation7], 1
    %2558 = vsyncpa %s2557, 1
    %2559 = vsyncpa [#allocation34], 1
    %s2560 = scalar_lea.sflag [#allocation34], 1
    %2561 = vsyncpa %s2560, 1

</llo_original>
